<compile_context>
chip_gen: v5e
topology: v5e:2x2
jax: 0.10.0
libtpu: 0.0.40
codegen_flags: <defaults>
</compile_context>

<pallas_src>
import jax
import jax.numpy as jnp
from jax import lax
from jax.experimental import pallas as pl
from jax.experimental.pallas import tpu as pltpu


LANE = 128


def _round_up(x, m):
    return (x + m - 1) // m * m


# ---------------------------------------------------------------------------
# Fused kernel: hw-tiled GAP accumulation + head (eval mode, BN folded)
# ---------------------------------------------------------------------------
def fused_kernel(img_ref, metaadd_ref,
                 wf_ref, bf_ref,
                 w1f_ref,
                 w2_ref, b2_ref,
                 w3_ref, b3_ref,
                 out_ref,
                 gap_acc):
    k = pl.program_id(1)

    @pl.when(k == 0)
    def _():
        gap_acc[...] = jnp.zeros_like(gap_acc)

    # Partial global-average-pool: f32 accumulation of the bf16 image chunk.
    # (1/hw is folded into wf in the wrapper, so a plain sum suffices; the
    #  zero-padding of the spatial axis is sum-neutral.)
    gap_acc[...] += jnp.sum(img_ref[...].astype(jnp.float32), axis=-1)

    @pl.when(k == pl.num_programs(1) - 1)
    def _():
        # ---- backbone stand-in: GAP -> projection -> ReLU.
        # TODO(synk): full MBConv/SE conv stack of EfficientNet-b2.
        pooled = gap_acc[...]                                     # (tn, C) f32
        feat = jnp.dot(pooled.astype(jnp.bfloat16), wf_ref[...],
                       preferred_element_type=jnp.float32) + bf_ref[...]
        feat = jnp.maximum(feat, 0.0)

        # ---- head layer 1: split matmul replaces concat(features, metadata).
        # metadata @ w1[eff_dim:] + b1 was precomputed in the wrapper (XLA) and
        # arrives as metaadd_ref.  BN1 (eval) folded into w1/b1; Dropout = id.
        h = jnp.dot(feat.astype(jnp.bfloat16), w1f_ref[...],
                    preferred_element_type=jnp.float32) + metaadd_ref[...]
        h = jnp.maximum(h, 0.0)

        # ---- head layer 2 (BN folded, Dropout identity).
        h = jnp.dot(h.astype(jnp.bfloat16), w2_ref[...],
                    preferred_element_type=jnp.float32) + b2_ref[...]
        h = jnp.maximum(h, 0.0)

        # ---- final projection to lane-padded classes (unmasked, lane-dense).
        out_ref[...] = (jnp.dot(h.astype(jnp.bfloat16), w3_ref[...],
                                preferred_element_type=jnp.float32)
                        + b3_ref[...])


# ---------------------------------------------------------------------------
# Wrapper: param prep (BN fold, w1 split, class pad) + batch/hw-tiled call
# ---------------------------------------------------------------------------
def _fold_bn(w, b, gamma, beta, mean, var, eps=1e-5):
    """Fold eval-mode BatchNorm1d into the preceding Linear (numerically exact)."""
    scale = gamma * lax.rsqrt(var + eps)                 # (1, D)
    return w * scale, (b - mean) * scale + beta


def _pad_last(x, to):
    pad = to - x.shape[-1]
    if pad <= 0:
        return x
    return jnp.pad(x, [(0, 0)] * (x.ndim - 1) + [(0, pad)])


def efficientnet_with_meta_forward(image, metadata, params, *,
                                   tile_n=128, tile_hw=None,
                                   vmem_limit_bytes=None):
    """image: (N, C, H, W) f32, metadata: (N, M) f32 -> logits (N, num_classes)."""
    N, C, H, W = image.shape
    eff_dim = params["wf"].shape[1]
    num_classes = params["w3"].shape[1]
    d1 = params["w1"].shape[1]
    d2 = params["w2"].shape[1]
    hw = H * W

    # --- batch tiling: large MXU M-dim, but never larger than the padded batch.
    tile_n = max(8, min(_round_up(tile_n, 8), _round_up(N, 8)))
    NP = _round_up(N, tile_n)

    # --- H*W tiling: decouple tile_n from image size.  Keep the bf16 image
    #     block (8-sublane padded in VMEM, double-buffered) within a per-buffer
    #     budget so the default configuration fits v7x's 64 MiB as well.
    c_pad = _round_up(C, 8)
    if tile_hw is None:
        budget = 8 * 1024 * 1024                          # bytes per image buffer
        tile_hw = max(LANE, (budget // (tile_n * c_pad * 2)) // LANE * LANE)
    tile_hw = min(tile_hw, _round_up(hw, LANE))
    tile_hw = max(LANE, _round_up(tile_hw, LANE))
    HWP = _round_up(hw, tile_hw)

    # --- parameter prep (layout plumbing outside the kernel) ---
    w1, b1 = _fold_bn(params["w1"], params["b1"], params["g1"], params["be1"],
                      params["m1"], params["v1"])
    w2, b2 = _fold_bn(params["w2"], params["b2"], params["g2"], params["be2"],
                      params["m2"], params["v2"])
    w1f, w1m = w1[:eff_dim], w1[eff_dim:]                # split matmul: no concat
    n_out = _round_up(num_classes, LANE)                 # lane-pad the classes
    w3 = _pad_last(params["w3"], n_out)
    b3 = _pad_last(params["b3"], n_out)

    # Fold 1/(H*W) of the mean into the backbone projection (kernel does a sum).
    wf_s = (params["wf"].astype(jnp.float32) / float(hw)).astype(jnp.bfloat16)
    bf = params["bf"].astype(jnp.float32)

    # Degenerate (K=3) metadata matmul is precomputed in XLA; kernel just adds.
    metadata = metadata.astype(jnp.float32)
    if NP != N:
        metadata = jnp.pad(metadata, ((0, NP - N), (0, 0)))
    meta_add = metadata @ w1m.astype(jnp.float32) + b1.astype(jnp.float32)  # (NP, d1)

    # bf16 image, lane-dense (N, C, H*W); zero-pad batch / spatial (sum-safe).
    img = image.astype(jnp.bfloat16).reshape(N, C, hw)
    if HWP != hw:
        img = jnp.pad(img, ((0, 0), (0, 0), (0, HWP - hw)))
    if NP != N:
        img = jnp.pad(img, ((0, NP - N), (0, 0), (0, 0)))

    weight_args = (wf_s, bf,
                   w1f.astype(jnp.bfloat16),
                   w2.astype(jnp.bfloat16), b2.astype(jnp.float32),
                   w3.astype(jnp.bfloat16), b3.astype(jnp.float32))
    # Grid-invariant weights: single-buffer to save VMEM (fetched once).
    weight_specs = [
        pl.BlockSpec(w.shape, lambda i, k: (0, 0), pipeline_mode=pl.Buffered(1))
        for w in weight_args
    ]

    grid = (NP // tile_n, HWP // tile_hw)

    # --- advisory cost estimate ---
    flops = (NP * C * HWP
             + 2 * NP * (C * eff_dim + eff_dim * d1 + d1 * d2 + d2 * n_out))
    bytes_accessed = (int(img.size) * 2 + int(meta_add.size) * 4 + NP * n_out * 4
                      + sum(int(w.size) * w.dtype.itemsize for w in weight_args))
    cost = pl.CostEstimate(flops=int(flops), transcendentals=0,
                           bytes_accessed=int(bytes_accessed))

    # --- VMEM budgeting: image double-buffered, weights single-buffered.
    if vmem_limit_bytes is None:
        est = (tile_n * c_pad * tile_hw * 2 * 2          # image block (bf16, x2)
               + tile_n * d1 * 4 * 2                     # metadata addend
               + tile_n * n_out * 4 * 2                  # output block
               + sum(int(w.size) * w.dtype.itemsize for w in weight_args)
               + tile_n * LANE * 4                       # GAP scratch (padded)
               + (4 << 20))                              # headroom
        # Defaults keep this well under v7x's 64 MiB physical VMEM; v5e/v6e
        # (128 MiB) can use up to ~96 MiB with larger tiles.
        vmem_limit_bytes = int(min(max(32 << 20, est), 96 << 20))

    out = pl.pallas_call(
        fused_kernel,
        out_shape=jax.ShapeDtypeStruct((NP, n_out), jnp.float32),
        grid_spec=pltpu.PrefetchScalarGridSpec(
            num_scalar_prefetch=0,
            grid=grid,
            in_specs=[pl.BlockSpec((tile_n, C, tile_hw), lambda i, k: (i, 0, k)),
                      pl.BlockSpec((tile_n, d1), lambda i, k: (i, 0))]
                     + weight_specs,
            out_specs=pl.BlockSpec((tile_n, n_out), lambda i, k: (i, 0)),
            scratch_shapes=[pltpu.VMEM((tile_n, C), jnp.float32)],
        ),
        compiler_params=pltpu.CompilerParams(
            # Batch axis is megacore-shardable; H*W reduction is innermost.
            # On v7x switch the first entry to pltpu.CORE_PARALLEL if the
            # profile shows one TensorCore idle.
            dimension_semantics=("parallel", "arbitrary"),
            vmem_limit_bytes=vmem_limit_bytes,
        ),
        cost_estimate=cost,
    )(img, meta_add, *weight_args)

    return out[:N, :num_classes]


# ---------------------------------------------------------------------------
# Pure-JAX reference (eval-mode semantics of the PyTorch head)
# ---------------------------------------------------------------------------
def reference_forward(image, metadata, params):
    N, C, H, W = image.shape
    pooled = image.reshape(N, C, H * W).mean(axis=-1)
    feat = jnp.maximum(pooled @ params["wf"] + params["bf"], 0.0)
    x = jnp.concatenate([feat, metadata], axis=1)
    w1, b1 = _fold_bn(params["w1"], params["b1"], params["g1"], params["be1"],
                      params["m1"], params["v1"])
    w2, b2 = _fold_bn(params["w2"], params["b2"], params["g2"], params["be2"],
                      params["m2"], params["v2"])
    h = jnp.maximum(x @ w1 + b1, 0.0)
    h = jnp.maximum(h @ w2 + b2, 0.0)
    return h @ params["w3"] + params["b3"]


# ---------------------------------------------------------------------------
# Parameter initialization (matches the PyTorch module's head structure)
# ---------------------------------------------------------------------------
def init_params(key, in_channels, eff_dim, num_meta, num_classes):
    ks = jax.random.split(key, 8)
    d_in = eff_dim + num_meta
    row = lambda n: jnp.zeros((1, n), jnp.float32)

    return {
        # backbone stand-in projection
        "wf": jax.random.normal(ks[0], (in_channels, eff_dim), jnp.float32) * 0.1,
        "bf": jax.random.normal(ks[1], (1, eff_dim), jnp.float32) * 0.01,
        # Linear(d_in, 512) + BatchNorm1d(512)
        "w1": jax.random.normal(ks[2], (d_in, 512), jnp.float32) * (1.0 / jnp.sqrt(d_in)),
        "b1": jax.random.normal(ks[3], (1, 512), jnp.float32) * 0.01,
        "g1": jnp.ones((1, 512), jnp.float32),
        "be1": row(512),
        "m1": row(512),                         # running_mean init 0
        "v1": jnp.ones((1, 512), jnp.float32),  # running_var init 1
        # Linear(512, 256) + BatchNorm1d(256)
        "w2": jax.random.normal(ks[4], (512, 256), jnp.float32) * (1.0 / jnp.sqrt(512.0)),
        "b2": jax.random.normal(ks[5], (1, 256), jnp.float32) * 0.01,
        "g2": jnp.ones((1, 256), jnp.float32),
        "be2": row(256),
        "m2": row(256),
        "v2": jnp.ones((1, 256), jnp.float32),
        # Linear(256, num_classes)
        "w3": jax.random.normal(ks[6], (256, num_classes), jnp.float32) * (1.0 / 16.0),
        "b3": jax.random.normal(ks[7], (1, num_classes), jnp.float32) * 0.01,
    }


if __name__ == "__main__":
    # Small, fast shapes that still exercise both grid axes:
    # 2 batch tiles (tile_n=128) x 2 H*W tiles (tile_hw=128).  ~1 MiB of input.
    N, C, H, W = 256, 4, 16, 16
    NUM_META = 3
    EFF_DIM = 128                       # lane-aligned stand-in for b2's 1408
    NUM_CLASSES = 7

    key = jax.random.PRNGKey(0)
    k_img, k_meta, k_par = jax.random.split(key, 3)

    image = jax.random.normal(k_img, (N, C, H, W), jnp.float32)
    metadata = jax.random.normal(k_meta, (N, NUM_META), jnp.float32)
    params = init_params(k_par, C, EFF_DIM, NUM_META, NUM_CLASSES)

    logits = efficientnet_with_meta_forward(image, metadata, params,
                                            tile_n=128, tile_hw=128)
    logits = jax.block_until_ready(logits)

    assert logits.shape == (N, NUM_CLASSES)
    assert bool(jnp.all(jnp.isfinite(logits)))

    # bf16 matmuls vs f32 reference: generous tolerance.
    ref = reference_forward(image, metadata, params)
    assert bool(jnp.allclose(logits, ref, rtol=5e-2, atol=5e-2))

    print("KERNEL_OK")
</pallas_src>

<mosaic_0001>
module attributes {stable_mosaic.version = 11 : i64} {
  func.func @fused_kernel(%arg0: i32, %arg1: i32, %arg2: memref<128x4x128xbf16, #tpu.memory_space<vmem>>, %arg3: memref<128x512xf32, #tpu.memory_space<vmem>>, %arg4: memref<4x128xbf16, #tpu.memory_space<vmem>>, %arg5: memref<1x128xf32, #tpu.memory_space<vmem>>, %arg6: memref<128x512xbf16, #tpu.memory_space<vmem>>, %arg7: memref<512x256xbf16, #tpu.memory_space<vmem>>, %arg8: memref<1x256xf32, #tpu.memory_space<vmem>>, %arg9: memref<256x128xbf16, #tpu.memory_space<vmem>>, %arg10: memref<1x128xf32, #tpu.memory_space<vmem>>, %arg11: memref<128x128xf32, #tpu.memory_space<vmem>>, %arg12: memref<128x4xf32, #tpu.memory_space<vmem>>) attributes {dimension_semantics = [#tpu.dimension_semantics<parallel>, #tpu.dimension_semantics<arbitrary>], iteration_bounds = array<i64: 2, 2>, scalar_prefetch = 0 : i64, scratch_operands = 1 : i64, tpu.core_type = #tpu.core_type<tc>, window_params = [{transform_indices = @transform_0, window_bounds = array<i64: 128, 4, 128>}, {transform_indices = @transform_1, window_bounds = array<i64: 128, 512>}, {pipeline_mode = #tpu.pipeline_mode<synchronous>, transform_indices = @transform_2, window_bounds = array<i64: 4, 128>}, {pipeline_mode = #tpu.pipeline_mode<synchronous>, transform_indices = @transform_3, window_bounds = array<i64: 1, 128>}, {pipeline_mode = #tpu.pipeline_mode<synchronous>, transform_indices = @transform_4, window_bounds = array<i64: 128, 512>}, {pipeline_mode = #tpu.pipeline_mode<synchronous>, transform_indices = @transform_5, window_bounds = array<i64: 512, 256>}, {pipeline_mode = #tpu.pipeline_mode<synchronous>, transform_indices = @transform_6, window_bounds = array<i64: 1, 256>}, {pipeline_mode = #tpu.pipeline_mode<synchronous>, transform_indices = @transform_7, window_bounds = array<i64: 256, 128>}, {pipeline_mode = #tpu.pipeline_mode<synchronous>, transform_indices = @transform_8, window_bounds = array<i64: 1, 128>}, {transform_indices = @transform_9, window_bounds = array<i64: 128, 128>}]} {
    %c0_i32 = arith.constant 0 : i32
    %0 = arith.cmpi eq, %arg1, %c0_i32 : i32
    %1 = arith.extui %0 : i1 to i32
    %c0_i32_0 = arith.constant 0 : i32
    %2 = arith.cmpi ne, %1, %c0_i32_0 : i32
    scf.if %2 {
      %cst_8 = arith.constant 0.000000e+00 : f32
      %12 = vector.broadcast %cst_8 : f32 to vector<128x4xf32>
      %c0_9 = arith.constant 0 : index
      %c0_10 = arith.constant 0 : index
      %13 = vector.load %arg12[%c0_9, %c0_10] : memref<128x4xf32, #tpu.memory_space<vmem>>, vector<128x4xf32>
      tpu.vector_store %arg12[%c0_9, %c0_10], %12 {strides = array<i32>} : memref<128x4xf32, #tpu.memory_space<vmem>>, vector<128x4xf32>,
    } else {
    }
    %c0 = arith.constant 0 : index
    %c0_1 = arith.constant 0 : index
    %3 = vector.load %arg12[%c0, %c0_1] : memref<128x4xf32, #tpu.memory_space<vmem>>, vector<128x4xf32>
    %c0_2 = arith.constant 0 : index
    %c0_3 = arith.constant 0 : index
    %c0_4 = arith.constant 0 : index
    %4 = vector.load %arg2[%c0_2, %c0_3, %c0_4] : memref<128x4x128xbf16, #tpu.memory_space<vmem>>, vector<128x4x128xbf16>
    %5 = arith.extf %4 : vector<128x4x128xbf16> to vector<128x4x128xf32>
    %cst = arith.constant dense<0.000000e+00> : vector<128x4xf32>
    %6 = vector.multi_reduction <add>, %5, %cst [2] : vector<128x4x128xf32> to vector<128x4xf32>
    %7 = arith.addf %3, %6 : vector<128x4xf32>
    %c0_5 = arith.constant 0 : index
    %c0_6 = arith.constant 0 : index
    %8 = vector.load %arg12[%c0_5, %c0_6] : memref<128x4xf32, #tpu.memory_space<vmem>>, vector<128x4xf32>
    tpu.vector_store %arg12[%c0_5, %c0_6], %7 {strides = array<i32>} : memref<128x4xf32, #tpu.memory_space<vmem>>, vector<128x4xf32>,
    %c1_i32 = arith.constant 1 : i32
    %9 = arith.cmpi eq, %arg1, %c1_i32 : i32
    %10 = arith.extui %9 : i1 to i32
    %c0_i32_7 = arith.constant 0 : i32
    %11 = arith.cmpi ne, %10, %c0_i32_7 : i32
    scf.if %11 {
      %c0_8 = arith.constant 0 : index
      %c0_9 = arith.constant 0 : index
      %12 = vector.load %arg12[%c0_8, %c0_9] : memref<128x4xf32, #tpu.memory_space<vmem>>, vector<128x4xf32>
      %13 = arith.truncf %12 : vector<128x4xf32> to vector<128x4xbf16>
      %c0_10 = arith.constant 0 : index
      %c0_11 = arith.constant 0 : index
      %14 = vector.load %arg4[%c0_10, %c0_11] : memref<4x128xbf16, #tpu.memory_space<vmem>>, vector<4x128xbf16>
      %cst_12 = arith.constant dense<0.000000e+00> : vector<128x128xf32>
      %15 = tpu.matmul %13, %14, %cst_12 {dimension_numbers = #tpu.dot_dimension_numbers<[1], [0], [0], [1], [0, 0, 1, 1], [], []>} : vector<128x4xbf16>, vector<4x128xbf16>, vector<128x128xf32> -> vector<128x128xf32>
      %c0_13 = arith.constant 0 : index
      %c0_14 = arith.constant 0 : index
      %16 = vector.load %arg5[%c0_13, %c0_14] : memref<1x128xf32, #tpu.memory_space<vmem>>, vector<1x128xf32>
      %17 = vector.broadcast %16 : vector<1x128xf32> to vector<128x128xf32>
      %18 = arith.addf %15, %17 : vector<128x128xf32>
      %cst_15 = arith.constant 0.000000e+00 : f32
      %19 = vector.broadcast %cst_15 : f32 to vector<128x128xf32>
      %20 = arith.maximumf %18, %19 : vector<128x128xf32>
      %21 = arith.truncf %20 : vector<128x128xf32> to vector<128x128xbf16>
      %c0_16 = arith.constant 0 : index
      %c0_17 = arith.constant 0 : index
      %22 = vector.load %arg6[%c0_16, %c0_17] : memref<128x512xbf16, #tpu.memory_space<vmem>>, vector<128x512xbf16>
      %cst_18 = arith.constant dense<0.000000e+00> : vector<128x512xf32>
      %23 = tpu.matmul %21, %22, %cst_18 {dimension_numbers = #tpu.dot_dimension_numbers<[1], [0], [0], [1], [0, 0, 1, 1], [], []>} : vector<128x128xbf16>, vector<128x512xbf16>, vector<128x512xf32> -> vector<128x512xf32>
      %c0_19 = arith.constant 0 : index
      %c0_20 = arith.constant 0 : index
      %24 = vector.load %arg3[%c0_19, %c0_20] : memref<128x512xf32, #tpu.memory_space<vmem>>, vector<128x512xf32>
      %25 = arith.addf %23, %24 : vector<128x512xf32>
      %cst_21 = arith.constant 0.000000e+00 : f32
      %26 = vector.broadcast %cst_21 : f32 to vector<128x512xf32>
      %27 = arith.maximumf %25, %26 : vector<128x512xf32>
      %28 = arith.truncf %27 : vector<128x512xf32> to vector<128x512xbf16>
      %c0_22 = arith.constant 0 : index
      %c0_23 = arith.constant 0 : index
      %29 = vector.load %arg7[%c0_22, %c0_23] : memref<512x256xbf16, #tpu.memory_space<vmem>>, vector<512x256xbf16>
      %cst_24 = arith.constant dense<0.000000e+00> : vector<128x256xf32>
      %30 = tpu.matmul %28, %29, %cst_24 {dimension_numbers = #tpu.dot_dimension_numbers<[1], [0], [0], [1], [0, 0, 1, 1], [], []>} : vector<128x512xbf16>, vector<512x256xbf16>, vector<128x256xf32> -> vector<128x256xf32>
      %c0_25 = arith.constant 0 : index
      %c0_26 = arith.constant 0 : index
      %31 = vector.load %arg8[%c0_25, %c0_26] : memref<1x256xf32, #tpu.memory_space<vmem>>, vector<1x256xf32>
      %32 = vector.broadcast %31 : vector<1x256xf32> to vector<128x256xf32>
      %33 = arith.addf %30, %32 : vector<128x256xf32>
      %cst_27 = arith.constant 0.000000e+00 : f32
      %34 = vector.broadcast %cst_27 : f32 to vector<128x256xf32>
      %35 = arith.maximumf %33, %34 : vector<128x256xf32>
      %36 = arith.truncf %35 : vector<128x256xf32> to vector<128x256xbf16>
      %c0_28 = arith.constant 0 : index
      %c0_29 = arith.constant 0 : index
      %37 = vector.load %arg9[%c0_28, %c0_29] : memref<256x128xbf16, #tpu.memory_space<vmem>>, vector<256x128xbf16>
      %cst_30 = arith.constant dense<0.000000e+00> : vector<128x128xf32>
      %38 = tpu.matmul %36, %37, %cst_30 {dimension_numbers = #tpu.dot_dimension_numbers<[1], [0], [0], [1], [0, 0, 1, 1], [], []>} : vector<128x256xbf16>, vector<256x128xbf16>, vector<128x128xf32> -> vector<128x128xf32>
      %c0_31 = arith.constant 0 : index
      %c0_32 = arith.constant 0 : index
      %39 = vector.load %arg10[%c0_31, %c0_32] : memref<1x128xf32, #tpu.memory_space<vmem>>, vector<1x128xf32>
      %40 = vector.broadcast %39 : vector<1x128xf32> to vector<128x128xf32>
      %41 = arith.addf %38, %40 : vector<128x128xf32>
      %c0_33 = arith.constant 0 : index
      %c0_34 = arith.constant 0 : index
      %42 = vector.load %arg11[%c0_33, %c0_34] : memref<128x128xf32, #tpu.memory_space<vmem>>, vector<128x128xf32>
      tpu.vector_store %arg11[%c0_33, %c0_34], %41 {strides = array<i32>} : memref<128x128xf32, #tpu.memory_space<vmem>>, vector<128x128xf32>,
    } else {
    }
    return
  }
  func.func @transform_0(%arg0: i32, %arg1: i32) -> (i32, i32, i32) {
    %c0_i32 = arith.constant 0 : i32
    %c0_i32_0 = arith.constant 0 : i32
    return %arg0, %c0_i32, %arg1 : i32, i32, i32
  }
  func.func @transform_1(%arg0: i32, %arg1: i32) -> (i32, i32) {
    %c0_i32 = arith.constant 0 : i32
    %c0_i32_0 = arith.constant 0 : i32
    return %arg0, %c0_i32 : i32, i32
  }
  func.func @transform_2(%arg0: i32, %arg1: i32) -> (i32, i32) {
    %c0_i32 = arith.constant 0 : i32
    %c0_i32_0 = arith.constant 0 : i32
    %c0_i32_1 = arith.constant 0 : i32
    return %c0_i32, %c0_i32_0 : i32, i32
  }
  func.func @transform_3(%arg0: i32, %arg1: i32) -> (i32, i32) {
    %c0_i32 = arith.constant 0 : i32
    %c0_i32_0 = arith.constant 0 : i32
    %c0_i32_1 = arith.constant 0 : i32
    return %c0_i32, %c0_i32_0 : i32, i32
  }
  func.func @transform_4(%arg0: i32, %arg1: i32) -> (i32, i32) {
    %c0_i32 = arith.constant 0 : i32
    %c0_i32_0 = arith.constant 0 : i32
    %c0_i32_1 = arith.constant 0 : i32
    return %c0_i32, %c0_i32_0 : i32, i32
  }
  func.func @transform_5(%arg0: i32, %arg1: i32) -> (i32, i32) {
    %c0_i32 = arith.constant 0 : i32
    %c0_i32_0 = arith.constant 0 : i32
    %c0_i32_1 = arith.constant 0 : i32
    return %c0_i32, %c0_i32_0 : i32, i32
  }
  func.func @transform_6(%arg0: i32, %arg1: i32) -> (i32, i32) {
    %c0_i32 = arith.constant 0 : i32
    %c0_i32_0 = arith.constant 0 : i32
    %c0_i32_1 = arith.constant 0 : i32
    return %c0_i32, %c0_i32_0 : i32, i32
  }
  func.func @transform_7(%arg0: i32, %arg1: i32) -> (i32, i32) {
    %c0_i32 = arith.constant 0 : i32
    %c0_i32_0 = arith.constant 0 : i32
    %c0_i32_1 = arith.constant 0 : i32
    return %c0_i32, %c0_i32_0 : i32, i32
  }
  func.func @transform_8(%arg0: i32, %arg1: i32) -> (i32, i32) {
    %c0_i32 = arith.constant 0 : i32
    %c0_i32_0 = arith.constant 0 : i32
    %c0_i32_1 = arith.constant 0 : i32
    return %c0_i32, %c0_i32_0 : i32, i32
  }
  func.func @transform_9(%arg0: i32, %arg1: i32) -> (i32, i32) {
    %c0_i32 = arith.constant 0 : i32
    %c0_i32_0 = arith.constant 0 : i32
    return %arg0, %c0_i32 : i32, i32
  }
}

</mosaic_0001>

<llo_original>
// kernel: tpu_custom_call.1
$region0: #{tpu_custom_call.1}
  #allocation0 [shape = 'u32[]', space=smem, size = 0x4, offset = 0x4, fixed_abs, tag = 'smem constant byte address 0x4 - core index']
  #allocation1 [shape = 'u32[72,128]{1,0:T(1,128)}', space=vmem, size = 0x9000, scoped, tag = 'internal scratch']
  #allocation2 [shape = 'f32[128,4]{1,0:T(8,128)}', space=vmem, size = 0x10000, scoped, tag = 'scratch operand']
  %s0 = inlined_call_operand.hbm [shape: bf16[256,4,256], index: 0, kind: input, shape index: {}]
  %s1 = inlined_call_operand.hbm [shape: f32[256,512], index: 1, kind: input, shape index: {}]
  %s2 = inlined_call_operand.hbm [shape: bf16[4,128], index: 2, kind: input, shape index: {}]
  %s3 = inlined_call_operand.vmem [shape: f32[1,128], index: 3, kind: input, shape index: {}]
  %s4 = inlined_call_operand.hbm [shape: bf16[128,512], index: 4, kind: input, shape index: {}]
  %s5 = inlined_call_operand.hbm [shape: bf16[512,256], index: 5, kind: input, shape index: {}]
  %s6 = inlined_call_operand.vmem [shape: f32[1,256], index: 6, kind: input, shape index: {}]
  %s7 = inlined_call_operand.hbm [shape: bf16[256,128], index: 7, kind: input, shape index: {}]
  %s8 = inlined_call_operand.vmem [shape: f32[1,128], index: 8, kind: input, shape index: {}]
  %s9 = inlined_call_operand.hbm [shape: f32[256,128], index: 9, kind: output, shape index: {}]
  %s10 = sld [smem:[#allocation0]]
  $region101: #{tpu_custom_call.1} parent=0
    _
  %s12 = ssub.s32 1, %s10
  %s13 = scalar_select 0, %s12, %s10
  $region1: #{tpu_custom_call.1} parent=0
    #allocation3 [shape = 'u8[262144]{0}', space=vmem, size = 0x40000, scoped, tag = 'input window, operand 0']
    #allocation4 [shape = 's32[2]{0}', space=sflag, size = 0x8, scoped, tag = 'scoped memory for tpu_custom_call.1']
    #allocation5 [shape = 's32[2]{0}', space=sflag, size = 0x8, scoped, tag = 'scoped memory for tpu_custom_call.1']
    #allocation6 [shape = 'u8[524288]{0}', space=vmem, size = 0x80000, scoped, tag = 'input window, operand 1']
    #allocation7 [shape = 's32[2]{0}', space=sflag, size = 0x8, scoped, tag = 'scoped memory for tpu_custom_call.1']
    #allocation8 [shape = 'u8[1024]{0}', space=vmem, size = 0x400, scoped, tag = 'input window, operand 2, single buffered']
    #allocation9 [shape = 'u8[131072]{0}', space=vmem, size = 0x20000, scoped, tag = 'input window, operand 4, single buffered']
    #allocation10 [shape = 's32[1]{0}', space=sflag, size = 0x4, scoped, tag = 'scoped memory for tpu_custom_call.1']
    #allocation11 [shape = 'u8[262144]{0}', space=vmem, size = 0x40000, scoped, tag = 'input window, operand 5, single buffered']
    #allocation12 [shape = 'u8[65536]{0}', space=vmem, size = 0x10000, scoped, tag = 'input window, operand 7, single buffered']
    #allocation13 [shape = 's32[1]{0}', space=sflag, size = 0x4, scoped, tag = 'scoped memory for tpu_custom_call.1']
    #allocation14 [shape = 'u8[131072]{0}', space=vmem, size = 0x20000, scoped, tag = 'output window, operand 0']
    %14 = vsyncpa [#allocation4], 0
    %s15 = scalar_lea.sflag [#allocation4], 1
    %16 = vsyncpa %s15, 0
    %17 = vsyncpa [#allocation7], 0
    %s18 = scalar_lea.sflag [#allocation7], 1
    %19 = vsyncpa %s18, 0
    %20 = vsyncpa [#allocation10], 0
    %21 = vsyncpa [#allocation13], 0
    %22 = vsyncpa [#allocation5], 0
    %s23 = scalar_lea.sflag [#allocation5], 1
    %24 = vsyncpa %s23, 0
    loop: start=0, step=1, limit=6
    $region2: #{tpu_custom_call.1} parent=1 // loop_pre_header
      _
    $region3: #{tpu_custom_call.1} parent=1 // loop_header
      %s26 = sphi 0, %s30
      %p27 = scmp.ge.s32.totalorder %s26, 6
      %s33 = sphi 0, %s45
      %s34 = sphi 0, %s41
      %s35 = sphi 0, %s33
      %s36 = sphi 0, %s34
      %s37 = sphi 0, %s35
      %s38 = sphi 0, %s36
      %s50 = sphi 0, %s52
      %s53 = sphi 0, %s50
      %s54 = sphi 0, %s53
      %s70 = sphi 0, %s54
      %s76 = sphi 0, %s78
      %s79 = sphi 0, %s76
      %s80 = sphi 0, %s79
      %s96 = sphi 0, %s80
      %s100 = sphi 0, %s100
      %s102 = sphi 0, %s100
      %s103 = sphi 0, %s102
      %s117 = sphi 0, %s103
      %s121 = sphi 0, %s121
      %s123 = sphi 0, %s121
      %s124 = sphi 0, %s123
      %s138 = sphi 0, %s124
      %s142 = sphi 0, %s142
      %s144 = sphi 0, %s142
      %s145 = sphi 0, %s144
      %s159 = sphi 0, %s145
      %s163 = sphi 0, %s163
      %s165 = sphi 0, %s163
      %s166 = sphi 0, %s165
      %s180 = sphi 0, %s166
      %s184 = sphi 0, %s184
      %s186 = sphi 0, %s184
      %s187 = sphi 0, %s186
      %s201 = sphi 0, %s187
      %s205 = sphi 0, %s205
      %s207 = sphi 0, %s205
      %s208 = sphi 0, %s207
      %s222 = sphi 0, %s208
      %s226 = sphi 0, %s226
      %s228 = sphi 0, %s226
      %s229 = sphi 0, %s228
      %s243 = sphi 0, %s229
      %s249 = sphi 0, %s251
      %s252 = sphi 0, %s249
      %s253 = sphi 0, %s252
      %s269 = sphi 0, %s253
    $region4: #{tpu_custom_call.1} parent=1 // loop_header_branch
      %29 = sbr.rel (%p27) target = $region8
    $region5: #{tpu_custom_call.1} parent=1 // loop_body
      %s31 = ssub.s32 %s26, 1
      %s32 = ssub.s32 %s26, 2
      %s39 = sadd.s32 1, %s34
      %p40 = scmp.ge.s32.totalorder %s39, 2
      %s41 = scalar_select %p40, 0, %s39
      %s42 = sadd.s32 1, %s33
      %s43 = scalar_select %p40, %s42, %s33
      %p44 = scmp.ge.s32.totalorder %s43, 2
      %s45 = scalar_select %p44, 0, %s43
      %s46 = ssub.s32 %s33, %s45
      %s47 = ssub.s32 %s34, %s41
      %s48 = sor.u32 %s46, %s47
      %p49 = scmp.eq.s32.totalorder %s48, 0
      %s51 = sadd.s32 %s50, 1
      %s52 = scalar_select %p49, %s50, %s51
      %p55 = pneg %p49
      %p56 = scmp.eq.s32.totalorder %s26, 3
      %p57 = por %p55, %p56
      %p58 = scmp.ne.s32.totalorder %s50, %s53
      %p59 = scmp.eq.s32.totalorder %s26, 0
      %p60 = por %p58, %p59
      %p61 = scmp.ne.s32.totalorder %s50, %s53
      %p62 = scmp.eq.s32.totalorder %s31, 3
      %p63 = por %p61, %p62
      %p64 = scmp.ne.s32.totalorder %s53, %s54
      %p65 = scmp.eq.s32.totalorder %s31, 0
      %p66 = por %p64, %p65
      %p67 = scmp.ne.s32.totalorder %s53, %s54
      %p68 = scmp.eq.s32.totalorder %s32, 3
      %p69 = por %p67, %p68
      %p71 = scmp.ne.s32.totalorder %s54, %s70
      %p72 = scmp.eq.s32.totalorder %s32, 0
      %p73 = por %p71, %p72
      %s74 = ssub.s32 %s33, %s45
      %p75 = scmp.eq.s32.totalorder %s74, 0
      %s77 = sadd.s32 %s76, 1
      %s78 = scalar_select %p75, %s76, %s77
      %p81 = pneg %p75
      %p82 = scmp.eq.s32.totalorder %s26, 3
      %p83 = por %p81, %p82
      %p84 = scmp.ne.s32.totalorder %s76, %s79
      %p85 = scmp.eq.s32.totalorder %s26, 0
      %p86 = por %p84, %p85
      %p87 = scmp.ne.s32.totalorder %s76, %s79
      %p88 = scmp.eq.s32.totalorder %s31, 3
      %p89 = por %p87, %p88
      %p90 = scmp.ne.s32.totalorder %s79, %s80
      %p91 = scmp.eq.s32.totalorder %s31, 0
      %p92 = por %p90, %p91
      %p93 = scmp.ne.s32.totalorder %s79, %s80
      %p94 = scmp.eq.s32.totalorder %s32, 3
      %p95 = por %p93, %p94
      %p97 = scmp.ne.s32.totalorder %s80, %s96
      %p98 = scmp.eq.s32.totalorder %s32, 0
      %p99 = por %p97, %p98
      %s101 = sadd.s32 %s100, 1
      %p104 = scmp.eq.s32.totalorder %s26, 3
      %p105 = scmp.ne.s32.totalorder %s100, %s102
      %p106 = scmp.eq.s32.totalorder %s26, 0
      %p107 = por %p105, %p106
      %p108 = scmp.ne.s32.totalorder %s100, %s102
      %p109 = scmp.eq.s32.totalorder %s31, 3
      %p110 = por %p108, %p109
      %p111 = scmp.ne.s32.totalorder %s102, %s103
      %p112 = scmp.eq.s32.totalorder %s31, 0
      %p113 = por %p111, %p112
      %p114 = scmp.ne.s32.totalorder %s102, %s103
      %p115 = scmp.eq.s32.totalorder %s32, 3
      %p116 = por %p114, %p115
      %p118 = scmp.ne.s32.totalorder %s103, %s117
      %p119 = scmp.eq.s32.totalorder %s32, 0
      %p120 = por %p118, %p119
      %s122 = sadd.s32 %s121, 1
      %p125 = scmp.eq.s32.totalorder %s26, 3
      %p126 = scmp.ne.s32.totalorder %s121, %s123
      %p127 = scmp.eq.s32.totalorder %s26, 0
      %p128 = por %p126, %p127
      %p129 = scmp.ne.s32.totalorder %s121, %s123
      %p130 = scmp.eq.s32.totalorder %s31, 3
      %p131 = por %p129, %p130
      %p132 = scmp.ne.s32.totalorder %s123, %s124
      %p133 = scmp.eq.s32.totalorder %s31, 0
      %p134 = por %p132, %p133
      %p135 = scmp.ne.s32.totalorder %s123, %s124
      %p136 = scmp.eq.s32.totalorder %s32, 3
      %p137 = por %p135, %p136
      %p139 = scmp.ne.s32.totalorder %s124, %s138
      %p140 = scmp.eq.s32.totalorder %s32, 0
      %p141 = por %p139, %p140
      %s143 = sadd.s32 %s142, 1
      %p146 = scmp.eq.s32.totalorder %s26, 3
      %p147 = scmp.ne.s32.totalorder %s142, %s144
      %p148 = scmp.eq.s32.totalorder %s26, 0
      %p149 = por %p147, %p148
      %p150 = scmp.ne.s32.totalorder %s142, %s144
      %p151 = scmp.eq.s32.totalorder %s31, 3
      %p152 = por %p150, %p151
      %p153 = scmp.ne.s32.totalorder %s144, %s145
      %p154 = scmp.eq.s32.totalorder %s31, 0
      %p155 = por %p153, %p154
      %p156 = scmp.ne.s32.totalorder %s144, %s145
      %p157 = scmp.eq.s32.totalorder %s32, 3
      %p158 = por %p156, %p157
      %p160 = scmp.ne.s32.totalorder %s145, %s159
      %p161 = scmp.eq.s32.totalorder %s32, 0
      %p162 = por %p160, %p161
      %s164 = sadd.s32 %s163, 1
      %p167 = scmp.eq.s32.totalorder %s26, 3
      %p168 = scmp.ne.s32.totalorder %s163, %s165
      %p169 = scmp.eq.s32.totalorder %s26, 0
      %p170 = por %p168, %p169
      %p171 = scmp.ne.s32.totalorder %s163, %s165
      %p172 = scmp.eq.s32.totalorder %s31, 3
      %p173 = por %p171, %p172
      %p174 = scmp.ne.s32.totalorder %s165, %s166
      %p175 = scmp.eq.s32.totalorder %s31, 0
      %p176 = por %p174, %p175
      %p177 = scmp.ne.s32.totalorder %s165, %s166
      %p178 = scmp.eq.s32.totalorder %s32, 3
      %p179 = por %p177, %p178
      %p181 = scmp.ne.s32.totalorder %s166, %s180
      %p182 = scmp.eq.s32.totalorder %s32, 0
      %p183 = por %p181, %p182
      %s185 = sadd.s32 %s184, 1
      %p188 = scmp.eq.s32.totalorder %s26, 3
      %p189 = scmp.ne.s32.totalorder %s184, %s186
      %p190 = scmp.eq.s32.totalorder %s26, 0
      %p191 = por %p189, %p190
      %p192 = scmp.ne.s32.totalorder %s184, %s186
      %p193 = scmp.eq.s32.totalorder %s31, 3
      %p194 = por %p192, %p193
      %p195 = scmp.ne.s32.totalorder %s186, %s187
      %p196 = scmp.eq.s32.totalorder %s31, 0
      %p197 = por %p195, %p196
      %p198 = scmp.ne.s32.totalorder %s186, %s187
      %p199 = scmp.eq.s32.totalorder %s32, 3
      %p200 = por %p198, %p199
      %p202 = scmp.ne.s32.totalorder %s187, %s201
      %p203 = scmp.eq.s32.totalorder %s32, 0
      %p204 = por %p202, %p203
      %s206 = sadd.s32 %s205, 1
      %p209 = scmp.eq.s32.totalorder %s26, 3
      %p210 = scmp.ne.s32.totalorder %s205, %s207
      %p211 = scmp.eq.s32.totalorder %s26, 0
      %p212 = por %p210, %p211
      %p213 = scmp.ne.s32.totalorder %s205, %s207
      %p214 = scmp.eq.s32.totalorder %s31, 3
      %p215 = por %p213, %p214
      %p216 = scmp.ne.s32.totalorder %s207, %s208
      %p217 = scmp.eq.s32.totalorder %s31, 0
      %p218 = por %p216, %p217
      %p219 = scmp.ne.s32.totalorder %s207, %s208
      %p220 = scmp.eq.s32.totalorder %s32, 3
      %p221 = por %p219, %p220
      %p223 = scmp.ne.s32.totalorder %s208, %s222
      %p224 = scmp.eq.s32.totalorder %s32, 0
      %p225 = por %p223, %p224
      %s227 = sadd.s32 %s226, 1
      %p230 = scmp.eq.s32.totalorder %s26, 3
      %p231 = scmp.ne.s32.totalorder %s226, %s228
      %p232 = scmp.eq.s32.totalorder %s26, 0
      %p233 = por %p231, %p232
      %p234 = scmp.ne.s32.totalorder %s226, %s228
      %p235 = scmp.eq.s32.totalorder %s31, 3
      %p236 = por %p234, %p235
      %p237 = scmp.ne.s32.totalorder %s228, %s229
      %p238 = scmp.eq.s32.totalorder %s31, 0
      %p239 = por %p237, %p238
      %p240 = scmp.ne.s32.totalorder %s228, %s229
      %p241 = scmp.eq.s32.totalorder %s32, 3
      %p242 = por %p240, %p241
      %p244 = scmp.ne.s32.totalorder %s229, %s243
      %p245 = scmp.eq.s32.totalorder %s32, 0
      %p246 = por %p244, %p245
      %s247 = ssub.s32 %s33, %s45
      %p248 = scmp.eq.s32.totalorder %s247, 0
      %s250 = sadd.s32 %s249, 1
      %s251 = scalar_select %p248, %s249, %s250
      %p254 = pneg %p248
      %p255 = scmp.eq.s32.totalorder %s26, 3
      %p256 = por %p254, %p255
      %p257 = scmp.ne.s32.totalorder %s249, %s252
      %p258 = scmp.eq.s32.totalorder %s26, 0
      %p259 = por %p257, %p258
      %p260 = scmp.ne.s32.totalorder %s249, %s252
      %p261 = scmp.eq.s32.totalorder %s31, 3
      %p262 = por %p260, %p261
      %p263 = scmp.ne.s32.totalorder %s252, %s253
      %p264 = scmp.eq.s32.totalorder %s31, 0
      %p265 = por %p263, %p264
      %p266 = scmp.ne.s32.totalorder %s252, %s253
      %p267 = scmp.eq.s32.totalorder %s32, 3
      %p268 = por %p266, %p267
      %p270 = scmp.ne.s32.totalorder %s253, %s269
      %p271 = scmp.eq.s32.totalorder %s32, 0
      %p272 = por %p270, %p271
      %p273 = scmp.le.s32.totalorder 1, %s26
      %p274 = scmp.lt.s32.totalorder %s26, 5
      %p275 = pnand %p273, %p274
      %p276 = pneg %p275
      // Predicated region
      $region9: #{tpu_custom_call.1} parent=5 // pred_check
        _
      $region10: #{tpu_custom_call.1} parent=5 // pred_check_branch
        %278 = sbr.rel (%p275) target = $region12
      $region11: #{tpu_custom_call.1} parent=5 // pred_region
        %s279 = ssub.s32 %s26, 1
        // Predicated region
        $region13: #{tpu_custom_call.1} parent=11 // pred_check
          %p280 = pneg %p113
        $region14: #{tpu_custom_call.1} parent=11 // pred_check_branch
          %282 = sbr.rel (%p280) target = $region16
        $region15: #{tpu_custom_call.1} parent=11 // pred_region
          %284 = vsyncadd [#allocation7], 0
          %s286 = sshll.u32 %s2, 4
          %s287 = int_to_ptr.hbm [resolvable:$true] %s286
          %s288 = sshll.u32 [#allocation8], 4
          %s289 = int_to_ptr.vmem [resolvable:$true] %s288
          %291 = dma.hbm_to_vmem [thread:$0]  %s287, 32, %s289, [#allocation7]
        $region16: #{tpu_custom_call.1} parent=11 // pred_fallthru
          _
        // Predicated region
        $region17: #{tpu_custom_call.1} parent=11 // pred_check
          %p292 = pneg %p134
        $region18: #{tpu_custom_call.1} parent=11 // pred_check_branch
          %294 = sbr.rel (%p292) target = $region20
        $region19: #{tpu_custom_call.1} parent=11 // pred_region
          _
        $region20: #{tpu_custom_call.1} parent=11 // pred_fallthru
          _
        // Predicated region
        $region21: #{tpu_custom_call.1} parent=11 // pred_check
          %p295 = pneg %p155
        $region22: #{tpu_custom_call.1} parent=11 // pred_check_branch
          %297 = sbr.rel (%p295) target = $region24
        $region23: #{tpu_custom_call.1} parent=11 // pred_region
          %299 = vsyncadd [#allocation10], 0
          %s300 = sshll.u32 %s4, 4
          %s301 = int_to_ptr.hbm [resolvable:$true] %s300
          %s302 = sshll.u32 [#allocation9], 4
          %s303 = int_to_ptr.vmem [resolvable:$true] %s302
          %308 = dma.hbm_to_vmem [thread:$0]  %s301, 4096, %s303, [#allocation10], 256, 256, 16
        $region24: #{tpu_custom_call.1} parent=11 // pred_fallthru
          _
        // Predicated region
        $region25: #{tpu_custom_call.1} parent=11 // pred_check
          %p309 = pneg %p176
        $region26: #{tpu_custom_call.1} parent=11 // pred_check_branch
          %311 = sbr.rel (%p309) target = $region28
        $region27: #{tpu_custom_call.1} parent=11 // pred_region
          %313 = vsyncadd [#allocation10], 0
          %s314 = sshll.u32 %s5, 4
          %s315 = int_to_ptr.hbm [resolvable:$true] %s314
          %s316 = sshll.u32 [#allocation11], 4
          %s317 = int_to_ptr.vmem [resolvable:$true] %s316
          %322 = dma.hbm_to_vmem [thread:$0]  %s315, 8192, %s317, [#allocation10], 128, 128, 8
        $region28: #{tpu_custom_call.1} parent=11 // pred_fallthru
          _
        // Predicated region
        $region29: #{tpu_custom_call.1} parent=11 // pred_check
          %p323 = pneg %p197
        $region30: #{tpu_custom_call.1} parent=11 // pred_check_branch
          %325 = sbr.rel (%p323) target = $region32
        $region31: #{tpu_custom_call.1} parent=11 // pred_region
          _
        $region32: #{tpu_custom_call.1} parent=11 // pred_fallthru
          _
        // Predicated region
        $region33: #{tpu_custom_call.1} parent=11 // pred_check
          %p326 = pneg %p218
        $region34: #{tpu_custom_call.1} parent=11 // pred_check_branch
          %328 = sbr.rel (%p326) target = $region36
        $region35: #{tpu_custom_call.1} parent=11 // pred_region
          %330 = vsyncadd [#allocation13], 0
          %s331 = sshll.u32 %s7, 4
          %s332 = int_to_ptr.hbm [resolvable:$true] %s331
          %s333 = sshll.u32 [#allocation12], 4
          %s334 = int_to_ptr.vmem [resolvable:$true] %s333
          %339 = dma.hbm_to_vmem [thread:$0]  %s332, 2048, %s334, [#allocation13], 64, 64, 4
        $region36: #{tpu_custom_call.1} parent=11 // pred_fallthru
          _
        // Predicated region
        $region37: #{tpu_custom_call.1} parent=11 // pred_check
          %p340 = pneg %p239
        $region38: #{tpu_custom_call.1} parent=11 // pred_check_branch
          %342 = sbr.rel (%p340) target = $region40
        $region39: #{tpu_custom_call.1} parent=11 // pred_region
          _
        $region40: #{tpu_custom_call.1} parent=11 // pred_fallthru
          _
      $region12: #{tpu_custom_call.1} parent=5 // pred_fallthru
        _
      %p343 = scmp.lt.s32.totalorder %s26, 4
      // Predicated region
      $region41: #{tpu_custom_call.1} parent=5 // pred_check
        %p344 = pneg %p343
      $region42: #{tpu_custom_call.1} parent=5 // pred_check_branch
        %346 = sbr.rel (%p344) target = $region44
      $region43: #{tpu_custom_call.1} parent=5 // pred_region
        // Predicated region
        $region45: #{tpu_custom_call.1} parent=43 // pred_check
          %p347 = pneg %p60
        $region46: #{tpu_custom_call.1} parent=43 // pred_check_branch
          %349 = sbr.rel (%p347) target = $region48
        $region47: #{tpu_custom_call.1} parent=43 // pred_region
          %s350 = sand.u32 %s50, 1
          %s351 = scalar_lea.sflag [#allocation4], %s350
          %s352 = sand.u32 %s50, 1
          %s353 = smul.addr %s352, 256
          %s354 = scalar_lea.vmem [#allocation3], %s353
          %s355 = smul.u32 128, %s33
          %357 = vsyncadd %s351, 0
          %s358 = smul.addr %s355, 2
          %s359 = sadd.s32 %s34, %s358
          %s360 = smul.addr %s359, 2
          %s361 = scalar_lea.hbm %s0, %s360
          %s362 = sshll.u32 %s361, 4
          %s363 = int_to_ptr.hbm [resolvable:$true] %s362
          %s364 = sshll.u32 %s354, 4
          %s365 = int_to_ptr.vmem [resolvable:$true] %s364
          %370 = dma.hbm_to_vmem [thread:$0]  %s363, 4096, %s365, %s351, 64, 32, 2
        $region48: #{tpu_custom_call.1} parent=43 // pred_fallthru
          _
        // Predicated region
        $region49: #{tpu_custom_call.1} parent=43 // pred_check
          %p371 = pneg %p86
        $region50: #{tpu_custom_call.1} parent=43 // pred_check_branch
          %373 = sbr.rel (%p371) target = $region52
        $region51: #{tpu_custom_call.1} parent=43 // pred_region
          %s374 = sand.u32 %s26, 1
          %s375 = scalar_lea.sflag [#allocation7], %s374
          %s376 = sand.u32 %s76, 1
          %s377 = smul.addr %s376, 512
          %s378 = scalar_lea.vmem [#allocation6], %s377
          %s379 = smul.u32 16, %s33
          %381 = vsyncadd %s375, 0
          %s382 = smul.addr %s379, 4
          %s383 = smul.addr %s382, 8
          %s384 = scalar_lea.hbm %s1, %s383
          %s385 = sshll.u32 %s384, 4
          %s386 = int_to_ptr.hbm [resolvable:$true] %s385
          %s387 = sshll.u32 %s378, 4
          %s388 = int_to_ptr.vmem [resolvable:$true] %s387
          %393 = dma.hbm_to_vmem [thread:$0]  %s386, 8192, %s388, %s375, 512, 512, 32
        $region52: #{tpu_custom_call.1} parent=43 // pred_fallthru
          _
      $region44: #{tpu_custom_call.1} parent=5 // pred_fallthru
        _
      %p394 = scmp.le.s32.totalorder 1, %s26
      %p395 = scmp.lt.s32.totalorder %s26, 5
      %p396 = pnand %p394, %p395
      %p397 = pneg %p396
      // Predicated region
      $region53: #{tpu_custom_call.1} parent=5 // pred_check
        _
      $region54: #{tpu_custom_call.1} parent=5 // pred_check_branch
        %399 = sbr.rel (%p396) target = $region56
      $region55: #{tpu_custom_call.1} parent=5 // pred_region
        %s400 = ssub.s32 %s26, 1
        %s401 = sand.u32 %s53, 1
        %s402 = scalar_lea.sflag [#allocation4], %s401
        %s403 = sand.u32 %s53, 1
        %s404 = smul.addr %s403, 256
        %s405 = scalar_lea.vmem [#allocation3], %s404
        // Predicated region
        $region57: #{tpu_custom_call.1} parent=55 // pred_check
          %p406 = pneg %p66
        $region58: #{tpu_custom_call.1} parent=55 // pred_check_branch
          %408 = sbr.rel (%p406) target = $region60
        $region59: #{tpu_custom_call.1} parent=55 // pred_region
          %410 = dma.done %s402, 4096
        $region60: #{tpu_custom_call.1} parent=55 // pred_fallthru
          _
        %s411 = sand.u32 %s31, 1
        %s412 = scalar_lea.sflag [#allocation7], %s411
        %s413 = sand.u32 %s79, 1
        %s414 = smul.addr %s413, 512
        %s415 = scalar_lea.vmem [#allocation6], %s414
        // Predicated region
        $region61: #{tpu_custom_call.1} parent=55 // pred_check
          %p416 = pneg %p92
        $region62: #{tpu_custom_call.1} parent=55 // pred_check_branch
          %418 = sbr.rel (%p416) target = $region64
        $region63: #{tpu_custom_call.1} parent=55 // pred_region
          %420 = dma.done %s412, 8192
        $region64: #{tpu_custom_call.1} parent=55 // pred_fallthru
          _
        // Predicated region
        $region65: #{tpu_custom_call.1} parent=55 // pred_check
          %p421 = pneg %p113
        $region66: #{tpu_custom_call.1} parent=55 // pred_check_branch
          %423 = sbr.rel (%p421) target = $region68
        $region67: #{tpu_custom_call.1} parent=55 // pred_region
          %425 = dma.done [#allocation7], 32
        $region68: #{tpu_custom_call.1} parent=55 // pred_fallthru
          _
        // Predicated region
        $region69: #{tpu_custom_call.1} parent=55 // pred_check
          %p426 = pneg %p155
        $region70: #{tpu_custom_call.1} parent=55 // pred_check_branch
          %428 = sbr.rel (%p426) target = $region72
        $region71: #{tpu_custom_call.1} parent=55 // pred_region
          %430 = dma.done [#allocation10], 4096
        $region72: #{tpu_custom_call.1} parent=55 // pred_fallthru
          _
        // Predicated region
        $region73: #{tpu_custom_call.1} parent=55 // pred_check
          %p431 = pneg %p176
        $region74: #{tpu_custom_call.1} parent=55 // pred_check_branch
          %433 = sbr.rel (%p431) target = $region76
        $region75: #{tpu_custom_call.1} parent=55 // pred_region
          %435 = dma.done [#allocation10], 8192
        $region76: #{tpu_custom_call.1} parent=55 // pred_fallthru
          _
        // Predicated region
        $region77: #{tpu_custom_call.1} parent=55 // pred_check
          %p436 = pneg %p218
        $region78: #{tpu_custom_call.1} parent=55 // pred_check_branch
          %438 = sbr.rel (%p436) target = $region80
        $region79: #{tpu_custom_call.1} parent=55 // pred_region
          %440 = dma.done [#allocation13], 2048
        $region80: #{tpu_custom_call.1} parent=55 // pred_fallthru
          _
        %s441 = sand.u32 %s53, 1
        %s442 = scalar_lea.sflag [#allocation4], %s441
        %s443 = sand.u32 %s53, 1
        %s444 = smul.addr %s443, 256
        %s445 = scalar_lea.vmem [#allocation3], %s444
        %p446 = pneg %p66
        %p447 = pneg %p63
        %s448 = sand.u32 %s31, 1
        %s449 = scalar_lea.sflag [#allocation7], %s448
        %s450 = sand.u32 %s79, 1
        %s451 = smul.addr %s450, 512
        %s452 = scalar_lea.vmem [#allocation6], %s451
        %p453 = pneg %p92
        %p454 = pneg %p89
        %p455 = pneg %p113
        %p456 = pneg %p110
        %p457 = pneg %p134
        %p458 = pneg %p131
        %p459 = pneg %p155
        %p460 = pneg %p152
        %p461 = pneg %p176
        %p462 = pneg %p173
        %p463 = pneg %p197
        %p464 = pneg %p194
        %p465 = pneg %p218
        %p466 = pneg %p215
        %p467 = pneg %p239
        %p468 = pneg %p236
        %p469 = pneg %p265
        %p470 = pneg %p262
        %s471 = sand.u32 %s252, 1
        %s472 = scalar_lea.sflag [#allocation5], %s471
        %s473 = sand.u32 %s252, 1
        %s474 = smul.addr %s473, 128
        %s475 = scalar_lea.vmem [#allocation14], %s474
        %s476 = smul.u32 128, %s35
        %s477 = smul.u32 16, %s35
        %s478 = smul.u32 16, %s35
        %p480 = scmp.eq.s32.totalorder %s36, 0
        // Predicated region
        $region81: #{tpu_custom_call.1} parent=55 // pred_check
          %p481 = pneg %p480
        $region82: #{tpu_custom_call.1} parent=55 // pred_check_branch
          %483 = sbr.rel (%p481) target = $region84
        $region83: #{tpu_custom_call.1} parent=55 // pred_region
          %vm484 = vcmask 31744
          %485 = vst.msk [vmem:[#allocation2] sm:$0xff] %vm484, 0.0
          %486 = vst.msk [vmem:[#allocation2 + $0x8] sm:$0xff] %vm484, 0.0
          %487 = vst.msk [vmem:[#allocation2 + $0x10] sm:$0xff] %vm484, 0.0
          %488 = vst.msk [vmem:[#allocation2 + $0x18] sm:$0xff] %vm484, 0.0
          %489 = vst.msk [vmem:[#allocation2 + $0x20] sm:$0xff] %vm484, 0.0
          %490 = vst.msk [vmem:[#allocation2 + $0x28] sm:$0xff] %vm484, 0.0
          %491 = vst.msk [vmem:[#allocation2 + $0x30] sm:$0xff] %vm484, 0.0
          %492 = vst.msk [vmem:[#allocation2 + $0x38] sm:$0xff] %vm484, 0.0
          %493 = vst.msk [vmem:[#allocation2 + $0x40] sm:$0xff] %vm484, 0.0
          %494 = vst.msk [vmem:[#allocation2 + $0x48] sm:$0xff] %vm484, 0.0
          %495 = vst.msk [vmem:[#allocation2 + $0x50] sm:$0xff] %vm484, 0.0
          %496 = vst.msk [vmem:[#allocation2 + $0x58] sm:$0xff] %vm484, 0.0
          %497 = vst.msk [vmem:[#allocation2 + $0x60] sm:$0xff] %vm484, 0.0
          %498 = vst.msk [vmem:[#allocation2 + $0x68] sm:$0xff] %vm484, 0.0
          %499 = vst.msk [vmem:[#allocation2 + $0x70] sm:$0xff] %vm484, 0.0
          %500 = vst.msk [vmem:[#allocation2 + $0x78] sm:$0xff] %vm484, 0.0
        $region84: #{tpu_custom_call.1} parent=55 // pred_fallthru
          _
        %v501 = vld [vmem:[#allocation2] sm:$0xff]
        %v502 = vld [vmem:[#allocation2 + $0x8] sm:$0xff]
        %v503 = vld [vmem:[#allocation2 + $0x10] sm:$0xff]
        %v504 = vld [vmem:[#allocation2 + $0x18] sm:$0xff]
        %v505 = vld [vmem:[#allocation2 + $0x20] sm:$0xff]
        %v506 = vld [vmem:[#allocation2 + $0x28] sm:$0xff]
        %v507 = vld [vmem:[#allocation2 + $0x30] sm:$0xff]
        %v508 = vld [vmem:[#allocation2 + $0x38] sm:$0xff]
        %v509 = vld [vmem:[#allocation2 + $0x40] sm:$0xff]
        %v510 = vld [vmem:[#allocation2 + $0x48] sm:$0xff]
        %v511 = vld [vmem:[#allocation2 + $0x50] sm:$0xff]
        %v512 = vld [vmem:[#allocation2 + $0x58] sm:$0xff]
        %v513 = vld [vmem:[#allocation2 + $0x60] sm:$0xff]
        %v514 = vld [vmem:[#allocation2 + $0x68] sm:$0xff]
        %v515 = vld [vmem:[#allocation2 + $0x70] sm:$0xff]
        %v516 = vld [vmem:[#allocation2 + $0x78] sm:$0xff]
        %v517 = vld [vmem:[%s405] sm:$0x3]
        %v518 = vld [vmem:[%s405 + $0x2] sm:$0x3]
        %v519 = vld [vmem:[%s405 + $0x4] sm:$0x3]
        %v520 = vld [vmem:[%s405 + $0x6] sm:$0x3]
        %v521 = vld [vmem:[%s405 + $0x8] sm:$0x3]
        %v522 = vld [vmem:[%s405 + $0xa] sm:$0x3]
        %v523 = vld [vmem:[%s405 + $0xc] sm:$0x3]
        %v524 = vld [vmem:[%s405 + $0xe] sm:$0x3]
        %v525 = vld [vmem:[%s405 + $0x10] sm:$0x3]
        %v526 = vld [vmem:[%s405 + $0x12] sm:$0x3]
        %v527 = vld [vmem:[%s405 + $0x14] sm:$0x3]
        %v528 = vld [vmem:[%s405 + $0x16] sm:$0x3]
        %v529 = vld [vmem:[%s405 + $0x18] sm:$0x3]
        %v530 = vld [vmem:[%s405 + $0x1a] sm:$0x3]
        %v531 = vld [vmem:[%s405 + $0x1c] sm:$0x3]
        %v532 = vld [vmem:[%s405 + $0x1e] sm:$0x3]
        %v533 = vld [vmem:[%s405 + $0x20] sm:$0x3]
        %v534 = vld [vmem:[%s405 + $0x22] sm:$0x3]
        %v535 = vld [vmem:[%s405 + $0x24] sm:$0x3]
        %v536 = vld [vmem:[%s405 + $0x26] sm:$0x3]
        %v537 = vld [vmem:[%s405 + $0x28] sm:$0x3]
        %v538 = vld [vmem:[%s405 + $0x2a] sm:$0x3]
        %v539 = vld [vmem:[%s405 + $0x2c] sm:$0x3]
        %v540 = vld [vmem:[%s405 + $0x2e] sm:$0x3]
        %v541 = vld [vmem:[%s405 + $0x30] sm:$0x3]
        %v542 = vld [vmem:[%s405 + $0x32] sm:$0x3]
        %v543 = vld [vmem:[%s405 + $0x34] sm:$0x3]
        %v544 = vld [vmem:[%s405 + $0x36] sm:$0x3]
        %v545 = vld [vmem:[%s405 + $0x38] sm:$0x3]
        %v546 = vld [vmem:[%s405 + $0x3a] sm:$0x3]
        %v547 = vld [vmem:[%s405 + $0x3c] sm:$0x3]
        %v548 = vld [vmem:[%s405 + $0x3e] sm:$0x3]
        %v549 = vld [vmem:[%s405 + $0x40] sm:$0x3]
        %v550 = vld [vmem:[%s405 + $0x42] sm:$0x3]
        %v551 = vld [vmem:[%s405 + $0x44] sm:$0x3]
        %v552 = vld [vmem:[%s405 + $0x46] sm:$0x3]
        %v553 = vld [vmem:[%s405 + $0x48] sm:$0x3]
        %v554 = vld [vmem:[%s405 + $0x4a] sm:$0x3]
        %v555 = vld [vmem:[%s405 + $0x4c] sm:$0x3]
        %v556 = vld [vmem:[%s405 + $0x4e] sm:$0x3]
        %v557 = vld [vmem:[%s405 + $0x50] sm:$0x3]
        %v558 = vld [vmem:[%s405 + $0x52] sm:$0x3]
        %v559 = vld [vmem:[%s405 + $0x54] sm:$0x3]
        %v560 = vld [vmem:[%s405 + $0x56] sm:$0x3]
        %v561 = vld [vmem:[%s405 + $0x58] sm:$0x3]
        %v562 = vld [vmem:[%s405 + $0x5a] sm:$0x3]
        %v563 = vld [vmem:[%s405 + $0x5c] sm:$0x3]
        %v564 = vld [vmem:[%s405 + $0x5e] sm:$0x3]
        %v565 = vld [vmem:[%s405 + $0x60] sm:$0x3]
        %v566 = vld [vmem:[%s405 + $0x62] sm:$0x3]
        %v567 = vld [vmem:[%s405 + $0x64] sm:$0x3]
        %v568 = vld [vmem:[%s405 + $0x66] sm:$0x3]
        %v569 = vld [vmem:[%s405 + $0x68] sm:$0x3]
        %v570 = vld [vmem:[%s405 + $0x6a] sm:$0x3]
        %v571 = vld [vmem:[%s405 + $0x6c] sm:$0x3]
        %v572 = vld [vmem:[%s405 + $0x6e] sm:$0x3]
        %v573 = vld [vmem:[%s405 + $0x70] sm:$0x3]
        %v574 = vld [vmem:[%s405 + $0x72] sm:$0x3]
        %v575 = vld [vmem:[%s405 + $0x74] sm:$0x3]
        %v576 = vld [vmem:[%s405 + $0x76] sm:$0x3]
        %v577 = vld [vmem:[%s405 + $0x78] sm:$0x3]
        %v578 = vld [vmem:[%s405 + $0x7a] sm:$0x3]
        %v579 = vld [vmem:[%s405 + $0x7c] sm:$0x3]
        %v580 = vld [vmem:[%s405 + $0x7e] sm:$0x3]
        %v581 = vld [vmem:[%s405 + $0x80] sm:$0x3]
        %v582 = vld [vmem:[%s405 + $0x82] sm:$0x3]
        %v583 = vld [vmem:[%s405 + $0x84] sm:$0x3]
        %v584 = vld [vmem:[%s405 + $0x86] sm:$0x3]
        %v585 = vld [vmem:[%s405 + $0x88] sm:$0x3]
        %v586 = vld [vmem:[%s405 + $0x8a] sm:$0x3]
        %v587 = vld [vmem:[%s405 + $0x8c] sm:$0x3]
        %v588 = vld [vmem:[%s405 + $0x8e] sm:$0x3]
        %v589 = vld [vmem:[%s405 + $0x90] sm:$0x3]
        %v590 = vld [vmem:[%s405 + $0x92] sm:$0x3]
        %v591 = vld [vmem:[%s405 + $0x94] sm:$0x3]
        %v592 = vld [vmem:[%s405 + $0x96] sm:$0x3]
        %v593 = vld [vmem:[%s405 + $0x98] sm:$0x3]
        %v594 = vld [vmem:[%s405 + $0x9a] sm:$0x3]
        %v595 = vld [vmem:[%s405 + $0x9c] sm:$0x3]
        %v596 = vld [vmem:[%s405 + $0x9e] sm:$0x3]
        %v597 = vld [vmem:[%s405 + $0xa0] sm:$0x3]
        %v598 = vld [vmem:[%s405 + $0xa2] sm:$0x3]
        %v599 = vld [vmem:[%s405 + $0xa4] sm:$0x3]
        %v600 = vld [vmem:[%s405 + $0xa6] sm:$0x3]
        %v601 = vld [vmem:[%s405 + $0xa8] sm:$0x3]
        %v602 = vld [vmem:[%s405 + $0xaa] sm:$0x3]
        %v603 = vld [vmem:[%s405 + $0xac] sm:$0x3]
        %v604 = vld [vmem:[%s405 + $0xae] sm:$0x3]
        %v605 = vld [vmem:[%s405 + $0xb0] sm:$0x3]
        %v606 = vld [vmem:[%s405 + $0xb2] sm:$0x3]
        %v607 = vld [vmem:[%s405 + $0xb4] sm:$0x3]
        %v608 = vld [vmem:[%s405 + $0xb6] sm:$0x3]
        %v609 = vld [vmem:[%s405 + $0xb8] sm:$0x3]
        %v610 = vld [vmem:[%s405 + $0xba] sm:$0x3]
        %v611 = vld [vmem:[%s405 + $0xbc] sm:$0x3]
        %v612 = vld [vmem:[%s405 + $0xbe] sm:$0x3]
        %v613 = vld [vmem:[%s405 + $0xc0] sm:$0x3]
        %v614 = vld [vmem:[%s405 + $0xc2] sm:$0x3]
        %v615 = vld [vmem:[%s405 + $0xc4] sm:$0x3]
        %v616 = vld [vmem:[%s405 + $0xc6] sm:$0x3]
        %v617 = vld [vmem:[%s405 + $0xc8] sm:$0x3]
        %v618 = vld [vmem:[%s405 + $0xca] sm:$0x3]
        %v619 = vld [vmem:[%s405 + $0xcc] sm:$0x3]
        %v620 = vld [vmem:[%s405 + $0xce] sm:$0x3]
        %v621 = vld [vmem:[%s405 + $0xd0] sm:$0x3]
        %v622 = vld [vmem:[%s405 + $0xd2] sm:$0x3]
        %v623 = vld [vmem:[%s405 + $0xd4] sm:$0x3]
        %v624 = vld [vmem:[%s405 + $0xd6] sm:$0x3]
        %v625 = vld [vmem:[%s405 + $0xd8] sm:$0x3]
        %v626 = vld [vmem:[%s405 + $0xda] sm:$0x3]
        %v627 = vld [vmem:[%s405 + $0xdc] sm:$0x3]
        %v628 = vld [vmem:[%s405 + $0xde] sm:$0x3]
        %v629 = vld [vmem:[%s405 + $0xe0] sm:$0x3]
        %v630 = vld [vmem:[%s405 + $0xe2] sm:$0x3]
        %v631 = vld [vmem:[%s405 + $0xe4] sm:$0x3]
        %v632 = vld [vmem:[%s405 + $0xe6] sm:$0x3]
        %v633 = vld [vmem:[%s405 + $0xe8] sm:$0x3]
        %v634 = vld [vmem:[%s405 + $0xea] sm:$0x3]
        %v635 = vld [vmem:[%s405 + $0xec] sm:$0x3]
        %v636 = vld [vmem:[%s405 + $0xee] sm:$0x3]
        %v637 = vld [vmem:[%s405 + $0xf0] sm:$0x3]
        %v638 = vld [vmem:[%s405 + $0xf2] sm:$0x3]
        %v639 = vld [vmem:[%s405 + $0xf4] sm:$0x3]
        %v640 = vld [vmem:[%s405 + $0xf6] sm:$0x3]
        %v641 = vld [vmem:[%s405 + $0xf8] sm:$0x3]
        %v642 = vld [vmem:[%s405 + $0xfa] sm:$0x3]
        %v643 = vld [vmem:[%s405 + $0xfc] sm:$0x3]
        %v644 = vld [vmem:[%s405 + $0xfe] sm:$0x3]
        %v645 = vunpack.c.l.bf16 %v517
        %v646 = vunpack.c.l.bf16 %v518
        %v647 = vunpack.c.l.bf16 %v519
        %v648 = vunpack.c.l.bf16 %v520
        %v649 = vunpack.c.l.bf16 %v521
        %v650 = vunpack.c.l.bf16 %v522
        %v651 = vunpack.c.l.bf16 %v523
        %v652 = vunpack.c.l.bf16 %v524
        %v653 = vunpack.c.l.bf16 %v525
        %v654 = vunpack.c.l.bf16 %v526
        %v655 = vunpack.c.l.bf16 %v527
        %v656 = vunpack.c.l.bf16 %v528
        %v657 = vunpack.c.l.bf16 %v529
        %v658 = vunpack.c.l.bf16 %v530
        %v659 = vunpack.c.l.bf16 %v531
        %v660 = vunpack.c.l.bf16 %v532
        %v661 = vunpack.c.l.bf16 %v533
        %v662 = vunpack.c.l.bf16 %v534
        %v663 = vunpack.c.l.bf16 %v535
        %v664 = vunpack.c.l.bf16 %v536
        %v665 = vunpack.c.l.bf16 %v537
        %v666 = vunpack.c.l.bf16 %v538
        %v667 = vunpack.c.l.bf16 %v539
        %v668 = vunpack.c.l.bf16 %v540
        %v669 = vunpack.c.l.bf16 %v541
        %v670 = vunpack.c.l.bf16 %v542
        %v671 = vunpack.c.l.bf16 %v543
        %v672 = vunpack.c.l.bf16 %v544
        %v673 = vunpack.c.l.bf16 %v545
        %v674 = vunpack.c.l.bf16 %v546
        %v675 = vunpack.c.l.bf16 %v547
        %v676 = vunpack.c.l.bf16 %v548
        %v677 = vunpack.c.l.bf16 %v549
        %v678 = vunpack.c.l.bf16 %v550
        %v679 = vunpack.c.l.bf16 %v551
        %v680 = vunpack.c.l.bf16 %v552
        %v681 = vunpack.c.l.bf16 %v553
        %v682 = vunpack.c.l.bf16 %v554
        %v683 = vunpack.c.l.bf16 %v555
        %v684 = vunpack.c.l.bf16 %v556
        %v685 = vunpack.c.l.bf16 %v557
        %v686 = vunpack.c.l.bf16 %v558
        %v687 = vunpack.c.l.bf16 %v559
        %v688 = vunpack.c.l.bf16 %v560
        %v689 = vunpack.c.l.bf16 %v561
        %v690 = vunpack.c.l.bf16 %v562
        %v691 = vunpack.c.l.bf16 %v563
        %v692 = vunpack.c.l.bf16 %v564
        %v693 = vunpack.c.l.bf16 %v565
        %v694 = vunpack.c.l.bf16 %v566
        %v695 = vunpack.c.l.bf16 %v567
        %v696 = vunpack.c.l.bf16 %v568
        %v697 = vunpack.c.l.bf16 %v569
        %v698 = vunpack.c.l.bf16 %v570
        %v699 = vunpack.c.l.bf16 %v571
        %v700 = vunpack.c.l.bf16 %v572
        %v701 = vunpack.c.l.bf16 %v573
        %v702 = vunpack.c.l.bf16 %v574
        %v703 = vunpack.c.l.bf16 %v575
        %v704 = vunpack.c.l.bf16 %v576
        %v705 = vunpack.c.l.bf16 %v577
        %v706 = vunpack.c.l.bf16 %v578
        %v707 = vunpack.c.l.bf16 %v579
        %v708 = vunpack.c.l.bf16 %v580
        %v709 = vunpack.c.l.bf16 %v581
        %v710 = vunpack.c.l.bf16 %v582
        %v711 = vunpack.c.l.bf16 %v583
        %v712 = vunpack.c.l.bf16 %v584
        %v713 = vunpack.c.l.bf16 %v585
        %v714 = vunpack.c.l.bf16 %v586
        %v715 = vunpack.c.l.bf16 %v587
        %v716 = vunpack.c.l.bf16 %v588
        %v717 = vunpack.c.l.bf16 %v589
        %v718 = vunpack.c.l.bf16 %v590
        %v719 = vunpack.c.l.bf16 %v591
        %v720 = vunpack.c.l.bf16 %v592
        %v721 = vunpack.c.l.bf16 %v593
        %v722 = vunpack.c.l.bf16 %v594
        %v723 = vunpack.c.l.bf16 %v595
        %v724 = vunpack.c.l.bf16 %v596
        %v725 = vunpack.c.l.bf16 %v597
        %v726 = vunpack.c.l.bf16 %v598
        %v727 = vunpack.c.l.bf16 %v599
        %v728 = vunpack.c.l.bf16 %v600
        %v729 = vunpack.c.l.bf16 %v601
        %v730 = vunpack.c.l.bf16 %v602
        %v731 = vunpack.c.l.bf16 %v603
        %v732 = vunpack.c.l.bf16 %v604
        %v733 = vunpack.c.l.bf16 %v605
        %v734 = vunpack.c.l.bf16 %v606
        %v735 = vunpack.c.l.bf16 %v607
        %v736 = vunpack.c.l.bf16 %v608
        %v737 = vunpack.c.l.bf16 %v609
        %v738 = vunpack.c.l.bf16 %v610
        %v739 = vunpack.c.l.bf16 %v611
        %v740 = vunpack.c.l.bf16 %v612
        %v741 = vunpack.c.l.bf16 %v613
        %v742 = vunpack.c.l.bf16 %v614
        %v743 = vunpack.c.l.bf16 %v615
        %v744 = vunpack.c.l.bf16 %v616
        %v745 = vunpack.c.l.bf16 %v617
        %v746 = vunpack.c.l.bf16 %v618
        %v747 = vunpack.c.l.bf16 %v619
        %v748 = vunpack.c.l.bf16 %v620
        %v749 = vunpack.c.l.bf16 %v621
        %v750 = vunpack.c.l.bf16 %v622
        %v751 = vunpack.c.l.bf16 %v623
        %v752 = vunpack.c.l.bf16 %v624
        %v753 = vunpack.c.l.bf16 %v625
        %v754 = vunpack.c.l.bf16 %v626
        %v755 = vunpack.c.l.bf16 %v627
        %v756 = vunpack.c.l.bf16 %v628
        %v757 = vunpack.c.l.bf16 %v629
        %v758 = vunpack.c.l.bf16 %v630
        %v759 = vunpack.c.l.bf16 %v631
        %v760 = vunpack.c.l.bf16 %v632
        %v761 = vunpack.c.l.bf16 %v633
        %v762 = vunpack.c.l.bf16 %v634
        %v763 = vunpack.c.l.bf16 %v635
        %v764 = vunpack.c.l.bf16 %v636
        %v765 = vunpack.c.l.bf16 %v637
        %v766 = vunpack.c.l.bf16 %v638
        %v767 = vunpack.c.l.bf16 %v639
        %v768 = vunpack.c.l.bf16 %v640
        %v769 = vunpack.c.l.bf16 %v641
        %v770 = vunpack.c.l.bf16 %v642
        %v771 = vunpack.c.l.bf16 %v643
        %v772 = vunpack.c.l.bf16 %v644
        %vm773 = vcmask 1043456
        %v774 = vsel %vm773, %v645, 0.0
        %775 = vadd.xlane.f32.xlu0 %v774
        %v776 = vpop.xlane.xlu0 %775
        %v777 = vsel %vm773, %v646, 0.0
        %778 = vadd.xlane.f32.xlu0 %v777
        %v779 = vpop.xlane.xlu0 %778
        %v780 = vsel %vm773, %v647, 0.0
        %781 = vadd.xlane.f32.xlu0 %v780
        %v782 = vpop.xlane.xlu0 %781
        %v783 = vsel %vm773, %v648, 0.0
        %784 = vadd.xlane.f32.xlu0 %v783
        %v785 = vpop.xlane.xlu0 %784
        %v786 = vsel %vm773, %v649, 0.0
        %787 = vadd.xlane.f32.xlu0 %v786
        %v788 = vpop.xlane.xlu0 %787
        %v789 = vsel %vm773, %v650, 0.0
        %790 = vadd.xlane.f32.xlu0 %v789
        %v791 = vpop.xlane.xlu0 %790
        %v792 = vsel %vm773, %v651, 0.0
        %793 = vadd.xlane.f32.xlu0 %v792
        %v794 = vpop.xlane.xlu0 %793
        %v795 = vsel %vm773, %v652, 0.0
        %796 = vadd.xlane.f32.xlu0 %v795
        %v797 = vpop.xlane.xlu0 %796
        %v798 = vsel %vm773, %v653, 0.0
        %799 = vadd.xlane.f32.xlu0 %v798
        %v800 = vpop.xlane.xlu0 %799
        %v801 = vsel %vm773, %v654, 0.0
        %802 = vadd.xlane.f32.xlu0 %v801
        %v803 = vpop.xlane.xlu0 %802
        %v804 = vsel %vm773, %v655, 0.0
        %805 = vadd.xlane.f32.xlu0 %v804
        %v806 = vpop.xlane.xlu0 %805
        %v807 = vsel %vm773, %v656, 0.0
        %808 = vadd.xlane.f32.xlu0 %v807
        %v809 = vpop.xlane.xlu0 %808
        %v810 = vsel %vm773, %v657, 0.0
        %811 = vadd.xlane.f32.xlu0 %v810
        %v812 = vpop.xlane.xlu0 %811
        %v813 = vsel %vm773, %v658, 0.0
        %814 = vadd.xlane.f32.xlu0 %v813
        %v815 = vpop.xlane.xlu0 %814
        %v816 = vsel %vm773, %v659, 0.0
        %817 = vadd.xlane.f32.xlu0 %v816
        %v818 = vpop.xlane.xlu0 %817
        %v819 = vsel %vm773, %v660, 0.0
        %820 = vadd.xlane.f32.xlu0 %v819
        %v821 = vpop.xlane.xlu0 %820
        %v822 = vsel %vm773, %v661, 0.0
        %823 = vadd.xlane.f32.xlu0 %v822
        %v824 = vpop.xlane.xlu0 %823
        %v825 = vsel %vm773, %v662, 0.0
        %826 = vadd.xlane.f32.xlu0 %v825
        %v827 = vpop.xlane.xlu0 %826
        %v828 = vsel %vm773, %v663, 0.0
        %829 = vadd.xlane.f32.xlu0 %v828
        %v830 = vpop.xlane.xlu0 %829
        %v831 = vsel %vm773, %v664, 0.0
        %832 = vadd.xlane.f32.xlu0 %v831
        %v833 = vpop.xlane.xlu0 %832
        %v834 = vsel %vm773, %v665, 0.0
        %835 = vadd.xlane.f32.xlu0 %v834
        %v836 = vpop.xlane.xlu0 %835
        %v837 = vsel %vm773, %v666, 0.0
        %838 = vadd.xlane.f32.xlu0 %v837
        %v839 = vpop.xlane.xlu0 %838
        %v840 = vsel %vm773, %v667, 0.0
        %841 = vadd.xlane.f32.xlu0 %v840
        %v842 = vpop.xlane.xlu0 %841
        %v843 = vsel %vm773, %v668, 0.0
        %844 = vadd.xlane.f32.xlu0 %v843
        %v845 = vpop.xlane.xlu0 %844
        %v846 = vsel %vm773, %v669, 0.0
        %847 = vadd.xlane.f32.xlu0 %v846
        %v848 = vpop.xlane.xlu0 %847
        %v849 = vsel %vm773, %v670, 0.0
        %850 = vadd.xlane.f32.xlu0 %v849
        %v851 = vpop.xlane.xlu0 %850
        %v852 = vsel %vm773, %v671, 0.0
        %853 = vadd.xlane.f32.xlu0 %v852
        %v854 = vpop.xlane.xlu0 %853
        %v855 = vsel %vm773, %v672, 0.0
        %856 = vadd.xlane.f32.xlu0 %v855
        %v857 = vpop.xlane.xlu0 %856
        %v858 = vsel %vm773, %v673, 0.0
        %859 = vadd.xlane.f32.xlu0 %v858
        %v860 = vpop.xlane.xlu0 %859
        %v861 = vsel %vm773, %v674, 0.0
        %862 = vadd.xlane.f32.xlu0 %v861
        %v863 = vpop.xlane.xlu0 %862
        %v864 = vsel %vm773, %v675, 0.0
        %865 = vadd.xlane.f32.xlu0 %v864
        %v866 = vpop.xlane.xlu0 %865
        %v867 = vsel %vm773, %v676, 0.0
        %868 = vadd.xlane.f32.xlu0 %v867
        %v869 = vpop.xlane.xlu0 %868
        %v870 = vsel %vm773, %v677, 0.0
        %871 = vadd.xlane.f32.xlu0 %v870
        %v872 = vpop.xlane.xlu0 %871
        %v873 = vsel %vm773, %v678, 0.0
        %874 = vadd.xlane.f32.xlu0 %v873
        %v875 = vpop.xlane.xlu0 %874
        %v876 = vsel %vm773, %v679, 0.0
        %877 = vadd.xlane.f32.xlu0 %v876
        %v878 = vpop.xlane.xlu0 %877
        %v879 = vsel %vm773, %v680, 0.0
        %880 = vadd.xlane.f32.xlu0 %v879
        %v881 = vpop.xlane.xlu0 %880
        %v882 = vsel %vm773, %v681, 0.0
        %883 = vadd.xlane.f32.xlu0 %v882
        %v884 = vpop.xlane.xlu0 %883
        %v885 = vsel %vm773, %v682, 0.0
        %886 = vadd.xlane.f32.xlu0 %v885
        %v887 = vpop.xlane.xlu0 %886
        %v888 = vsel %vm773, %v683, 0.0
        %889 = vadd.xlane.f32.xlu0 %v888
        %v890 = vpop.xlane.xlu0 %889
        %v891 = vsel %vm773, %v684, 0.0
        %892 = vadd.xlane.f32.xlu0 %v891
        %v893 = vpop.xlane.xlu0 %892
        %v894 = vsel %vm773, %v685, 0.0
        %895 = vadd.xlane.f32.xlu0 %v894
        %v896 = vpop.xlane.xlu0 %895
        %v897 = vsel %vm773, %v686, 0.0
        %898 = vadd.xlane.f32.xlu0 %v897
        %v899 = vpop.xlane.xlu0 %898
        %v900 = vsel %vm773, %v687, 0.0
        %901 = vadd.xlane.f32.xlu0 %v900
        %v902 = vpop.xlane.xlu0 %901
        %v903 = vsel %vm773, %v688, 0.0
        %904 = vadd.xlane.f32.xlu0 %v903
        %v905 = vpop.xlane.xlu0 %904
        %v906 = vsel %vm773, %v689, 0.0
        %907 = vadd.xlane.f32.xlu0 %v906
        %v908 = vpop.xlane.xlu0 %907
        %v909 = vsel %vm773, %v690, 0.0
        %910 = vadd.xlane.f32.xlu0 %v909
        %v911 = vpop.xlane.xlu0 %910
        %v912 = vsel %vm773, %v691, 0.0
        %913 = vadd.xlane.f32.xlu0 %v912
        %v914 = vpop.xlane.xlu0 %913
        %v915 = vsel %vm773, %v692, 0.0
        %916 = vadd.xlane.f32.xlu0 %v915
        %v917 = vpop.xlane.xlu0 %916
        %v918 = vsel %vm773, %v693, 0.0
        %919 = vadd.xlane.f32.xlu0 %v918
        %v920 = vpop.xlane.xlu0 %919
        %v921 = vsel %vm773, %v694, 0.0
        %922 = vadd.xlane.f32.xlu0 %v921
        %v923 = vpop.xlane.xlu0 %922
        %v924 = vsel %vm773, %v695, 0.0
        %925 = vadd.xlane.f32.xlu0 %v924
        %v926 = vpop.xlane.xlu0 %925
        %v927 = vsel %vm773, %v696, 0.0
        %928 = vadd.xlane.f32.xlu0 %v927
        %v929 = vpop.xlane.xlu0 %928
        %v930 = vsel %vm773, %v697, 0.0
        %931 = vadd.xlane.f32.xlu0 %v930
        %v932 = vpop.xlane.xlu0 %931
        %v933 = vsel %vm773, %v698, 0.0
        %934 = vadd.xlane.f32.xlu0 %v933
        %v935 = vpop.xlane.xlu0 %934
        %v936 = vsel %vm773, %v699, 0.0
        %937 = vadd.xlane.f32.xlu0 %v936
        %v938 = vpop.xlane.xlu0 %937
        %v939 = vsel %vm773, %v700, 0.0
        %940 = vadd.xlane.f32.xlu0 %v939
        %v941 = vpop.xlane.xlu0 %940
        %v942 = vsel %vm773, %v701, 0.0
        %943 = vadd.xlane.f32.xlu0 %v942
        %v944 = vpop.xlane.xlu0 %943
        %v945 = vsel %vm773, %v702, 0.0
        %946 = vadd.xlane.f32.xlu0 %v945
        %v947 = vpop.xlane.xlu0 %946
        %v948 = vsel %vm773, %v703, 0.0
        %949 = vadd.xlane.f32.xlu0 %v948
        %v950 = vpop.xlane.xlu0 %949
        %v951 = vsel %vm773, %v704, 0.0
        %952 = vadd.xlane.f32.xlu0 %v951
        %v953 = vpop.xlane.xlu0 %952
        %v954 = vsel %vm773, %v705, 0.0
        %955 = vadd.xlane.f32.xlu0 %v954
        %v956 = vpop.xlane.xlu0 %955
        %v957 = vsel %vm773, %v706, 0.0
        %958 = vadd.xlane.f32.xlu0 %v957
        %v959 = vpop.xlane.xlu0 %958
        %v960 = vsel %vm773, %v707, 0.0
        %961 = vadd.xlane.f32.xlu0 %v960
        %v962 = vpop.xlane.xlu0 %961
        %v963 = vsel %vm773, %v708, 0.0
        %964 = vadd.xlane.f32.xlu0 %v963
        %v965 = vpop.xlane.xlu0 %964
        %v966 = vsel %vm773, %v709, 0.0
        %967 = vadd.xlane.f32.xlu0 %v966
        %v968 = vpop.xlane.xlu0 %967
        %v969 = vsel %vm773, %v710, 0.0
        %970 = vadd.xlane.f32.xlu0 %v969
        %v971 = vpop.xlane.xlu0 %970
        %v972 = vsel %vm773, %v711, 0.0
        %973 = vadd.xlane.f32.xlu0 %v972
        %v974 = vpop.xlane.xlu0 %973
        %v975 = vsel %vm773, %v712, 0.0
        %976 = vadd.xlane.f32.xlu0 %v975
        %v977 = vpop.xlane.xlu0 %976
        %v978 = vsel %vm773, %v713, 0.0
        %979 = vadd.xlane.f32.xlu0 %v978
        %v980 = vpop.xlane.xlu0 %979
        %v981 = vsel %vm773, %v714, 0.0
        %982 = vadd.xlane.f32.xlu0 %v981
        %v983 = vpop.xlane.xlu0 %982
        %v984 = vsel %vm773, %v715, 0.0
        %985 = vadd.xlane.f32.xlu0 %v984
        %v986 = vpop.xlane.xlu0 %985
        %v987 = vsel %vm773, %v716, 0.0
        %988 = vadd.xlane.f32.xlu0 %v987
        %v989 = vpop.xlane.xlu0 %988
        %v990 = vsel %vm773, %v717, 0.0
        %991 = vadd.xlane.f32.xlu0 %v990
        %v992 = vpop.xlane.xlu0 %991
        %v993 = vsel %vm773, %v718, 0.0
        %994 = vadd.xlane.f32.xlu0 %v993
        %v995 = vpop.xlane.xlu0 %994
        %v996 = vsel %vm773, %v719, 0.0
        %997 = vadd.xlane.f32.xlu0 %v996
        %v998 = vpop.xlane.xlu0 %997
        %v999 = vsel %vm773, %v720, 0.0
        %1000 = vadd.xlane.f32.xlu0 %v999
        %v1001 = vpop.xlane.xlu0 %1000
        %v1002 = vsel %vm773, %v721, 0.0
        %1003 = vadd.xlane.f32.xlu0 %v1002
        %v1004 = vpop.xlane.xlu0 %1003
        %v1005 = vsel %vm773, %v722, 0.0
        %1006 = vadd.xlane.f32.xlu0 %v1005
        %v1007 = vpop.xlane.xlu0 %1006
        %v1008 = vsel %vm773, %v723, 0.0
        %1009 = vadd.xlane.f32.xlu0 %v1008
        %v1010 = vpop.xlane.xlu0 %1009
        %v1011 = vsel %vm773, %v724, 0.0
        %1012 = vadd.xlane.f32.xlu0 %v1011
        %v1013 = vpop.xlane.xlu0 %1012
        %v1014 = vsel %vm773, %v725, 0.0
        %1015 = vadd.xlane.f32.xlu0 %v1014
        %v1016 = vpop.xlane.xlu0 %1015
        %v1017 = vsel %vm773, %v726, 0.0
        %1018 = vadd.xlane.f32.xlu0 %v1017
        %v1019 = vpop.xlane.xlu0 %1018
        %v1020 = vsel %vm773, %v727, 0.0
        %1021 = vadd.xlane.f32.xlu0 %v1020
        %v1022 = vpop.xlane.xlu0 %1021
        %v1023 = vsel %vm773, %v728, 0.0
        %1024 = vadd.xlane.f32.xlu0 %v1023
        %v1025 = vpop.xlane.xlu0 %1024
        %v1026 = vsel %vm773, %v729, 0.0
        %1027 = vadd.xlane.f32.xlu0 %v1026
        %v1028 = vpop.xlane.xlu0 %1027
        %v1029 = vsel %vm773, %v730, 0.0
        %1030 = vadd.xlane.f32.xlu0 %v1029
        %v1031 = vpop.xlane.xlu0 %1030
        %v1032 = vsel %vm773, %v731, 0.0
        %1033 = vadd.xlane.f32.xlu0 %v1032
        %v1034 = vpop.xlane.xlu0 %1033
        %v1035 = vsel %vm773, %v732, 0.0
        %1036 = vadd.xlane.f32.xlu0 %v1035
        %v1037 = vpop.xlane.xlu0 %1036
        %v1038 = vsel %vm773, %v733, 0.0
        %1039 = vadd.xlane.f32.xlu0 %v1038
        %v1040 = vpop.xlane.xlu0 %1039
        %v1041 = vsel %vm773, %v734, 0.0
        %1042 = vadd.xlane.f32.xlu0 %v1041
        %v1043 = vpop.xlane.xlu0 %1042
        %v1044 = vsel %vm773, %v735, 0.0
        %1045 = vadd.xlane.f32.xlu0 %v1044
        %v1046 = vpop.xlane.xlu0 %1045
        %v1047 = vsel %vm773, %v736, 0.0
        %1048 = vadd.xlane.f32.xlu0 %v1047
        %v1049 = vpop.xlane.xlu0 %1048
        %v1050 = vsel %vm773, %v737, 0.0
        %1051 = vadd.xlane.f32.xlu0 %v1050
        %v1052 = vpop.xlane.xlu0 %1051
        %v1053 = vsel %vm773, %v738, 0.0
        %1054 = vadd.xlane.f32.xlu0 %v1053
        %v1055 = vpop.xlane.xlu0 %1054
        %v1056 = vsel %vm773, %v739, 0.0
        %1057 = vadd.xlane.f32.xlu0 %v1056
        %v1058 = vpop.xlane.xlu0 %1057
        %v1059 = vsel %vm773, %v740, 0.0
        %1060 = vadd.xlane.f32.xlu0 %v1059
        %v1061 = vpop.xlane.xlu0 %1060
        %v1062 = vsel %vm773, %v741, 0.0
        %1063 = vadd.xlane.f32.xlu0 %v1062
        %v1064 = vpop.xlane.xlu0 %1063
        %v1065 = vsel %vm773, %v742, 0.0
        %1066 = vadd.xlane.f32.xlu0 %v1065
        %v1067 = vpop.xlane.xlu0 %1066
        %v1068 = vsel %vm773, %v743, 0.0
        %1069 = vadd.xlane.f32.xlu0 %v1068
        %v1070 = vpop.xlane.xlu0 %1069
        %v1071 = vsel %vm773, %v744, 0.0
        %1072 = vadd.xlane.f32.xlu0 %v1071
        %v1073 = vpop.xlane.xlu0 %1072
        %v1074 = vsel %vm773, %v745, 0.0
        %1075 = vadd.xlane.f32.xlu0 %v1074
        %v1076 = vpop.xlane.xlu0 %1075
        %v1077 = vsel %vm773, %v746, 0.0
        %1078 = vadd.xlane.f32.xlu0 %v1077
        %v1079 = vpop.xlane.xlu0 %1078
        %v1080 = vsel %vm773, %v747, 0.0
        %1081 = vadd.xlane.f32.xlu0 %v1080
        %v1082 = vpop.xlane.xlu0 %1081
        %v1083 = vsel %vm773, %v748, 0.0
        %1084 = vadd.xlane.f32.xlu0 %v1083
        %v1085 = vpop.xlane.xlu0 %1084
        %v1086 = vsel %vm773, %v749, 0.0
        %1087 = vadd.xlane.f32.xlu0 %v1086
        %v1088 = vpop.xlane.xlu0 %1087
        %v1089 = vsel %vm773, %v750, 0.0
        %1090 = vadd.xlane.f32.xlu0 %v1089
        %v1091 = vpop.xlane.xlu0 %1090
        %v1092 = vsel %vm773, %v751, 0.0
        %1093 = vadd.xlane.f32.xlu0 %v1092
        %v1094 = vpop.xlane.xlu0 %1093
        %v1095 = vsel %vm773, %v752, 0.0
        %1096 = vadd.xlane.f32.xlu0 %v1095
        %v1097 = vpop.xlane.xlu0 %1096
        %v1098 = vsel %vm773, %v753, 0.0
        %1099 = vadd.xlane.f32.xlu0 %v1098
        %v1100 = vpop.xlane.xlu0 %1099
        %v1101 = vsel %vm773, %v754, 0.0
        %1102 = vadd.xlane.f32.xlu0 %v1101
        %v1103 = vpop.xlane.xlu0 %1102
        %v1104 = vsel %vm773, %v755, 0.0
        %1105 = vadd.xlane.f32.xlu0 %v1104
        %v1106 = vpop.xlane.xlu0 %1105
        %v1107 = vsel %vm773, %v756, 0.0
        %1108 = vadd.xlane.f32.xlu0 %v1107
        %v1109 = vpop.xlane.xlu0 %1108
        %v1110 = vsel %vm773, %v757, 0.0
        %1111 = vadd.xlane.f32.xlu0 %v1110
        %v1112 = vpop.xlane.xlu0 %1111
        %v1113 = vsel %vm773, %v758, 0.0
        %1114 = vadd.xlane.f32.xlu0 %v1113
        %v1115 = vpop.xlane.xlu0 %1114
        %v1116 = vsel %vm773, %v759, 0.0
        %1117 = vadd.xlane.f32.xlu0 %v1116
        %v1118 = vpop.xlane.xlu0 %1117
        %v1119 = vsel %vm773, %v760, 0.0
        %1120 = vadd.xlane.f32.xlu0 %v1119
        %v1121 = vpop.xlane.xlu0 %1120
        %v1122 = vsel %vm773, %v761, 0.0
        %1123 = vadd.xlane.f32.xlu0 %v1122
        %v1124 = vpop.xlane.xlu0 %1123
        %v1125 = vsel %vm773, %v762, 0.0
        %1126 = vadd.xlane.f32.xlu0 %v1125
        %v1127 = vpop.xlane.xlu0 %1126
        %v1128 = vsel %vm773, %v763, 0.0
        %1129 = vadd.xlane.f32.xlu0 %v1128
        %v1130 = vpop.xlane.xlu0 %1129
        %v1131 = vsel %vm773, %v764, 0.0
        %1132 = vadd.xlane.f32.xlu0 %v1131
        %v1133 = vpop.xlane.xlu0 %1132
        %v1134 = vsel %vm773, %v765, 0.0
        %1135 = vadd.xlane.f32.xlu0 %v1134
        %v1136 = vpop.xlane.xlu0 %1135
        %v1137 = vsel %vm773, %v766, 0.0
        %1138 = vadd.xlane.f32.xlu0 %v1137
        %v1139 = vpop.xlane.xlu0 %1138
        %v1140 = vsel %vm773, %v767, 0.0
        %1141 = vadd.xlane.f32.xlu0 %v1140
        %v1142 = vpop.xlane.xlu0 %1141
        %v1143 = vsel %vm773, %v768, 0.0
        %1144 = vadd.xlane.f32.xlu0 %v1143
        %v1145 = vpop.xlane.xlu0 %1144
        %v1146 = vsel %vm773, %v769, 0.0
        %1147 = vadd.xlane.f32.xlu0 %v1146
        %v1148 = vpop.xlane.xlu0 %1147
        %v1149 = vsel %vm773, %v770, 0.0
        %1150 = vadd.xlane.f32.xlu0 %v1149
        %v1151 = vpop.xlane.xlu0 %1150
        %v1152 = vsel %vm773, %v771, 0.0
        %1153 = vadd.xlane.f32.xlu0 %v1152
        %v1154 = vpop.xlane.xlu0 %1153
        %v1155 = vsel %vm773, %v772, 0.0
        %1156 = vadd.xlane.f32.xlu0 %v1155
        %v1157 = vpop.xlane.xlu0 %1156
        %v1286 = vlaneseq
        %v1287 = vand.u32 %v1286, 127
        %v1288 = vperm.slane %v776, %v1287
        %v1289 = vperm.slane %v779, %v1287
        %v1290 = vperm.slane %v782, %v1287
        %v1291 = vperm.slane %v785, %v1287
        %v1292 = vperm.slane %v788, %v1287
        %v1293 = vperm.slane %v791, %v1287
        %v1294 = vperm.slane %v794, %v1287
        %v1295 = vperm.slane %v797, %v1287
        %v1296 = vperm.slane %v800, %v1287
        %v1297 = vperm.slane %v803, %v1287
        %v1298 = vperm.slane %v806, %v1287
        %v1299 = vperm.slane %v809, %v1287
        %v1300 = vperm.slane %v812, %v1287
        %v1301 = vperm.slane %v815, %v1287
        %v1302 = vperm.slane %v818, %v1287
        %v1303 = vperm.slane %v821, %v1287
        %v1304 = vperm.slane %v824, %v1287
        %v1305 = vperm.slane %v827, %v1287
        %v1306 = vperm.slane %v830, %v1287
        %v1307 = vperm.slane %v833, %v1287
        %v1308 = vperm.slane %v836, %v1287
        %v1309 = vperm.slane %v839, %v1287
        %v1310 = vperm.slane %v842, %v1287
        %v1311 = vperm.slane %v845, %v1287
        %v1312 = vperm.slane %v848, %v1287
        %v1313 = vperm.slane %v851, %v1287
        %v1314 = vperm.slane %v854, %v1287
        %v1315 = vperm.slane %v857, %v1287
        %v1316 = vperm.slane %v860, %v1287
        %v1317 = vperm.slane %v863, %v1287
        %v1318 = vperm.slane %v866, %v1287
        %v1319 = vperm.slane %v869, %v1287
        %v1320 = vperm.slane %v872, %v1287
        %v1321 = vperm.slane %v875, %v1287
        %v1322 = vperm.slane %v878, %v1287
        %v1323 = vperm.slane %v881, %v1287
        %v1324 = vperm.slane %v884, %v1287
        %v1325 = vperm.slane %v887, %v1287
        %v1326 = vperm.slane %v890, %v1287
        %v1327 = vperm.slane %v893, %v1287
        %v1328 = vperm.slane %v896, %v1287
        %v1329 = vperm.slane %v899, %v1287
        %v1330 = vperm.slane %v902, %v1287
        %v1331 = vperm.slane %v905, %v1287
        %v1332 = vperm.slane %v908, %v1287
        %v1333 = vperm.slane %v911, %v1287
        %v1334 = vperm.slane %v914, %v1287
        %v1335 = vperm.slane %v917, %v1287
        %v1336 = vperm.slane %v920, %v1287
        %v1337 = vperm.slane %v923, %v1287
        %v1338 = vperm.slane %v926, %v1287
        %v1339 = vperm.slane %v929, %v1287
        %v1340 = vperm.slane %v932, %v1287
        %v1341 = vperm.slane %v935, %v1287
        %v1342 = vperm.slane %v938, %v1287
        %v1343 = vperm.slane %v941, %v1287
        %v1344 = vperm.slane %v944, %v1287
        %v1345 = vperm.slane %v947, %v1287
        %v1346 = vperm.slane %v950, %v1287
        %v1347 = vperm.slane %v953, %v1287
        %v1348 = vperm.slane %v956, %v1287
        %v1349 = vperm.slane %v959, %v1287
        %v1350 = vperm.slane %v962, %v1287
        %v1351 = vperm.slane %v965, %v1287
        %v1352 = vperm.slane %v968, %v1287
        %v1353 = vperm.slane %v971, %v1287
        %v1354 = vperm.slane %v974, %v1287
        %v1355 = vperm.slane %v977, %v1287
        %v1356 = vperm.slane %v980, %v1287
        %v1357 = vperm.slane %v983, %v1287
        %v1358 = vperm.slane %v986, %v1287
        %v1359 = vperm.slane %v989, %v1287
        %v1360 = vperm.slane %v992, %v1287
        %v1361 = vperm.slane %v995, %v1287
        %v1362 = vperm.slane %v998, %v1287
        %v1363 = vperm.slane %v1001, %v1287
        %v1364 = vperm.slane %v1004, %v1287
        %v1365 = vperm.slane %v1007, %v1287
        %v1366 = vperm.slane %v1010, %v1287
        %v1367 = vperm.slane %v1013, %v1287
        %v1368 = vperm.slane %v1016, %v1287
        %v1369 = vperm.slane %v1019, %v1287
        %v1370 = vperm.slane %v1022, %v1287
        %v1371 = vperm.slane %v1025, %v1287
        %v1372 = vperm.slane %v1028, %v1287
        %v1373 = vperm.slane %v1031, %v1287
        %v1374 = vperm.slane %v1034, %v1287
        %v1375 = vperm.slane %v1037, %v1287
        %v1376 = vperm.slane %v1040, %v1287
        %v1377 = vperm.slane %v1043, %v1287
        %v1378 = vperm.slane %v1046, %v1287
        %v1379 = vperm.slane %v1049, %v1287
        %v1380 = vperm.slane %v1052, %v1287
        %v1381 = vperm.slane %v1055, %v1287
        %v1382 = vperm.slane %v1058, %v1287
        %v1383 = vperm.slane %v1061, %v1287
        %v1384 = vperm.slane %v1064, %v1287
        %v1385 = vperm.slane %v1067, %v1287
        %v1386 = vperm.slane %v1070, %v1287
        %v1387 = vperm.slane %v1073, %v1287
        %v1388 = vperm.slane %v1076, %v1287
        %v1389 = vperm.slane %v1079, %v1287
        %v1390 = vperm.slane %v1082, %v1287
        %v1391 = vperm.slane %v1085, %v1287
        %v1392 = vperm.slane %v1088, %v1287
        %v1393 = vperm.slane %v1091, %v1287
        %v1394 = vperm.slane %v1094, %v1287
        %v1395 = vperm.slane %v1097, %v1287
        %v1396 = vperm.slane %v1100, %v1287
        %v1397 = vperm.slane %v1103, %v1287
        %v1398 = vperm.slane %v1106, %v1287
        %v1399 = vperm.slane %v1109, %v1287
        %v1400 = vperm.slane %v1112, %v1287
        %v1401 = vperm.slane %v1115, %v1287
        %v1402 = vperm.slane %v1118, %v1287
        %v1403 = vperm.slane %v1121, %v1287
        %v1404 = vperm.slane %v1124, %v1287
        %v1405 = vperm.slane %v1127, %v1287
        %v1406 = vperm.slane %v1130, %v1287
        %v1407 = vperm.slane %v1133, %v1287
        %v1408 = vperm.slane %v1136, %v1287
        %v1409 = vperm.slane %v1139, %v1287
        %v1410 = vperm.slane %v1142, %v1287
        %v1411 = vperm.slane %v1145, %v1287
        %v1412 = vperm.slane %v1148, %v1287
        %v1413 = vperm.slane %v1151, %v1287
        %v1414 = vperm.slane %v1154, %v1287
        %v1415 = vperm.slane %v1157, %v1287
        %vm1416 = vcmask 1041409
        %v1417 = vsel %vm1416, %v1289, %v1288
        %vm1418 = vcmask 1042434
        %v1419 = vsel %vm1418, %v1290, %v1417
        %vm1420 = vcmask 1043459
        %v1421 = vsel %vm1420, %v1291, %v1419
        %vm1422 = vcmask 1044484
        %v1423 = vsel %vm1422, %v1292, %v1421
        %vm1424 = vcmask 1045509
        %v1425 = vsel %vm1424, %v1293, %v1423
        %vm1426 = vcmask 1046534
        %v1427 = vsel %vm1426, %v1294, %v1425
        %vm1428 = vcmask 1047559
        %v1429 = vsel %vm1428, %v1295, %v1427
        %v1430 = vsel %vm1416, %v1297, %v1296
        %v1431 = vsel %vm1418, %v1298, %v1430
        %v1432 = vsel %vm1420, %v1299, %v1431
        %v1433 = vsel %vm1422, %v1300, %v1432
        %v1434 = vsel %vm1424, %v1301, %v1433
        %v1435 = vsel %vm1426, %v1302, %v1434
        %v1436 = vsel %vm1428, %v1303, %v1435
        %v1437 = vsel %vm1416, %v1305, %v1304
        %v1438 = vsel %vm1418, %v1306, %v1437
        %v1439 = vsel %vm1420, %v1307, %v1438
        %v1440 = vsel %vm1422, %v1308, %v1439
        %v1441 = vsel %vm1424, %v1309, %v1440
        %v1442 = vsel %vm1426, %v1310, %v1441
        %v1443 = vsel %vm1428, %v1311, %v1442
        %v1444 = vsel %vm1416, %v1313, %v1312
        %v1445 = vsel %vm1418, %v1314, %v1444
        %v1446 = vsel %vm1420, %v1315, %v1445
        %v1447 = vsel %vm1422, %v1316, %v1446
        %v1448 = vsel %vm1424, %v1317, %v1447
        %v1449 = vsel %vm1426, %v1318, %v1448
        %v1450 = vsel %vm1428, %v1319, %v1449
        %v1451 = vsel %vm1416, %v1321, %v1320
        %v1452 = vsel %vm1418, %v1322, %v1451
        %v1453 = vsel %vm1420, %v1323, %v1452
        %v1454 = vsel %vm1422, %v1324, %v1453
        %v1455 = vsel %vm1424, %v1325, %v1454
        %v1456 = vsel %vm1426, %v1326, %v1455
        %v1457 = vsel %vm1428, %v1327, %v1456
        %v1458 = vsel %vm1416, %v1329, %v1328
        %v1459 = vsel %vm1418, %v1330, %v1458
        %v1460 = vsel %vm1420, %v1331, %v1459
        %v1461 = vsel %vm1422, %v1332, %v1460
        %v1462 = vsel %vm1424, %v1333, %v1461
        %v1463 = vsel %vm1426, %v1334, %v1462
        %v1464 = vsel %vm1428, %v1335, %v1463
        %v1465 = vsel %vm1416, %v1337, %v1336
        %v1466 = vsel %vm1418, %v1338, %v1465
        %v1467 = vsel %vm1420, %v1339, %v1466
        %v1468 = vsel %vm1422, %v1340, %v1467
        %v1469 = vsel %vm1424, %v1341, %v1468
        %v1470 = vsel %vm1426, %v1342, %v1469
        %v1471 = vsel %vm1428, %v1343, %v1470
        %v1472 = vsel %vm1416, %v1345, %v1344
        %v1473 = vsel %vm1418, %v1346, %v1472
        %v1474 = vsel %vm1420, %v1347, %v1473
        %v1475 = vsel %vm1422, %v1348, %v1474
        %v1476 = vsel %vm1424, %v1349, %v1475
        %v1477 = vsel %vm1426, %v1350, %v1476
        %v1478 = vsel %vm1428, %v1351, %v1477
        %v1479 = vsel %vm1416, %v1353, %v1352
        %v1480 = vsel %vm1418, %v1354, %v1479
        %v1481 = vsel %vm1420, %v1355, %v1480
        %v1482 = vsel %vm1422, %v1356, %v1481
        %v1483 = vsel %vm1424, %v1357, %v1482
        %v1484 = vsel %vm1426, %v1358, %v1483
        %v1485 = vsel %vm1428, %v1359, %v1484
        %v1486 = vsel %vm1416, %v1361, %v1360
        %v1487 = vsel %vm1418, %v1362, %v1486
        %v1488 = vsel %vm1420, %v1363, %v1487
        %v1489 = vsel %vm1422, %v1364, %v1488
        %v1490 = vsel %vm1424, %v1365, %v1489
        %v1491 = vsel %vm1426, %v1366, %v1490
        %v1492 = vsel %vm1428, %v1367, %v1491
        %v1493 = vsel %vm1416, %v1369, %v1368
        %v1494 = vsel %vm1418, %v1370, %v1493
        %v1495 = vsel %vm1420, %v1371, %v1494
        %v1496 = vsel %vm1422, %v1372, %v1495
        %v1497 = vsel %vm1424, %v1373, %v1496
        %v1498 = vsel %vm1426, %v1374, %v1497
        %v1499 = vsel %vm1428, %v1375, %v1498
        %v1500 = vsel %vm1416, %v1377, %v1376
        %v1501 = vsel %vm1418, %v1378, %v1500
        %v1502 = vsel %vm1420, %v1379, %v1501
        %v1503 = vsel %vm1422, %v1380, %v1502
        %v1504 = vsel %vm1424, %v1381, %v1503
        %v1505 = vsel %vm1426, %v1382, %v1504
        %v1506 = vsel %vm1428, %v1383, %v1505
        %v1507 = vsel %vm1416, %v1385, %v1384
        %v1508 = vsel %vm1418, %v1386, %v1507
        %v1509 = vsel %vm1420, %v1387, %v1508
        %v1510 = vsel %vm1422, %v1388, %v1509
        %v1511 = vsel %vm1424, %v1389, %v1510
        %v1512 = vsel %vm1426, %v1390, %v1511
        %v1513 = vsel %vm1428, %v1391, %v1512
        %v1514 = vsel %vm1416, %v1393, %v1392
        %v1515 = vsel %vm1418, %v1394, %v1514
        %v1516 = vsel %vm1420, %v1395, %v1515
        %v1517 = vsel %vm1422, %v1396, %v1516
        %v1518 = vsel %vm1424, %v1397, %v1517
        %v1519 = vsel %vm1426, %v1398, %v1518
        %v1520 = vsel %vm1428, %v1399, %v1519
        %v1521 = vsel %vm1416, %v1401, %v1400
        %v1522 = vsel %vm1418, %v1402, %v1521
        %v1523 = vsel %vm1420, %v1403, %v1522
        %v1524 = vsel %vm1422, %v1404, %v1523
        %v1525 = vsel %vm1424, %v1405, %v1524
        %v1526 = vsel %vm1426, %v1406, %v1525
        %v1527 = vsel %vm1428, %v1407, %v1526
        %v1528 = vsel %vm1416, %v1409, %v1408
        %v1529 = vsel %vm1418, %v1410, %v1528
        %v1530 = vsel %vm1420, %v1411, %v1529
        %v1531 = vsel %vm1422, %v1412, %v1530
        %v1532 = vsel %vm1424, %v1413, %v1531
        %v1533 = vsel %vm1426, %v1414, %v1532
        %v1534 = vsel %vm1428, %v1415, %v1533
        %v1551 = vadd.f32 %v501, %v1429
        %v1552 = vadd.f32 %v502, %v1436
        %v1553 = vadd.f32 %v503, %v1443
        %v1554 = vadd.f32 %v504, %v1450
        %v1555 = vadd.f32 %v505, %v1457
        %v1556 = vadd.f32 %v506, %v1464
        %v1557 = vadd.f32 %v507, %v1471
        %v1558 = vadd.f32 %v508, %v1478
        %v1559 = vadd.f32 %v509, %v1485
        %v1560 = vadd.f32 %v510, %v1492
        %v1561 = vadd.f32 %v511, %v1499
        %v1562 = vadd.f32 %v512, %v1506
        %v1563 = vadd.f32 %v513, %v1513
        %v1564 = vadd.f32 %v514, %v1520
        %v1565 = vadd.f32 %v515, %v1527
        %v1566 = vadd.f32 %v516, %v1534
        %vm1567 = vcmask 31744
        %1568 = vst.msk [vmem:[#allocation2] sm:$0xff] %vm1567, %v1551
        %1569 = vst.msk [vmem:[#allocation2 + $0x8] sm:$0xff] %vm1567, %v1552
        %1570 = vst.msk [vmem:[#allocation2 + $0x10] sm:$0xff] %vm1567, %v1553
        %1571 = vst.msk [vmem:[#allocation2 + $0x18] sm:$0xff] %vm1567, %v1554
        %1572 = vst.msk [vmem:[#allocation2 + $0x20] sm:$0xff] %vm1567, %v1555
        %1573 = vst.msk [vmem:[#allocation2 + $0x28] sm:$0xff] %vm1567, %v1556
        %1574 = vst.msk [vmem:[#allocation2 + $0x30] sm:$0xff] %vm1567, %v1557
        %1575 = vst.msk [vmem:[#allocation2 + $0x38] sm:$0xff] %vm1567, %v1558
        %1576 = vst.msk [vmem:[#allocation2 + $0x40] sm:$0xff] %vm1567, %v1559
        %1577 = vst.msk [vmem:[#allocation2 + $0x48] sm:$0xff] %vm1567, %v1560
        %1578 = vst.msk [vmem:[#allocation2 + $0x50] sm:$0xff] %vm1567, %v1561
        %1579 = vst.msk [vmem:[#allocation2 + $0x58] sm:$0xff] %vm1567, %v1562
        %1580 = vst.msk [vmem:[#allocation2 + $0x60] sm:$0xff] %vm1567, %v1563
        %1581 = vst.msk [vmem:[#allocation2 + $0x68] sm:$0xff] %vm1567, %v1564
        %1582 = vst.msk [vmem:[#allocation2 + $0x70] sm:$0xff] %vm1567, %v1565
        %1583 = vst.msk [vmem:[#allocation2 + $0x78] sm:$0xff] %vm1567, %v1566
        %p1584 = scmp.eq.s32.totalorder %s36, 1
        // Predicated region
        $region85: #{tpu_custom_call.1} parent=55 // pred_check
          %p1585 = pneg %p1584
        $region86: #{tpu_custom_call.1} parent=55 // pred_check_branch
          %1587 = sbr.rel (%p1585) target = $region88
        $region87: #{tpu_custom_call.1} parent=55 // pred_region
          %v1588 = vld [vmem:[#allocation2] sm:$0xff]
          %v1589 = vld [vmem:[#allocation2 + $0x8] sm:$0xff]
          %v1590 = vld [vmem:[#allocation2 + $0x10] sm:$0xff]
          %v1591 = vld [vmem:[#allocation2 + $0x18] sm:$0xff]
          %v1592 = vld [vmem:[#allocation2 + $0x20] sm:$0xff]
          %v1593 = vld [vmem:[#allocation2 + $0x28] sm:$0xff]
          %v1594 = vld [vmem:[#allocation2 + $0x30] sm:$0xff]
          %v1595 = vld [vmem:[#allocation2 + $0x38] sm:$0xff]
          %v1596 = vld [vmem:[#allocation2 + $0x40] sm:$0xff]
          %v1597 = vld [vmem:[#allocation2 + $0x48] sm:$0xff]
          %v1598 = vld [vmem:[#allocation2 + $0x50] sm:$0xff]
          %v1599 = vld [vmem:[#allocation2 + $0x58] sm:$0xff]
          %v1600 = vld [vmem:[#allocation2 + $0x60] sm:$0xff]
          %v1601 = vld [vmem:[#allocation2 + $0x68] sm:$0xff]
          %v1602 = vld [vmem:[#allocation2 + $0x70] sm:$0xff]
          %v1603 = vld [vmem:[#allocation2 + $0x78] sm:$0xff]
          %v1604 = vpack.c.bf16 %v1589, %v1588
          %v1605 = vpack.c.bf16 %v1591, %v1590
          %v1606 = vpack.c.bf16 %v1593, %v1592
          %v1607 = vpack.c.bf16 %v1595, %v1594
          %v1608 = vpack.c.bf16 %v1597, %v1596
          %v1609 = vpack.c.bf16 %v1599, %v1598
          %v1610 = vpack.c.bf16 %v1601, %v1600
          %v1611 = vpack.c.bf16 %v1603, %v1602
          %v1612 = vld [vmem:[#allocation8] sm:$0x3]
          %v1613 = vld [vmem:[%s3] sm:$0x1]
          %v1615 = vperm.slane %v1613, 0
          %v1618 = vsel %vm1567, %v1604, 0
          %v1621 = vsel %vm1567, %v1605, 0
          %v1624 = vsel %vm1567, %v1606, 0
          %v1627 = vsel %vm1567, %v1607, 0
          %v1630 = vsel %vm1567, %v1608, 0
          %v1633 = vsel %vm1567, %v1609, 0
          %v1636 = vsel %vm1567, %v1610, 0
          %v1639 = vsel %vm1567, %v1611, 0
          %vm1641 = vcmask 1041408
          %v1643 = vsel %vm1641, %v1612, 0
          %1645 = vmatpush.bf16.msra.mxu0 0
          %1646 = vmatpush.bf16.msra.mxu0 0
          %1647 = vmatpush.bf16.msra.mxu0 0
          %1648 = vmatpush.bf16.msra.mxu0 0
          %1649 = vmatpush.bf16.msra.mxu0 0
          %1650 = vmatpush.bf16.msra.mxu0 0
          %1651 = vmatpush.bf16.msra.mxu0 0
          %1652 = vmatpush.bf16.msra.mxu0 %v1643
          %1653 = vmatmul.bf16.gmra.mxu0 %v1618
          %v1654 = vpop.f32.mrf.mxu0
          %v1655 = vadd.f32 %v1615, %v1654
          %v1656 = vpop.f32.mrf.mxu0
          %v1657 = vadd.f32 %v1615, %v1656
          %1658 = vmatmul.bf16.gmra.mxu0 %v1621
          %v1659 = vpop.f32.mrf.mxu0
          %v1660 = vadd.f32 %v1615, %v1659
          %v1661 = vpop.f32.mrf.mxu0
          %v1662 = vadd.f32 %v1615, %v1661
          %1663 = vmatmul.bf16.gmra.mxu0 %v1624
          %v1664 = vpop.f32.mrf.mxu0
          %v1665 = vadd.f32 %v1615, %v1664
          %v1666 = vpop.f32.mrf.mxu0
          %v1667 = vadd.f32 %v1615, %v1666
          %1668 = vmatmul.bf16.gmra.mxu0 %v1627
          %v1669 = vpop.f32.mrf.mxu0
          %v1670 = vadd.f32 %v1615, %v1669
          %v1671 = vpop.f32.mrf.mxu0
          %v1672 = vadd.f32 %v1615, %v1671
          %1673 = vmatmul.bf16.gmra.mxu0 %v1630
          %v1674 = vpop.f32.mrf.mxu0
          %v1675 = vadd.f32 %v1615, %v1674
          %v1676 = vpop.f32.mrf.mxu0
          %v1677 = vadd.f32 %v1615, %v1676
          %1678 = vmatmul.bf16.gmra.mxu0 %v1633
          %v1679 = vpop.f32.mrf.mxu0
          %v1680 = vadd.f32 %v1615, %v1679
          %v1681 = vpop.f32.mrf.mxu0
          %v1682 = vadd.f32 %v1615, %v1681
          %1683 = vmatmul.bf16.gmra.mxu0 %v1636
          %v1684 = vpop.f32.mrf.mxu0
          %v1685 = vadd.f32 %v1615, %v1684
          %v1686 = vpop.f32.mrf.mxu0
          %v1687 = vadd.f32 %v1615, %v1686
          %1688 = vmatmul.bf16.gmra.mxu0 %v1639
          %v1689 = vpop.f32.mrf.mxu0
          %v1690 = vadd.f32 %v1615, %v1689
          %v1691 = vpop.f32.mrf.mxu0
          %v1692 = vadd.f32 %v1615, %v1691
          %1693 = vdwg.mxu0
          %v1694 = vmax.f32 %v1655, 0.0
          %v1695 = vmax.f32 %v1657, 0.0
          %v1696 = vmax.f32 %v1660, 0.0
          %v1697 = vmax.f32 %v1662, 0.0
          %v1698 = vmax.f32 %v1665, 0.0
          %v1699 = vmax.f32 %v1667, 0.0
          %v1700 = vmax.f32 %v1670, 0.0
          %v1701 = vmax.f32 %v1672, 0.0
          %v1702 = vmax.f32 %v1675, 0.0
          %v1703 = vmax.f32 %v1677, 0.0
          %v1704 = vmax.f32 %v1680, 0.0
          %v1705 = vmax.f32 %v1682, 0.0
          %v1706 = vmax.f32 %v1685, 0.0
          %v1707 = vmax.f32 %v1687, 0.0
          %v1708 = vmax.f32 %v1690, 0.0
          %v1709 = vmax.f32 %v1692, 0.0
          %v1710 = vpack.c.bf16 %v1695, %v1694
          %v1711 = vpack.c.bf16 %v1697, %v1696
          %v1712 = vpack.c.bf16 %v1699, %v1698
          %v1713 = vpack.c.bf16 %v1701, %v1700
          %v1714 = vpack.c.bf16 %v1703, %v1702
          %v1715 = vpack.c.bf16 %v1705, %v1704
          %v1716 = vpack.c.bf16 %v1707, %v1706
          %v1717 = vpack.c.bf16 %v1709, %v1708
          %v1718 = vld [vmem:[#allocation9] sm:$0xff]
          %v1719 = vld [vmem:[#allocation9 + $0x8] sm:$0xff]
          %v1720 = vld [vmem:[#allocation9 + $0x10] sm:$0xff]
          %v1721 = vld [vmem:[#allocation9 + $0x18] sm:$0xff]
          %v1722 = vld [vmem:[#allocation9 + $0x20] sm:$0xff]
          %v1723 = vld [vmem:[#allocation9 + $0x28] sm:$0xff]
          %v1724 = vld [vmem:[#allocation9 + $0x30] sm:$0xff]
          %v1725 = vld [vmem:[#allocation9 + $0x38] sm:$0xff]
          %v1726 = vld [vmem:[#allocation9 + $0x40] sm:$0xff]
          %v1727 = vld [vmem:[#allocation9 + $0x48] sm:$0xff]
          %v1728 = vld [vmem:[#allocation9 + $0x50] sm:$0xff]
          %v1729 = vld [vmem:[#allocation9 + $0x58] sm:$0xff]
          %v1730 = vld [vmem:[#allocation9 + $0x60] sm:$0xff]
          %v1731 = vld [vmem:[#allocation9 + $0x68] sm:$0xff]
          %v1732 = vld [vmem:[#allocation9 + $0x70] sm:$0xff]
          %v1733 = vld [vmem:[#allocation9 + $0x78] sm:$0xff]
          %v1734 = vld [vmem:[#allocation9 + $0x80] sm:$0xff]
          %v1735 = vld [vmem:[#allocation9 + $0x88] sm:$0xff]
          %v1736 = vld [vmem:[#allocation9 + $0x90] sm:$0xff]
          %v1737 = vld [vmem:[#allocation9 + $0x98] sm:$0xff]
          %v1738 = vld [vmem:[#allocation9 + $0xa0] sm:$0xff]
          %v1739 = vld [vmem:[#allocation9 + $0xa8] sm:$0xff]
          %v1740 = vld [vmem:[#allocation9 + $0xb0] sm:$0xff]
          %v1741 = vld [vmem:[#allocation9 + $0xb8] sm:$0xff]
          %v1742 = vld [vmem:[#allocation9 + $0xc0] sm:$0xff]
          %v1743 = vld [vmem:[#allocation9 + $0xc8] sm:$0xff]
          %v1744 = vld [vmem:[#allocation9 + $0xd0] sm:$0xff]
          %v1745 = vld [vmem:[#allocation9 + $0xd8] sm:$0xff]
          %v1746 = vld [vmem:[#allocation9 + $0xe0] sm:$0xff]
          %v1747 = vld [vmem:[#allocation9 + $0xe8] sm:$0xff]
          %v1748 = vld [vmem:[#allocation9 + $0xf0] sm:$0xff]
          %v1749 = vld [vmem:[#allocation9 + $0xf8] sm:$0xff]
          %v1750 = vld [vmem:[%s415] sm:$0xff]
          %v1751 = vld [vmem:[%s415 + $0x8] sm:$0xff]
          %v1752 = vld [vmem:[%s415 + $0x10] sm:$0xff]
          %v1753 = vld [vmem:[%s415 + $0x18] sm:$0xff]
          %v1754 = vld [vmem:[%s415 + $0x20] sm:$0xff]
          %v1755 = vld [vmem:[%s415 + $0x28] sm:$0xff]
          %v1756 = vld [vmem:[%s415 + $0x30] sm:$0xff]
          %v1757 = vld [vmem:[%s415 + $0x38] sm:$0xff]
          %v1758 = vld [vmem:[%s415 + $0x40] sm:$0xff]
          %v1759 = vld [vmem:[%s415 + $0x48] sm:$0xff]
          %v1760 = vld [vmem:[%s415 + $0x50] sm:$0xff]
          %v1761 = vld [vmem:[%s415 + $0x58] sm:$0xff]
          %v1762 = vld [vmem:[%s415 + $0x60] sm:$0xff]
          %v1763 = vld [vmem:[%s415 + $0x68] sm:$0xff]
          %v1764 = vld [vmem:[%s415 + $0x70] sm:$0xff]
          %v1765 = vld [vmem:[%s415 + $0x78] sm:$0xff]
          %v1766 = vld [vmem:[%s415 + $0x80] sm:$0xff]
          %v1767 = vld [vmem:[%s415 + $0x88] sm:$0xff]
          %v1768 = vld [vmem:[%s415 + $0x90] sm:$0xff]
          %v1769 = vld [vmem:[%s415 + $0x98] sm:$0xff]
          %v1770 = vld [vmem:[%s415 + $0xa0] sm:$0xff]
          %v1771 = vld [vmem:[%s415 + $0xa8] sm:$0xff]
          %v1772 = vld [vmem:[%s415 + $0xb0] sm:$0xff]
          %v1773 = vld [vmem:[%s415 + $0xb8] sm:$0xff]
          %v1774 = vld [vmem:[%s415 + $0xc0] sm:$0xff]
          %v1775 = vld [vmem:[%s415 + $0xc8] sm:$0xff]
          %v1776 = vld [vmem:[%s415 + $0xd0] sm:$0xff]
          %v1777 = vld [vmem:[%s415 + $0xd8] sm:$0xff]
          %v1778 = vld [vmem:[%s415 + $0xe0] sm:$0xff]
          %v1779 = vld [vmem:[%s415 + $0xe8] sm:$0xff]
          %v1780 = vld [vmem:[%s415 + $0xf0] sm:$0xff]
          %v1781 = vld [vmem:[%s415 + $0xf8] sm:$0xff]
          %v1782 = vld [vmem:[%s415 + $0x100] sm:$0xff]
          %v1783 = vld [vmem:[%s415 + $0x108] sm:$0xff]
          %v1784 = vld [vmem:[%s415 + $0x110] sm:$0xff]
          %v1785 = vld [vmem:[%s415 + $0x118] sm:$0xff]
          %v1786 = vld [vmem:[%s415 + $0x120] sm:$0xff]
          %v1787 = vld [vmem:[%s415 + $0x128] sm:$0xff]
          %v1788 = vld [vmem:[%s415 + $0x130] sm:$0xff]
          %v1789 = vld [vmem:[%s415 + $0x138] sm:$0xff]
          %v1790 = vld [vmem:[%s415 + $0x140] sm:$0xff]
          %v1791 = vld [vmem:[%s415 + $0x148] sm:$0xff]
          %v1792 = vld [vmem:[%s415 + $0x150] sm:$0xff]
          %v1793 = vld [vmem:[%s415 + $0x158] sm:$0xff]
          %v1794 = vld [vmem:[%s415 + $0x160] sm:$0xff]
          %v1795 = vld [vmem:[%s415 + $0x168] sm:$0xff]
          %v1796 = vld [vmem:[%s415 + $0x170] sm:$0xff]
          %v1797 = vld [vmem:[%s415 + $0x178] sm:$0xff]
          %v1798 = vld [vmem:[%s415 + $0x180] sm:$0xff]
          %v1799 = vld [vmem:[%s415 + $0x188] sm:$0xff]
          %v1800 = vld [vmem:[%s415 + $0x190] sm:$0xff]
          %v1801 = vld [vmem:[%s415 + $0x198] sm:$0xff]
          %v1802 = vld [vmem:[%s415 + $0x1a0] sm:$0xff]
          %v1803 = vld [vmem:[%s415 + $0x1a8] sm:$0xff]
          %v1804 = vld [vmem:[%s415 + $0x1b0] sm:$0xff]
          %v1805 = vld [vmem:[%s415 + $0x1b8] sm:$0xff]
          %v1806 = vld [vmem:[%s415 + $0x1c0] sm:$0xff]
          %v1807 = vld [vmem:[%s415 + $0x1c8] sm:$0xff]
          %v1808 = vld [vmem:[%s415 + $0x1d0] sm:$0xff]
          %v1809 = vld [vmem:[%s415 + $0x1d8] sm:$0xff]
          %v1810 = vld [vmem:[%s415 + $0x1e0] sm:$0xff]
          %v1811 = vld [vmem:[%s415 + $0x1e8] sm:$0xff]
          %v1812 = vld [vmem:[%s415 + $0x1f0] sm:$0xff]
          %v1813 = vld [vmem:[%s415 + $0x1f8] sm:$0xff]
          %v1846 = vunpack.c.l.b16 %v1718
          %v1847 = vunpack.c.h.b16 %v1718
          %v1848 = vunpack.c.l.b16 %v1719
          %v1849 = vunpack.c.h.b16 %v1719
          %v1850 = vunpack.c.l.b16 %v1720
          %v1851 = vunpack.c.h.b16 %v1720
          %v1852 = vunpack.c.l.b16 %v1721
          %v1853 = vunpack.c.h.b16 %v1721
          %v1854 = vunpack.c.l.b16 %v1722
          %v1855 = vunpack.c.h.b16 %v1722
          %v1856 = vunpack.c.l.b16 %v1723
          %v1857 = vunpack.c.h.b16 %v1723
          %v1858 = vunpack.c.l.b16 %v1724
          %v1859 = vunpack.c.h.b16 %v1724
          %v1860 = vunpack.c.l.b16 %v1725
          %v1861 = vunpack.c.h.b16 %v1725
          %v1862 = vunpack.c.l.b16 %v1726
          %v1863 = vunpack.c.h.b16 %v1726
          %v1864 = vunpack.c.l.b16 %v1727
          %v1865 = vunpack.c.h.b16 %v1727
          %v1866 = vunpack.c.l.b16 %v1728
          %v1867 = vunpack.c.h.b16 %v1728
          %v1868 = vunpack.c.l.b16 %v1729
          %v1869 = vunpack.c.h.b16 %v1729
          %v1870 = vunpack.c.l.b16 %v1730
          %v1871 = vunpack.c.h.b16 %v1730
          %v1872 = vunpack.c.l.b16 %v1731
          %v1873 = vunpack.c.h.b16 %v1731
          %v1874 = vunpack.c.l.b16 %v1732
          %v1875 = vunpack.c.h.b16 %v1732
          %v1876 = vunpack.c.l.b16 %v1733
          %v1877 = vunpack.c.h.b16 %v1733
          %v1878 = vunpack.c.l.b16 %v1734
          %v1879 = vunpack.c.h.b16 %v1734
          %v1880 = vunpack.c.l.b16 %v1735
          %v1881 = vunpack.c.h.b16 %v1735
          %v1882 = vunpack.c.l.b16 %v1736
          %v1883 = vunpack.c.h.b16 %v1736
          %v1884 = vunpack.c.l.b16 %v1737
          %v1885 = vunpack.c.h.b16 %v1737
          %v1886 = vunpack.c.l.b16 %v1738
          %v1887 = vunpack.c.h.b16 %v1738
          %v1888 = vunpack.c.l.b16 %v1739
          %v1889 = vunpack.c.h.b16 %v1739
          %v1890 = vunpack.c.l.b16 %v1740
          %v1891 = vunpack.c.h.b16 %v1740
          %v1892 = vunpack.c.l.b16 %v1741
          %v1893 = vunpack.c.h.b16 %v1741
          %v1894 = vunpack.c.l.b16 %v1742
          %v1895 = vunpack.c.h.b16 %v1742
          %v1896 = vunpack.c.l.b16 %v1743
          %v1897 = vunpack.c.h.b16 %v1743
          %v1898 = vunpack.c.l.b16 %v1744
          %v1899 = vunpack.c.h.b16 %v1744
          %v1900 = vunpack.c.l.b16 %v1745
          %v1901 = vunpack.c.h.b16 %v1745
          %v1902 = vunpack.c.l.b16 %v1746
          %v1903 = vunpack.c.h.b16 %v1746
          %v1904 = vunpack.c.l.b16 %v1747
          %v1905 = vunpack.c.h.b16 %v1747
          %v1906 = vunpack.c.l.b16 %v1748
          %v1907 = vunpack.c.h.b16 %v1748
          %v1908 = vunpack.c.l.b16 %v1749
          %v1909 = vunpack.c.h.b16 %v1749
          %v1910 = vpack.c.b16 %v1850, %v1846
          %v1911 = vpack.c.b16 %v1851, %v1847
          %v1912 = vpack.c.b16 %v1852, %v1848
          %v1913 = vpack.c.b16 %v1853, %v1849
          %v1914 = vpack.c.b16 %v1858, %v1854
          %v1915 = vpack.c.b16 %v1859, %v1855
          %v1916 = vpack.c.b16 %v1860, %v1856
          %v1917 = vpack.c.b16 %v1861, %v1857
          %v1918 = vpack.c.b16 %v1866, %v1862
          %v1919 = vpack.c.b16 %v1867, %v1863
          %v1920 = vpack.c.b16 %v1868, %v1864
          %v1921 = vpack.c.b16 %v1869, %v1865
          %v1922 = vpack.c.b16 %v1874, %v1870
          %v1923 = vpack.c.b16 %v1875, %v1871
          %v1924 = vpack.c.b16 %v1876, %v1872
          %v1925 = vpack.c.b16 %v1877, %v1873
          %v1926 = vpack.c.b16 %v1882, %v1878
          %v1927 = vpack.c.b16 %v1883, %v1879
          %v1928 = vpack.c.b16 %v1884, %v1880
          %v1929 = vpack.c.b16 %v1885, %v1881
          %v1930 = vpack.c.b16 %v1890, %v1886
          %v1931 = vpack.c.b16 %v1891, %v1887
          %v1932 = vpack.c.b16 %v1892, %v1888
          %v1933 = vpack.c.b16 %v1893, %v1889
          %v1934 = vpack.c.b16 %v1898, %v1894
          %v1935 = vpack.c.b16 %v1899, %v1895
          %v1936 = vpack.c.b16 %v1900, %v1896
          %v1937 = vpack.c.b16 %v1901, %v1897
          %v1938 = vpack.c.b16 %v1906, %v1902
          %v1939 = vpack.c.b16 %v1907, %v1903
          %v1940 = vpack.c.b16 %v1908, %v1904
          %v1941 = vpack.c.b16 %v1909, %v1905
          %1974 = vmatpush.bf16.msra.mxu0 %v1938
          %1975 = vmatpush.bf16.msra.mxu0 %v1934
          %1976 = vmatpush.bf16.msra.mxu0 %v1930
          %1977 = vmatpush.bf16.msra.mxu0 %v1926
          %1978 = vmatpush.bf16.msra.mxu0 %v1922
          %1979 = vmatpush.bf16.msra.mxu0 %v1918
          %1980 = vmatpush.bf16.msra.mxu0 %v1914
          %1981 = vmatpush.bf16.msra.mxu0 %v1910
          %1982 = vmatmul.bf16.gmra.mxu0 %v1710
          %v1983 = vpop.f32.mrf.mxu0
          %v1984 = vadd.f32 %v1750, %v1983
          %v1985 = vpop.f32.mrf.mxu0
          %v1986 = vadd.f32 %v1754, %v1985
          %1987 = vmatmul.bf16.gmra.mxu0 %v1711
          %v1988 = vpop.f32.mrf.mxu0
          %v1989 = vadd.f32 %v1758, %v1988
          %v1990 = vpop.f32.mrf.mxu0
          %v1991 = vadd.f32 %v1762, %v1990
          %1992 = vmatmul.bf16.gmra.mxu0 %v1712
          %v1993 = vpop.f32.mrf.mxu0
          %v1994 = vadd.f32 %v1766, %v1993
          %v1995 = vpop.f32.mrf.mxu0
          %v1996 = vadd.f32 %v1770, %v1995
          %1997 = vmatmul.bf16.gmra.mxu0 %v1713
          %v1998 = vpop.f32.mrf.mxu0
          %v1999 = vadd.f32 %v1774, %v1998
          %v2000 = vpop.f32.mrf.mxu0
          %v2001 = vadd.f32 %v1778, %v2000
          %2002 = vmatmul.bf16.gmra.mxu0 %v1714
          %v2003 = vpop.f32.mrf.mxu0
          %v2004 = vadd.f32 %v1782, %v2003
          %v2005 = vpop.f32.mrf.mxu0
          %v2006 = vadd.f32 %v1786, %v2005
          %2007 = vmatmul.bf16.gmra.mxu0 %v1715
          %v2008 = vpop.f32.mrf.mxu0
          %v2009 = vadd.f32 %v1790, %v2008
          %v2010 = vpop.f32.mrf.mxu0
          %v2011 = vadd.f32 %v1794, %v2010
          %2012 = vmatmul.bf16.gmra.mxu0 %v1716
          %v2013 = vpop.f32.mrf.mxu0
          %v2014 = vadd.f32 %v1798, %v2013
          %v2015 = vpop.f32.mrf.mxu0
          %v2016 = vadd.f32 %v1802, %v2015
          %2017 = vmatmul.bf16.gmra.mxu0 %v1717
          %v2018 = vpop.f32.mrf.mxu0
          %v2019 = vadd.f32 %v1806, %v2018
          %v2020 = vpop.f32.mrf.mxu0
          %v2021 = vadd.f32 %v1810, %v2020
          %2022 = vdwg.mxu0
          %2023 = vmatpush.bf16.msra.mxu0 %v1939
          %2024 = vmatpush.bf16.msra.mxu0 %v1935
          %2025 = vmatpush.bf16.msra.mxu0 %v1931
          %2026 = vmatpush.bf16.msra.mxu0 %v1927
          %2027 = vmatpush.bf16.msra.mxu0 %v1923
          %2028 = vmatpush.bf16.msra.mxu0 %v1919
          %2029 = vmatpush.bf16.msra.mxu0 %v1915
          %2030 = vmatpush.bf16.msra.mxu0 %v1911
          %2031 = vmatmul.bf16.gmra.mxu0 %v1710
          %v2032 = vpop.f32.mrf.mxu0
          %v2033 = vadd.f32 %v1751, %v2032
          %v2034 = vpop.f32.mrf.mxu0
          %v2035 = vadd.f32 %v1755, %v2034
          %2036 = vmatmul.bf16.gmra.mxu0 %v1711
          %v2037 = vpop.f32.mrf.mxu0
          %v2038 = vadd.f32 %v1759, %v2037
          %v2039 = vpop.f32.mrf.mxu0
          %v2040 = vadd.f32 %v1763, %v2039
          %2041 = vmatmul.bf16.gmra.mxu0 %v1712
          %v2042 = vpop.f32.mrf.mxu0
          %v2043 = vadd.f32 %v1767, %v2042
          %v2044 = vpop.f32.mrf.mxu0
          %v2045 = vadd.f32 %v1771, %v2044
          %2046 = vmatmul.bf16.gmra.mxu0 %v1713
          %v2047 = vpop.f32.mrf.mxu0
          %v2048 = vadd.f32 %v1775, %v2047
          %v2049 = vpop.f32.mrf.mxu0
          %v2050 = vadd.f32 %v1779, %v2049
          %2051 = vmatmul.bf16.gmra.mxu0 %v1714
          %v2052 = vpop.f32.mrf.mxu0
          %v2053 = vadd.f32 %v1783, %v2052
          %v2054 = vpop.f32.mrf.mxu0
          %v2055 = vadd.f32 %v1787, %v2054
          %2056 = vmatmul.bf16.gmra.mxu0 %v1715
          %v2057 = vpop.f32.mrf.mxu0
          %v2058 = vadd.f32 %v1791, %v2057
          %v2059 = vpop.f32.mrf.mxu0
          %v2060 = vadd.f32 %v1795, %v2059
          %2061 = vmatmul.bf16.gmra.mxu0 %v1716
          %v2062 = vpop.f32.mrf.mxu0
          %v2063 = vadd.f32 %v1799, %v2062
          %v2064 = vpop.f32.mrf.mxu0
          %v2065 = vadd.f32 %v1803, %v2064
          %2066 = vmatmul.bf16.gmra.mxu0 %v1717
          %v2067 = vpop.f32.mrf.mxu0
          %v2068 = vadd.f32 %v1807, %v2067
          %v2069 = vpop.f32.mrf.mxu0
          %v2070 = vadd.f32 %v1811, %v2069
          %2071 = vdwg.mxu0
          %2072 = vmatpush.bf16.msra.mxu0 %v1940
          %2073 = vmatpush.bf16.msra.mxu0 %v1936
          %2074 = vmatpush.bf16.msra.mxu0 %v1932
          %2075 = vmatpush.bf16.msra.mxu0 %v1928
          %2076 = vmatpush.bf16.msra.mxu0 %v1924
          %2077 = vmatpush.bf16.msra.mxu0 %v1920
          %2078 = vmatpush.bf16.msra.mxu0 %v1916
          %2079 = vmatpush.bf16.msra.mxu0 %v1912
          %2080 = vmatmul.bf16.gmra.mxu0 %v1710
          %v2081 = vpop.f32.mrf.mxu0
          %v2082 = vadd.f32 %v1752, %v2081
          %v2083 = vpop.f32.mrf.mxu0
          %v2084 = vadd.f32 %v1756, %v2083
          %2085 = vmatmul.bf16.gmra.mxu0 %v1711
          %v2086 = vpop.f32.mrf.mxu0
          %v2087 = vadd.f32 %v1760, %v2086
          %v2088 = vpop.f32.mrf.mxu0
          %v2089 = vadd.f32 %v1764, %v2088
          %2090 = vmatmul.bf16.gmra.mxu0 %v1712
          %v2091 = vpop.f32.mrf.mxu0
          %v2092 = vadd.f32 %v1768, %v2091
          %v2093 = vpop.f32.mrf.mxu0
          %v2094 = vadd.f32 %v1772, %v2093
          %2095 = vmatmul.bf16.gmra.mxu0 %v1713
          %v2096 = vpop.f32.mrf.mxu0
          %v2097 = vadd.f32 %v1776, %v2096
          %v2098 = vpop.f32.mrf.mxu0
          %v2099 = vadd.f32 %v1780, %v2098
          %2100 = vmatmul.bf16.gmra.mxu0 %v1714
          %v2101 = vpop.f32.mrf.mxu0
          %v2102 = vadd.f32 %v1784, %v2101
          %v2103 = vpop.f32.mrf.mxu0
          %v2104 = vadd.f32 %v1788, %v2103
          %2105 = vmatmul.bf16.gmra.mxu0 %v1715
          %v2106 = vpop.f32.mrf.mxu0
          %v2107 = vadd.f32 %v1792, %v2106
          %v2108 = vpop.f32.mrf.mxu0
          %v2109 = vadd.f32 %v1796, %v2108
          %2110 = vmatmul.bf16.gmra.mxu0 %v1716
          %v2111 = vpop.f32.mrf.mxu0
          %v2112 = vadd.f32 %v1800, %v2111
          %v2113 = vpop.f32.mrf.mxu0
          %v2114 = vadd.f32 %v1804, %v2113
          %2115 = vmatmul.bf16.gmra.mxu0 %v1717
          %v2116 = vpop.f32.mrf.mxu0
          %v2117 = vadd.f32 %v1808, %v2116
          %v2118 = vpop.f32.mrf.mxu0
          %v2119 = vadd.f32 %v1812, %v2118
          %2120 = vdwg.mxu0
          %2121 = vmatpush.bf16.msra.mxu0 %v1941
          %2122 = vmatpush.bf16.msra.mxu0 %v1937
          %2123 = vmatpush.bf16.msra.mxu0 %v1933
          %2124 = vmatpush.bf16.msra.mxu0 %v1929
          %2125 = vmatpush.bf16.msra.mxu0 %v1925
          %2126 = vmatpush.bf16.msra.mxu0 %v1921
          %2127 = vmatpush.bf16.msra.mxu0 %v1917
          %2128 = vmatpush.bf16.msra.mxu0 %v1913
          %2129 = vmatmul.bf16.gmra.mxu0 %v1710
          %v2130 = vpop.f32.mrf.mxu0
          %v2131 = vadd.f32 %v1753, %v2130
          %v2132 = vpop.f32.mrf.mxu0
          %v2133 = vadd.f32 %v1757, %v2132
          %2134 = vmatmul.bf16.gmra.mxu0 %v1711
          %v2135 = vpop.f32.mrf.mxu0
          %v2136 = vadd.f32 %v1761, %v2135
          %v2137 = vpop.f32.mrf.mxu0
          %v2138 = vadd.f32 %v1765, %v2137
          %2139 = vmatmul.bf16.gmra.mxu0 %v1712
          %v2140 = vpop.f32.mrf.mxu0
          %v2141 = vadd.f32 %v1769, %v2140
          %v2142 = vpop.f32.mrf.mxu0
          %v2143 = vadd.f32 %v1773, %v2142
          %2144 = vmatmul.bf16.gmra.mxu0 %v1713
          %v2145 = vpop.f32.mrf.mxu0
          %v2146 = vadd.f32 %v1777, %v2145
          %v2147 = vpop.f32.mrf.mxu0
          %v2148 = vadd.f32 %v1781, %v2147
          %2149 = vmatmul.bf16.gmra.mxu0 %v1714
          %v2150 = vpop.f32.mrf.mxu0
          %v2151 = vadd.f32 %v1785, %v2150
          %v2152 = vpop.f32.mrf.mxu0
          %v2153 = vadd.f32 %v1789, %v2152
          %2154 = vmatmul.bf16.gmra.mxu0 %v1715
          %v2155 = vpop.f32.mrf.mxu0
          %v2156 = vadd.f32 %v1793, %v2155
          %v2157 = vpop.f32.mrf.mxu0
          %v2158 = vadd.f32 %v1797, %v2157
          %2159 = vmatmul.bf16.gmra.mxu0 %v1716
          %v2160 = vpop.f32.mrf.mxu0
          %v2161 = vadd.f32 %v1801, %v2160
          %v2162 = vpop.f32.mrf.mxu0
          %v2163 = vadd.f32 %v1805, %v2162
          %2164 = vmatmul.bf16.gmra.mxu0 %v1717
          %v2165 = vpop.f32.mrf.mxu0
          %v2166 = vadd.f32 %v1809, %v2165
          %v2167 = vpop.f32.mrf.mxu0
          %v2168 = vadd.f32 %v1813, %v2167
          %2169 = vdwg.mxu0
          %v2170 = vmax.f32 %v1984, 0.0
          %v2171 = vmax.f32 %v2033, 0.0
          %v2172 = vmax.f32 %v2082, 0.0
          %v2173 = vmax.f32 %v2131, 0.0
          %v2174 = vmax.f32 %v1986, 0.0
          %v2175 = vmax.f32 %v2035, 0.0
          %v2176 = vmax.f32 %v2084, 0.0
          %v2177 = vmax.f32 %v2133, 0.0
          %v2178 = vmax.f32 %v1989, 0.0
          %v2179 = vmax.f32 %v2038, 0.0
          %v2180 = vmax.f32 %v2087, 0.0
          %v2181 = vmax.f32 %v2136, 0.0
          %v2182 = vmax.f32 %v1991, 0.0
          %v2183 = vmax.f32 %v2040, 0.0
          %v2184 = vmax.f32 %v2089, 0.0
          %v2185 = vmax.f32 %v2138, 0.0
          %v2186 = vmax.f32 %v1994, 0.0
          %v2187 = vmax.f32 %v2043, 0.0
          %v2188 = vmax.f32 %v2092, 0.0
          %v2189 = vmax.f32 %v2141, 0.0
          %v2190 = vmax.f32 %v1996, 0.0
          %v2191 = vmax.f32 %v2045, 0.0
          %v2192 = vmax.f32 %v2094, 0.0
          %v2193 = vmax.f32 %v2143, 0.0
          %v2194 = vmax.f32 %v1999, 0.0
          %v2195 = vmax.f32 %v2048, 0.0
          %v2196 = vmax.f32 %v2097, 0.0
          %v2197 = vmax.f32 %v2146, 0.0
          %v2198 = vmax.f32 %v2001, 0.0
          %v2199 = vmax.f32 %v2050, 0.0
          %v2200 = vmax.f32 %v2099, 0.0
          %v2201 = vmax.f32 %v2148, 0.0
          %v2202 = vmax.f32 %v2004, 0.0
          %v2203 = vmax.f32 %v2053, 0.0
          %v2204 = vmax.f32 %v2102, 0.0
          %v2205 = vmax.f32 %v2151, 0.0
          %v2206 = vmax.f32 %v2006, 0.0
          %v2207 = vmax.f32 %v2055, 0.0
          %v2208 = vmax.f32 %v2104, 0.0
          %v2209 = vmax.f32 %v2153, 0.0
          %v2210 = vmax.f32 %v2009, 0.0
          %v2211 = vmax.f32 %v2058, 0.0
          %v2212 = vmax.f32 %v2107, 0.0
          %v2213 = vmax.f32 %v2156, 0.0
          %v2214 = vmax.f32 %v2011, 0.0
          %v2215 = vmax.f32 %v2060, 0.0
          %v2216 = vmax.f32 %v2109, 0.0
          %v2217 = vmax.f32 %v2158, 0.0
          %v2218 = vmax.f32 %v2014, 0.0
          %v2219 = vmax.f32 %v2063, 0.0
          %v2220 = vmax.f32 %v2112, 0.0
          %v2221 = vmax.f32 %v2161, 0.0
          %v2222 = vmax.f32 %v2016, 0.0
          %v2223 = vmax.f32 %v2065, 0.0
          %v2224 = vmax.f32 %v2114, 0.0
          %v2225 = vmax.f32 %v2163, 0.0
          %v2226 = vmax.f32 %v2019, 0.0
          %v2227 = vmax.f32 %v2068, 0.0
          %v2228 = vmax.f32 %v2117, 0.0
          %v2229 = vmax.f32 %v2166, 0.0
          %v2230 = vmax.f32 %v2021, 0.0
          %v2231 = vmax.f32 %v2070, 0.0
          %v2232 = vmax.f32 %v2119, 0.0
          %v2233 = vmax.f32 %v2168, 0.0
          %v2234 = vpack.c.bf16 %v2174, %v2170
          %v2235 = vpack.c.bf16 %v2175, %v2171
          %v2236 = vpack.c.bf16 %v2176, %v2172
          %v2237 = vpack.c.bf16 %v2177, %v2173
          %v2238 = vpack.c.bf16 %v2182, %v2178
          %v2239 = vpack.c.bf16 %v2183, %v2179
          %v2240 = vpack.c.bf16 %v2184, %v2180
          %v2241 = vpack.c.bf16 %v2185, %v2181
          %v2242 = vpack.c.bf16 %v2190, %v2186
          %v2243 = vpack.c.bf16 %v2191, %v2187
          %v2244 = vpack.c.bf16 %v2192, %v2188
          %v2245 = vpack.c.bf16 %v2193, %v2189
          %v2246 = vpack.c.bf16 %v2198, %v2194
          %v2247 = vpack.c.bf16 %v2199, %v2195
          %v2248 = vpack.c.bf16 %v2200, %v2196
          %v2249 = vpack.c.bf16 %v2201, %v2197
          %v2250 = vpack.c.bf16 %v2206, %v2202
          %v2251 = vpack.c.bf16 %v2207, %v2203
          %v2252 = vpack.c.bf16 %v2208, %v2204
          %v2253 = vpack.c.bf16 %v2209, %v2205
          %v2254 = vpack.c.bf16 %v2214, %v2210
          %v2255 = vpack.c.bf16 %v2215, %v2211
          %v2256 = vpack.c.bf16 %v2216, %v2212
          %v2257 = vpack.c.bf16 %v2217, %v2213
          %v2258 = vpack.c.bf16 %v2222, %v2218
          %v2259 = vpack.c.bf16 %v2223, %v2219
          %v2260 = vpack.c.bf16 %v2224, %v2220
          %v2261 = vpack.c.bf16 %v2225, %v2221
          %v2262 = vpack.c.bf16 %v2230, %v2226
          %v2263 = vpack.c.bf16 %v2231, %v2227
          %v2264 = vpack.c.bf16 %v2232, %v2228
          %v2265 = vpack.c.bf16 %v2233, %v2229
          %v2266 = vld [vmem:[#allocation11] sm:$0xff]
          %v2267 = vld [vmem:[#allocation11 + $0x8] sm:$0xff]
          %v2268 = vld [vmem:[#allocation11 + $0x10] sm:$0xff]
          %v2269 = vld [vmem:[#allocation11 + $0x18] sm:$0xff]
          %v2270 = vld [vmem:[#allocation11 + $0x20] sm:$0xff]
          %v2271 = vld [vmem:[#allocation11 + $0x28] sm:$0xff]
          %v2272 = vld [vmem:[#allocation11 + $0x30] sm:$0xff]
          %v2273 = vld [vmem:[#allocation11 + $0x38] sm:$0xff]
          %v2274 = vld [vmem:[#allocation11 + $0x40] sm:$0xff]
          %v2275 = vld [vmem:[#allocation11 + $0x48] sm:$0xff]
          %v2276 = vld [vmem:[#allocation11 + $0x50] sm:$0xff]
          %v2277 = vld [vmem:[#allocation11 + $0x58] sm:$0xff]
          %v2278 = vld [vmem:[#allocation11 + $0x60] sm:$0xff]
          %v2279 = vld [vmem:[#allocation11 + $0x68] sm:$0xff]
          %v2280 = vld [vmem:[#allocation11 + $0x70] sm:$0xff]
          %v2281 = vld [vmem:[#allocation11 + $0x78] sm:$0xff]
          %v2282 = vld [vmem:[#allocation11 + $0x80] sm:$0xff]
          %v2283 = vld [vmem:[#allocation11 + $0x88] sm:$0xff]
          %v2284 = vld [vmem:[#allocation11 + $0x90] sm:$0xff]
          %v2285 = vld [vmem:[#allocation11 + $0x98] sm:$0xff]
          %v2286 = vld [vmem:[#allocation11 + $0xa0] sm:$0xff]
          %v2287 = vld [vmem:[#allocation11 + $0xa8] sm:$0xff]
          %v2288 = vld [vmem:[#allocation11 + $0xb0] sm:$0xff]
          %v2289 = vld [vmem:[#allocation11 + $0xb8] sm:$0xff]
          %v2290 = vld [vmem:[#allocation11 + $0xc0] sm:$0xff]
          %v2291 = vld [vmem:[#allocation11 + $0xc8] sm:$0xff]
          %v2292 = vld [vmem:[#allocation11 + $0xd0] sm:$0xff]
          %v2293 = vld [vmem:[#allocation11 + $0xd8] sm:$0xff]
          %v2294 = vld [vmem:[#allocation11 + $0xe0] sm:$0xff]
          %v2295 = vld [vmem:[#allocation11 + $0xe8] sm:$0xff]
          %v2296 = vld [vmem:[#allocation11 + $0xf0] sm:$0xff]
          %v2297 = vld [vmem:[#allocation11 + $0xf8] sm:$0xff]
          %v2298 = vld [vmem:[#allocation11 + $0x100] sm:$0xff]
          %v2299 = vld [vmem:[#allocation11 + $0x108] sm:$0xff]
          %v2300 = vld [vmem:[#allocation11 + $0x110] sm:$0xff]
          %v2301 = vld [vmem:[#allocation11 + $0x118] sm:$0xff]
          %v2302 = vld [vmem:[#allocation11 + $0x120] sm:$0xff]
          %v2303 = vld [vmem:[#allocation11 + $0x128] sm:$0xff]
          %v2304 = vld [vmem:[#allocation11 + $0x130] sm:$0xff]
          %v2305 = vld [vmem:[#allocation11 + $0x138] sm:$0xff]
          %v2306 = vld [vmem:[#allocation11 + $0x140] sm:$0xff]
          %v2307 = vld [vmem:[#allocation11 + $0x148] sm:$0xff]
          %v2308 = vld [vmem:[#allocation11 + $0x150] sm:$0xff]
          %v2309 = vld [vmem:[#allocation11 + $0x158] sm:$0xff]
          %v2310 = vld [vmem:[#allocation11 + $0x160] sm:$0xff]
          %v2311 = vld [vmem:[#allocation11 + $0x168] sm:$0xff]
          %v2312 = vld [vmem:[#allocation11 + $0x170] sm:$0xff]
          %v2313 = vld [vmem:[#allocation11 + $0x178] sm:$0xff]
          %v2314 = vld [vmem:[#allocation11 + $0x180] sm:$0xff]
          %v2315 = vld [vmem:[#allocation11 + $0x188] sm:$0xff]
          %v2316 = vld [vmem:[#allocation11 + $0x190] sm:$0xff]
          %v2317 = vld [vmem:[#allocation11 + $0x198] sm:$0xff]
          %v2318 = vld [vmem:[#allocation11 + $0x1a0] sm:$0xff]
          %v2319 = vld [vmem:[#allocation11 + $0x1a8] sm:$0xff]
          %v2320 = vld [vmem:[#allocation11 + $0x1b0] sm:$0xff]
          %v2321 = vld [vmem:[#allocation11 + $0x1b8] sm:$0xff]
          %v2322 = vld [vmem:[#allocation11 + $0x1c0] sm:$0xff]
          %v2323 = vld [vmem:[#allocation11 + $0x1c8] sm:$0xff]
          %v2324 = vld [vmem:[#allocation11 + $0x1d0] sm:$0xff]
          %v2325 = vld [vmem:[#allocation11 + $0x1d8] sm:$0xff]
          %v2326 = vld [vmem:[#allocation11 + $0x1e0] sm:$0xff]
          %v2327 = vld [vmem:[#allocation11 + $0x1e8] sm:$0xff]
          %v2328 = vld [vmem:[#allocation11 + $0x1f0] sm:$0xff]
          %v2329 = vld [vmem:[#allocation11 + $0x1f8] sm:$0xff]
          %v2330 = vld [vmem:[%s6] sm:$0x3]
          %v2332 = vperm.slane %v2330, 0
          %v2333 = vperm.slane %v2330, 1
          %v2400 = vunpack.c.l.b16 %v2266
          %v2401 = vunpack.c.h.b16 %v2266
          %v2402 = vunpack.c.l.b16 %v2267
          %v2403 = vunpack.c.h.b16 %v2267
          %v2404 = vunpack.c.l.b16 %v2268
          %v2405 = vunpack.c.h.b16 %v2268
          %v2406 = vunpack.c.l.b16 %v2269
          %v2407 = vunpack.c.h.b16 %v2269
          %v2408 = vunpack.c.l.b16 %v2270
          %v2409 = vunpack.c.h.b16 %v2270
          %v2410 = vunpack.c.l.b16 %v2271
          %v2411 = vunpack.c.h.b16 %v2271
          %v2412 = vunpack.c.l.b16 %v2272
          %v2413 = vunpack.c.h.b16 %v2272
          %v2414 = vunpack.c.l.b16 %v2273
          %v2415 = vunpack.c.h.b16 %v2273
          %v2416 = vunpack.c.l.b16 %v2274
          %v2417 = vunpack.c.h.b16 %v2274
          %v2418 = vunpack.c.l.b16 %v2275
          %v2419 = vunpack.c.h.b16 %v2275
          %v2420 = vunpack.c.l.b16 %v2276
          %v2421 = vunpack.c.h.b16 %v2276
          %v2422 = vunpack.c.l.b16 %v2277
          %v2423 = vunpack.c.h.b16 %v2277
          %v2424 = vunpack.c.l.b16 %v2278
          %v2425 = vunpack.c.h.b16 %v2278
          %v2426 = vunpack.c.l.b16 %v2279
          %v2427 = vunpack.c.h.b16 %v2279
          %v2428 = vunpack.c.l.b16 %v2280
          %v2429 = vunpack.c.h.b16 %v2280
          %v2430 = vunpack.c.l.b16 %v2281
          %v2431 = vunpack.c.h.b16 %v2281
          %v2432 = vunpack.c.l.b16 %v2282
          %v2433 = vunpack.c.h.b16 %v2282
          %v2434 = vunpack.c.l.b16 %v2283
          %v2435 = vunpack.c.h.b16 %v2283
          %v2436 = vunpack.c.l.b16 %v2284
          %v2437 = vunpack.c.h.b16 %v2284
          %v2438 = vunpack.c.l.b16 %v2285
          %v2439 = vunpack.c.h.b16 %v2285
          %v2440 = vunpack.c.l.b16 %v2286
          %v2441 = vunpack.c.h.b16 %v2286
          %v2442 = vunpack.c.l.b16 %v2287
          %v2443 = vunpack.c.h.b16 %v2287
          %v2444 = vunpack.c.l.b16 %v2288
          %v2445 = vunpack.c.h.b16 %v2288
          %v2446 = vunpack.c.l.b16 %v2289
          %v2447 = vunpack.c.h.b16 %v2289
          %v2448 = vunpack.c.l.b16 %v2290
          %v2449 = vunpack.c.h.b16 %v2290
          %v2450 = vunpack.c.l.b16 %v2291
          %v2451 = vunpack.c.h.b16 %v2291
          %v2452 = vunpack.c.l.b16 %v2292
          %v2453 = vunpack.c.h.b16 %v2292
          %v2454 = vunpack.c.l.b16 %v2293
          %v2455 = vunpack.c.h.b16 %v2293
          %v2456 = vunpack.c.l.b16 %v2294
          %v2457 = vunpack.c.h.b16 %v2294
          %v2458 = vunpack.c.l.b16 %v2295
          %v2459 = vunpack.c.h.b16 %v2295
          %v2460 = vunpack.c.l.b16 %v2296
          %v2461 = vunpack.c.h.b16 %v2296
          %v2462 = vunpack.c.l.b16 %v2297
          %v2463 = vunpack.c.h.b16 %v2297
          %v2464 = vunpack.c.l.b16 %v2298
          %v2465 = vunpack.c.h.b16 %v2298
          %v2466 = vunpack.c.l.b16 %v2299
          %v2467 = vunpack.c.h.b16 %v2299
          %v2468 = vunpack.c.l.b16 %v2300
          %v2469 = vunpack.c.h.b16 %v2300
          %v2470 = vunpack.c.l.b16 %v2301
          %v2471 = vunpack.c.h.b16 %v2301
          %v2472 = vunpack.c.l.b16 %v2302
          %v2473 = vunpack.c.h.b16 %v2302
          %v2474 = vunpack.c.l.b16 %v2303
          %v2475 = vunpack.c.h.b16 %v2303
          %v2476 = vunpack.c.l.b16 %v2304
          %v2477 = vunpack.c.h.b16 %v2304
          %v2478 = vunpack.c.l.b16 %v2305
          %v2479 = vunpack.c.h.b16 %v2305
          %v2480 = vunpack.c.l.b16 %v2306
          %v2481 = vunpack.c.h.b16 %v2306
          %v2482 = vunpack.c.l.b16 %v2307
          %v2483 = vunpack.c.h.b16 %v2307
          %v2484 = vunpack.c.l.b16 %v2308
          %v2485 = vunpack.c.h.b16 %v2308
          %v2486 = vunpack.c.l.b16 %v2309
          %v2487 = vunpack.c.h.b16 %v2309
          %v2488 = vunpack.c.l.b16 %v2310
          %v2489 = vunpack.c.h.b16 %v2310
          %v2490 = vunpack.c.l.b16 %v2311
          %v2491 = vunpack.c.h.b16 %v2311
          %v2492 = vunpack.c.l.b16 %v2312
          %v2493 = vunpack.c.h.b16 %v2312
          %v2494 = vunpack.c.l.b16 %v2313
          %v2495 = vunpack.c.h.b16 %v2313
          %v2496 = vunpack.c.l.b16 %v2314
          %v2497 = vunpack.c.h.b16 %v2314
          %v2498 = vunpack.c.l.b16 %v2315
          %v2499 = vunpack.c.h.b16 %v2315
          %v2500 = vunpack.c.l.b16 %v2316
          %v2501 = vunpack.c.h.b16 %v2316
          %v2502 = vunpack.c.l.b16 %v2317
          %v2503 = vunpack.c.h.b16 %v2317
          %v2504 = vunpack.c.l.b16 %v2318
          %v2505 = vunpack.c.h.b16 %v2318
          %v2506 = vunpack.c.l.b16 %v2319
          %v2507 = vunpack.c.h.b16 %v2319
          %v2508 = vunpack.c.l.b16 %v2320
          %v2509 = vunpack.c.h.b16 %v2320
          %v2510 = vunpack.c.l.b16 %v2321
          %v2511 = vunpack.c.h.b16 %v2321
          %v2512 = vunpack.c.l.b16 %v2322
          %v2513 = vunpack.c.h.b16 %v2322
          %v2514 = vunpack.c.l.b16 %v2323
          %v2515 = vunpack.c.h.b16 %v2323
          %v2516 = vunpack.c.l.b16 %v2324
          %v2517 = vunpack.c.h.b16 %v2324
          %v2518 = vunpack.c.l.b16 %v2325
          %v2519 = vunpack.c.h.b16 %v2325
          %v2520 = vunpack.c.l.b16 %v2326
          %v2521 = vunpack.c.h.b16 %v2326
          %v2522 = vunpack.c.l.b16 %v2327
          %v2523 = vunpack.c.h.b16 %v2327
          %v2524 = vunpack.c.l.b16 %v2328
          %v2525 = vunpack.c.h.b16 %v2328
          %v2526 = vunpack.c.l.b16 %v2329
          %v2527 = vunpack.c.h.b16 %v2329
          %v2528 = vpack.c.b16 %v2402, %v2400
          %v2529 = vpack.c.b16 %v2403, %v2401
          %v2530 = vpack.c.b16 %v2406, %v2404
          %v2531 = vpack.c.b16 %v2407, %v2405
          %v2532 = vpack.c.b16 %v2410, %v2408
          %v2533 = vpack.c.b16 %v2411, %v2409
          %v2534 = vpack.c.b16 %v2414, %v2412
          %v2535 = vpack.c.b16 %v2415, %v2413
          %v2536 = vpack.c.b16 %v2418, %v2416
          %v2537 = vpack.c.b16 %v2419, %v2417
          %v2538 = vpack.c.b16 %v2422, %v2420
          %v2539 = vpack.c.b16 %v2423, %v2421
          %v2540 = vpack.c.b16 %v2426, %v2424
          %v2541 = vpack.c.b16 %v2427, %v2425
          %v2542 = vpack.c.b16 %v2430, %v2428
          %v2543 = vpack.c.b16 %v2431, %v2429
          %v2544 = vpack.c.b16 %v2434, %v2432
          %v2545 = vpack.c.b16 %v2435, %v2433
          %v2546 = vpack.c.b16 %v2438, %v2436
          %v2547 = vpack.c.b16 %v2439, %v2437
          %v2548 = vpack.c.b16 %v2442, %v2440
          %v2549 = vpack.c.b16 %v2443, %v2441
          %v2550 = vpack.c.b16 %v2446, %v2444
          %v2551 = vpack.c.b16 %v2447, %v2445
          %v2552 = vpack.c.b16 %v2450, %v2448
          %v2553 = vpack.c.b16 %v2451, %v2449
          %v2554 = vpack.c.b16 %v2454, %v2452
          %v2555 = vpack.c.b16 %v2455, %v2453
          %v2556 = vpack.c.b16 %v2458, %v2456
          %v2557 = vpack.c.b16 %v2459, %v2457
          %v2558 = vpack.c.b16 %v2462, %v2460
          %v2559 = vpack.c.b16 %v2463, %v2461
          %v2560 = vpack.c.b16 %v2466, %v2464
          %v2561 = vpack.c.b16 %v2467, %v2465
          %v2562 = vpack.c.b16 %v2470, %v2468
          %v2563 = vpack.c.b16 %v2471, %v2469
          %v2564 = vpack.c.b16 %v2474, %v2472
          %v2565 = vpack.c.b16 %v2475, %v2473
          %v2566 = vpack.c.b16 %v2478, %v2476
          %v2567 = vpack.c.b16 %v2479, %v2477
          %v2568 = vpack.c.b16 %v2482, %v2480
          %v2569 = vpack.c.b16 %v2483, %v2481
          %v2570 = vpack.c.b16 %v2486, %v2484
          %v2571 = vpack.c.b16 %v2487, %v2485
          %v2572 = vpack.c.b16 %v2490, %v2488
          %v2573 = vpack.c.b16 %v2491, %v2489
          %v2574 = vpack.c.b16 %v2494, %v2492
          %v2575 = vpack.c.b16 %v2495, %v2493
          %v2576 = vpack.c.b16 %v2498, %v2496
          %v2577 = vpack.c.b16 %v2499, %v2497
          %v2578 = vpack.c.b16 %v2502, %v2500
          %v2579 = vpack.c.b16 %v2503, %v2501
          %v2580 = vpack.c.b16 %v2506, %v2504
          %v2581 = vpack.c.b16 %v2507, %v2505
          %v2582 = vpack.c.b16 %v2510, %v2508
          %v2583 = vpack.c.b16 %v2511, %v2509
          %v2584 = vpack.c.b16 %v2514, %v2512
          %v2585 = vpack.c.b16 %v2515, %v2513
          %v2586 = vpack.c.b16 %v2518, %v2516
          %v2587 = vpack.c.b16 %v2519, %v2517
          %v2588 = vpack.c.b16 %v2522, %v2520
          %v2589 = vpack.c.b16 %v2523, %v2521
          %v2590 = vpack.c.b16 %v2526, %v2524
          %v2591 = vpack.c.b16 %v2527, %v2525
          %2656 = vmatpush.bf16.msra.mxu0 %v2542
          %2657 = vmatpush.bf16.msra.mxu0 %v2540
          %2658 = vmatpush.bf16.msra.mxu0 %v2538
          %2659 = vmatpush.bf16.msra.mxu0 %v2536
          %2660 = vmatpush.bf16.msra.mxu0 %v2534
          %2661 = vmatpush.bf16.msra.mxu0 %v2532
          %2662 = vmatpush.bf16.msra.mxu0 %v2530
          %2663 = vmatpush.bf16.msra.mxu0 %v2528
          %2664 = vmatmul.bf16.gmra.mxu0 %v2234
          %v2665 = vpop.f32.mrf.mxu0
          %v2666 = vadd.f32 %v2332, %v2665
          %v2667 = vpop.f32.mrf.mxu0
          %v2668 = vadd.f32 %v2332, %v2667
          %2669 = vmatmul.bf16.gmra.mxu0 %v2238
          %v2670 = vpop.f32.mrf.mxu0
          %v2671 = vadd.f32 %v2332, %v2670
          %v2672 = vpop.f32.mrf.mxu0
          %v2673 = vadd.f32 %v2332, %v2672
          %2674 = vmatmul.bf16.gmra.mxu0 %v2242
          %v2675 = vpop.f32.mrf.mxu0
          %v2676 = vadd.f32 %v2332, %v2675
          %v2677 = vpop.f32.mrf.mxu0
          %v2678 = vadd.f32 %v2332, %v2677
          %2679 = vmatmul.bf16.gmra.mxu0 %v2246
          %v2680 = vpop.f32.mrf.mxu0
          %v2681 = vadd.f32 %v2332, %v2680
          %v2682 = vpop.f32.mrf.mxu0
          %v2683 = vadd.f32 %v2332, %v2682
          %2684 = vmatmul.bf16.gmra.mxu0 %v2250
          %v2685 = vpop.f32.mrf.mxu0
          %v2686 = vadd.f32 %v2332, %v2685
          %v2687 = vpop.f32.mrf.mxu0
          %v2688 = vadd.f32 %v2332, %v2687
          %2689 = vmatmul.bf16.gmra.mxu0 %v2254
          %v2690 = vpop.f32.mrf.mxu0
          %v2691 = vadd.f32 %v2332, %v2690
          %v2692 = vpop.f32.mrf.mxu0
          %v2693 = vadd.f32 %v2332, %v2692
          %2694 = vmatmul.bf16.gmra.mxu0 %v2258
          %v2695 = vpop.f32.mrf.mxu0
          %v2696 = vadd.f32 %v2332, %v2695
          %v2697 = vpop.f32.mrf.mxu0
          %v2698 = vadd.f32 %v2332, %v2697
          %2699 = vmatmul.bf16.gmra.mxu0 %v2262
          %v2700 = vpop.f32.mrf.mxu0
          %v2701 = vadd.f32 %v2332, %v2700
          %v2702 = vpop.f32.mrf.mxu0
          %v2703 = vadd.f32 %v2332, %v2702
          %2704 = vdwg.mxu0
          %2705 = vmatpush.bf16.msra.mxu0 %v2558
          %2706 = vmatpush.bf16.msra.mxu0 %v2556
          %2707 = vmatpush.bf16.msra.mxu0 %v2554
          %2708 = vmatpush.bf16.msra.mxu0 %v2552
          %2709 = vmatpush.bf16.msra.mxu0 %v2550
          %2710 = vmatpush.bf16.msra.mxu0 %v2548
          %2711 = vmatpush.bf16.msra.mxu0 %v2546
          %2712 = vmatpush.bf16.msra.mxu0 %v2544
          %2713 = vmatmul.bf16.gmra.mxu0 %v2235
          %v2714 = vpop.f32.mrf.mxu0
          %v2715 = vadd.f32 %v2666, %v2714
          %v2716 = vpop.f32.mrf.mxu0
          %v2717 = vadd.f32 %v2668, %v2716
          %2718 = vmatmul.bf16.gmra.mxu0 %v2239
          %v2719 = vpop.f32.mrf.mxu0
          %v2720 = vadd.f32 %v2671, %v2719
          %v2721 = vpop.f32.mrf.mxu0
          %v2722 = vadd.f32 %v2673, %v2721
          %2723 = vmatmul.bf16.gmra.mxu0 %v2243
          %v2724 = vpop.f32.mrf.mxu0
          %v2725 = vadd.f32 %v2676, %v2724
          %v2726 = vpop.f32.mrf.mxu0
          %v2727 = vadd.f32 %v2678, %v2726
          %2728 = vmatmul.bf16.gmra.mxu0 %v2247
          %v2729 = vpop.f32.mrf.mxu0
          %v2730 = vadd.f32 %v2681, %v2729
          %v2731 = vpop.f32.mrf.mxu0
          %v2732 = vadd.f32 %v2683, %v2731
          %2733 = vmatmul.bf16.gmra.mxu0 %v2251
          %v2734 = vpop.f32.mrf.mxu0
          %v2735 = vadd.f32 %v2686, %v2734
          %v2736 = vpop.f32.mrf.mxu0
          %v2737 = vadd.f32 %v2688, %v2736
          %2738 = vmatmul.bf16.gmra.mxu0 %v2255
          %v2739 = vpop.f32.mrf.mxu0
          %v2740 = vadd.f32 %v2691, %v2739
          %v2741 = vpop.f32.mrf.mxu0
          %v2742 = vadd.f32 %v2693, %v2741
          %2743 = vmatmul.bf16.gmra.mxu0 %v2259
          %v2744 = vpop.f32.mrf.mxu0
          %v2745 = vadd.f32 %v2696, %v2744
          %v2746 = vpop.f32.mrf.mxu0
          %v2747 = vadd.f32 %v2698, %v2746
          %2748 = vmatmul.bf16.gmra.mxu0 %v2263
          %v2749 = vpop.f32.mrf.mxu0
          %v2750 = vadd.f32 %v2701, %v2749
          %v2751 = vpop.f32.mrf.mxu0
          %v2752 = vadd.f32 %v2703, %v2751
          %2753 = vdwg.mxu0
          %2754 = vmatpush.bf16.msra.mxu0 %v2574
          %2755 = vmatpush.bf16.msra.mxu0 %v2572
          %2756 = vmatpush.bf16.msra.mxu0 %v2570
          %2757 = vmatpush.bf16.msra.mxu0 %v2568
          %2758 = vmatpush.bf16.msra.mxu0 %v2566
          %2759 = vmatpush.bf16.msra.mxu0 %v2564
          %2760 = vmatpush.bf16.msra.mxu0 %v2562
          %2761 = vmatpush.bf16.msra.mxu0 %v2560
          %2762 = vmatmul.bf16.gmra.mxu0 %v2236
          %v2763 = vpop.f32.mrf.mxu0
          %v2764 = vadd.f32 %v2715, %v2763
          %v2765 = vpop.f32.mrf.mxu0
          %v2766 = vadd.f32 %v2717, %v2765
          %2767 = vmatmul.bf16.gmra.mxu0 %v2240
          %v2768 = vpop.f32.mrf.mxu0
          %v2769 = vadd.f32 %v2720, %v2768
          %v2770 = vpop.f32.mrf.mxu0
          %v2771 = vadd.f32 %v2722, %v2770
          %2772 = vmatmul.bf16.gmra.mxu0 %v2244
          %v2773 = vpop.f32.mrf.mxu0
          %v2774 = vadd.f32 %v2725, %v2773
          %v2775 = vpop.f32.mrf.mxu0
          %v2776 = vadd.f32 %v2727, %v2775
          %2777 = vmatmul.bf16.gmra.mxu0 %v2248
          %v2778 = vpop.f32.mrf.mxu0
          %v2779 = vadd.f32 %v2730, %v2778
          %v2780 = vpop.f32.mrf.mxu0
          %v2781 = vadd.f32 %v2732, %v2780
          %2782 = vmatmul.bf16.gmra.mxu0 %v2252
          %v2783 = vpop.f32.mrf.mxu0
          %v2784 = vadd.f32 %v2735, %v2783
          %v2785 = vpop.f32.mrf.mxu0
          %v2786 = vadd.f32 %v2737, %v2785
          %2787 = vmatmul.bf16.gmra.mxu0 %v2256
          %v2788 = vpop.f32.mrf.mxu0
          %v2789 = vadd.f32 %v2740, %v2788
          %v2790 = vpop.f32.mrf.mxu0
          %v2791 = vadd.f32 %v2742, %v2790
          %2792 = vmatmul.bf16.gmra.mxu0 %v2260
          %v2793 = vpop.f32.mrf.mxu0
          %v2794 = vadd.f32 %v2745, %v2793
          %v2795 = vpop.f32.mrf.mxu0
          %v2796 = vadd.f32 %v2747, %v2795
          %2797 = vmatmul.bf16.gmra.mxu0 %v2264
          %v2798 = vpop.f32.mrf.mxu0
          %v2799 = vadd.f32 %v2750, %v2798
          %v2800 = vpop.f32.mrf.mxu0
          %v2801 = vadd.f32 %v2752, %v2800
          %2802 = vdwg.mxu0
          %2803 = vmatpush.bf16.msra.mxu0 %v2590
          %2804 = vmatpush.bf16.msra.mxu0 %v2588
          %2805 = vmatpush.bf16.msra.mxu0 %v2586
          %2806 = vmatpush.bf16.msra.mxu0 %v2584
          %2807 = vmatpush.bf16.msra.mxu0 %v2582
          %2808 = vmatpush.bf16.msra.mxu0 %v2580
          %2809 = vmatpush.bf16.msra.mxu0 %v2578
          %2810 = vmatpush.bf16.msra.mxu0 %v2576
          %2811 = vmatmul.bf16.gmra.mxu0 %v2237
          %v2812 = vpop.f32.mrf.mxu0
          %v2813 = vadd.f32 %v2764, %v2812
          %v2814 = vpop.f32.mrf.mxu0
          %v2815 = vadd.f32 %v2766, %v2814
          %2816 = vmatmul.bf16.gmra.mxu0 %v2241
          %v2817 = vpop.f32.mrf.mxu0
          %v2818 = vadd.f32 %v2769, %v2817
          %v2819 = vpop.f32.mrf.mxu0
          %v2820 = vadd.f32 %v2771, %v2819
          %2821 = vmatmul.bf16.gmra.mxu0 %v2245
          %v2822 = vpop.f32.mrf.mxu0
          %v2823 = vadd.f32 %v2774, %v2822
          %v2824 = vpop.f32.mrf.mxu0
          %v2825 = vadd.f32 %v2776, %v2824
          %2826 = vmatmul.bf16.gmra.mxu0 %v2249
          %v2827 = vpop.f32.mrf.mxu0
          %v2828 = vadd.f32 %v2779, %v2827
          %v2829 = vpop.f32.mrf.mxu0
          %v2830 = vadd.f32 %v2781, %v2829
          %2831 = vmatmul.bf16.gmra.mxu0 %v2253
          %v2832 = vpop.f32.mrf.mxu0
          %v2833 = vadd.f32 %v2784, %v2832
          %v2834 = vpop.f32.mrf.mxu0
          %v2835 = vadd.f32 %v2786, %v2834
          %2836 = vmatmul.bf16.gmra.mxu0 %v2257
          %v2837 = vpop.f32.mrf.mxu0
          %v2838 = vadd.f32 %v2789, %v2837
          %v2839 = vpop.f32.mrf.mxu0
          %v2840 = vadd.f32 %v2791, %v2839
          %2841 = vmatmul.bf16.gmra.mxu0 %v2261
          %v2842 = vpop.f32.mrf.mxu0
          %v2843 = vadd.f32 %v2794, %v2842
          %v2844 = vpop.f32.mrf.mxu0
          %v2845 = vadd.f32 %v2796, %v2844
          %2846 = vmatmul.bf16.gmra.mxu0 %v2265
          %v2847 = vpop.f32.mrf.mxu0
          %v2848 = vadd.f32 %v2799, %v2847
          %v2849 = vpop.f32.mrf.mxu0
          %v2850 = vadd.f32 %v2801, %v2849
          %2851 = vdwg.mxu0
          %2852 = vmatpush.bf16.msra.mxu0 %v2543
          %2853 = vmatpush.bf16.msra.mxu0 %v2541
          %2854 = vmatpush.bf16.msra.mxu0 %v2539
          %2855 = vmatpush.bf16.msra.mxu0 %v2537
          %2856 = vmatpush.bf16.msra.mxu0 %v2535
          %2857 = vmatpush.bf16.msra.mxu0 %v2533
          %2858 = vmatpush.bf16.msra.mxu0 %v2531
          %2859 = vmatpush.bf16.msra.mxu0 %v2529
          %2860 = vmatmul.bf16.gmra.mxu0 %v2234
          %v2861 = vpop.f32.mrf.mxu0
          %v2862 = vadd.f32 %v2333, %v2861
          %v2863 = vpop.f32.mrf.mxu0
          %v2864 = vadd.f32 %v2333, %v2863
          %2865 = vmatmul.bf16.gmra.mxu0 %v2238
          %v2866 = vpop.f32.mrf.mxu0
          %v2867 = vadd.f32 %v2333, %v2866
          %v2868 = vpop.f32.mrf.mxu0
          %v2869 = vadd.f32 %v2333, %v2868
          %2870 = vmatmul.bf16.gmra.mxu0 %v2242
          %v2871 = vpop.f32.mrf.mxu0
          %v2872 = vadd.f32 %v2333, %v2871
          %v2873 = vpop.f32.mrf.mxu0
          %v2874 = vadd.f32 %v2333, %v2873
          %2875 = vmatmul.bf16.gmra.mxu0 %v2246
          %v2876 = vpop.f32.mrf.mxu0
          %v2877 = vadd.f32 %v2333, %v2876
          %v2878 = vpop.f32.mrf.mxu0
          %v2879 = vadd.f32 %v2333, %v2878
          %2880 = vmatmul.bf16.gmra.mxu0 %v2250
          %v2881 = vpop.f32.mrf.mxu0
          %v2882 = vadd.f32 %v2333, %v2881
          %v2883 = vpop.f32.mrf.mxu0
          %v2884 = vadd.f32 %v2333, %v2883
          %2885 = vmatmul.bf16.gmra.mxu0 %v2254
          %v2886 = vpop.f32.mrf.mxu0
          %v2887 = vadd.f32 %v2333, %v2886
          %v2888 = vpop.f32.mrf.mxu0
          %v2889 = vadd.f32 %v2333, %v2888
          %2890 = vmatmul.bf16.gmra.mxu0 %v2258
          %v2891 = vpop.f32.mrf.mxu0
          %v2892 = vadd.f32 %v2333, %v2891
          %v2893 = vpop.f32.mrf.mxu0
          %v2894 = vadd.f32 %v2333, %v2893
          %2895 = vmatmul.bf16.gmra.mxu0 %v2262
          %v2896 = vpop.f32.mrf.mxu0
          %v2897 = vadd.f32 %v2333, %v2896
          %v2898 = vpop.f32.mrf.mxu0
          %v2899 = vadd.f32 %v2333, %v2898
          %2900 = vdwg.mxu0
          %2901 = vmatpush.bf16.msra.mxu0 %v2559
          %2902 = vmatpush.bf16.msra.mxu0 %v2557
          %2903 = vmatpush.bf16.msra.mxu0 %v2555
          %2904 = vmatpush.bf16.msra.mxu0 %v2553
          %2905 = vmatpush.bf16.msra.mxu0 %v2551
          %2906 = vmatpush.bf16.msra.mxu0 %v2549
          %2907 = vmatpush.bf16.msra.mxu0 %v2547
          %2908 = vmatpush.bf16.msra.mxu0 %v2545
          %2909 = vmatmul.bf16.gmra.mxu0 %v2235
          %v2910 = vpop.f32.mrf.mxu0
          %v2911 = vadd.f32 %v2862, %v2910
          %v2912 = vpop.f32.mrf.mxu0
          %v2913 = vadd.f32 %v2864, %v2912
          %2914 = vmatmul.bf16.gmra.mxu0 %v2239
          %v2915 = vpop.f32.mrf.mxu0
          %v2916 = vadd.f32 %v2867, %v2915
          %v2917 = vpop.f32.mrf.mxu0
          %v2918 = vadd.f32 %v2869, %v2917
          %2919 = vmatmul.bf16.gmra.mxu0 %v2243
          %v2920 = vpop.f32.mrf.mxu0
          %v2921 = vadd.f32 %v2872, %v2920
          %v2922 = vpop.f32.mrf.mxu0
          %v2923 = vadd.f32 %v2874, %v2922
          %2924 = vmatmul.bf16.gmra.mxu0 %v2247
          %v2925 = vpop.f32.mrf.mxu0
          %v2926 = vadd.f32 %v2877, %v2925
          %v2927 = vpop.f32.mrf.mxu0
          %v2928 = vadd.f32 %v2879, %v2927
          %2929 = vmatmul.bf16.gmra.mxu0 %v2251
          %v2930 = vpop.f32.mrf.mxu0
          %v2931 = vadd.f32 %v2882, %v2930
          %v2932 = vpop.f32.mrf.mxu0
          %v2933 = vadd.f32 %v2884, %v2932
          %2934 = vmatmul.bf16.gmra.mxu0 %v2255
          %v2935 = vpop.f32.mrf.mxu0
          %v2936 = vadd.f32 %v2887, %v2935
          %v2937 = vpop.f32.mrf.mxu0
          %v2938 = vadd.f32 %v2889, %v2937
          %2939 = vmatmul.bf16.gmra.mxu0 %v2259
          %v2940 = vpop.f32.mrf.mxu0
          %v2941 = vadd.f32 %v2892, %v2940
          %v2942 = vpop.f32.mrf.mxu0
          %v2943 = vadd.f32 %v2894, %v2942
          %2944 = vmatmul.bf16.gmra.mxu0 %v2263
          %v2945 = vpop.f32.mrf.mxu0
          %v2946 = vadd.f32 %v2897, %v2945
          %v2947 = vpop.f32.mrf.mxu0
          %v2948 = vadd.f32 %v2899, %v2947
          %2949 = vdwg.mxu0
          %2950 = vmatpush.bf16.msra.mxu0 %v2575
          %2951 = vmatpush.bf16.msra.mxu0 %v2573
          %2952 = vmatpush.bf16.msra.mxu0 %v2571
          %2953 = vmatpush.bf16.msra.mxu0 %v2569
          %2954 = vmatpush.bf16.msra.mxu0 %v2567
          %2955 = vmatpush.bf16.msra.mxu0 %v2565
          %2956 = vmatpush.bf16.msra.mxu0 %v2563
          %2957 = vmatpush.bf16.msra.mxu0 %v2561
          %2958 = vmatmul.bf16.gmra.mxu0 %v2236
          %v2959 = vpop.f32.mrf.mxu0
          %v2960 = vadd.f32 %v2911, %v2959
          %v2961 = vpop.f32.mrf.mxu0
          %v2962 = vadd.f32 %v2913, %v2961
          %2963 = vmatmul.bf16.gmra.mxu0 %v2240
          %v2964 = vpop.f32.mrf.mxu0
          %v2965 = vadd.f32 %v2916, %v2964
          %v2966 = vpop.f32.mrf.mxu0
          %v2967 = vadd.f32 %v2918, %v2966
          %2968 = vmatmul.bf16.gmra.mxu0 %v2244
          %v2969 = vpop.f32.mrf.mxu0
          %v2970 = vadd.f32 %v2921, %v2969
          %v2971 = vpop.f32.mrf.mxu0
          %v2972 = vadd.f32 %v2923, %v2971
          %2973 = vmatmul.bf16.gmra.mxu0 %v2248
          %v2974 = vpop.f32.mrf.mxu0
          %v2975 = vadd.f32 %v2926, %v2974
          %v2976 = vpop.f32.mrf.mxu0
          %v2977 = vadd.f32 %v2928, %v2976
          %2978 = vmatmul.bf16.gmra.mxu0 %v2252
          %v2979 = vpop.f32.mrf.mxu0
          %v2980 = vadd.f32 %v2931, %v2979
          %v2981 = vpop.f32.mrf.mxu0
          %v2982 = vadd.f32 %v2933, %v2981
          %2983 = vmatmul.bf16.gmra.mxu0 %v2256
          %v2984 = vpop.f32.mrf.mxu0
          %v2985 = vadd.f32 %v2936, %v2984
          %v2986 = vpop.f32.mrf.mxu0
          %v2987 = vadd.f32 %v2938, %v2986
          %2988 = vmatmul.bf16.gmra.mxu0 %v2260
          %v2989 = vpop.f32.mrf.mxu0
          %v2990 = vadd.f32 %v2941, %v2989
          %v2991 = vpop.f32.mrf.mxu0
          %v2992 = vadd.f32 %v2943, %v2991
          %2993 = vmatmul.bf16.gmra.mxu0 %v2264
          %v2994 = vpop.f32.mrf.mxu0
          %v2995 = vadd.f32 %v2946, %v2994
          %v2996 = vpop.f32.mrf.mxu0
          %v2997 = vadd.f32 %v2948, %v2996
          %2998 = vdwg.mxu0
          %2999 = vmatpush.bf16.msra.mxu0 %v2591
          %3000 = vmatpush.bf16.msra.mxu0 %v2589
          %3001 = vmatpush.bf16.msra.mxu0 %v2587
          %3002 = vmatpush.bf16.msra.mxu0 %v2585
          %3003 = vmatpush.bf16.msra.mxu0 %v2583
          %3004 = vmatpush.bf16.msra.mxu0 %v2581
          %3005 = vmatpush.bf16.msra.mxu0 %v2579
          %3006 = vmatpush.bf16.msra.mxu0 %v2577
          %3007 = vmatmul.bf16.gmra.mxu0 %v2237
          %v3008 = vpop.f32.mrf.mxu0
          %v3009 = vadd.f32 %v2960, %v3008
          %v3010 = vpop.f32.mrf.mxu0
          %v3011 = vadd.f32 %v2962, %v3010
          %3012 = vmatmul.bf16.gmra.mxu0 %v2241
          %v3013 = vpop.f32.mrf.mxu0
          %v3014 = vadd.f32 %v2965, %v3013
          %v3015 = vpop.f32.mrf.mxu0
          %v3016 = vadd.f32 %v2967, %v3015
          %3017 = vmatmul.bf16.gmra.mxu0 %v2245
          %v3018 = vpop.f32.mrf.mxu0
          %v3019 = vadd.f32 %v2970, %v3018
          %v3020 = vpop.f32.mrf.mxu0
          %v3021 = vadd.f32 %v2972, %v3020
          %3022 = vmatmul.bf16.gmra.mxu0 %v2249
          %v3023 = vpop.f32.mrf.mxu0
          %v3024 = vadd.f32 %v2975, %v3023
          %v3025 = vpop.f32.mrf.mxu0
          %v3026 = vadd.f32 %v2977, %v3025
          %3027 = vmatmul.bf16.gmra.mxu0 %v2253
          %v3028 = vpop.f32.mrf.mxu0
          %v3029 = vadd.f32 %v2980, %v3028
          %v3030 = vpop.f32.mrf.mxu0
          %v3031 = vadd.f32 %v2982, %v3030
          %3032 = vmatmul.bf16.gmra.mxu0 %v2257
          %v3033 = vpop.f32.mrf.mxu0
          %v3034 = vadd.f32 %v2985, %v3033
          %v3035 = vpop.f32.mrf.mxu0
          %v3036 = vadd.f32 %v2987, %v3035
          %3037 = vmatmul.bf16.gmra.mxu0 %v2261
          %v3038 = vpop.f32.mrf.mxu0
          %v3039 = vadd.f32 %v2990, %v3038
          %v3040 = vpop.f32.mrf.mxu0
          %v3041 = vadd.f32 %v2992, %v3040
          %3042 = vmatmul.bf16.gmra.mxu0 %v2265
          %v3043 = vpop.f32.mrf.mxu0
          %v3044 = vadd.f32 %v2995, %v3043
          %v3045 = vpop.f32.mrf.mxu0
          %v3046 = vadd.f32 %v2997, %v3045
          %3047 = vdwg.mxu0
          %v3048 = vmax.f32 %v2813, 0.0
          %v3049 = vmax.f32 %v3009, 0.0
          %v3050 = vmax.f32 %v2815, 0.0
          %v3051 = vmax.f32 %v3011, 0.0
          %v3052 = vmax.f32 %v2818, 0.0
          %v3053 = vmax.f32 %v3014, 0.0
          %v3054 = vmax.f32 %v2820, 0.0
          %v3055 = vmax.f32 %v3016, 0.0
          %v3056 = vmax.f32 %v2823, 0.0
          %v3057 = vmax.f32 %v3019, 0.0
          %v3058 = vmax.f32 %v2825, 0.0
          %v3059 = vmax.f32 %v3021, 0.0
          %v3060 = vmax.f32 %v2828, 0.0
          %v3061 = vmax.f32 %v3024, 0.0
          %v3062 = vmax.f32 %v2830, 0.0
          %v3063 = vmax.f32 %v3026, 0.0
          %v3064 = vmax.f32 %v2833, 0.0
          %v3065 = vmax.f32 %v3029, 0.0
          %v3066 = vmax.f32 %v2835, 0.0
          %v3067 = vmax.f32 %v3031, 0.0
          %v3068 = vmax.f32 %v2838, 0.0
          %v3069 = vmax.f32 %v3034, 0.0
          %v3070 = vmax.f32 %v2840, 0.0
          %v3071 = vmax.f32 %v3036, 0.0
          %v3072 = vmax.f32 %v2843, 0.0
          %v3073 = vmax.f32 %v3039, 0.0
          %v3074 = vmax.f32 %v2845, 0.0
          %v3075 = vmax.f32 %v3041, 0.0
          %v3076 = vmax.f32 %v2848, 0.0
          %v3077 = vmax.f32 %v3044, 0.0
          %v3078 = vmax.f32 %v2850, 0.0
          %v3079 = vmax.f32 %v3046, 0.0
          %v3080 = vpack.c.bf16 %v3050, %v3048
          %v3081 = vpack.c.bf16 %v3051, %v3049
          %v3082 = vpack.c.bf16 %v3054, %v3052
          %v3083 = vpack.c.bf16 %v3055, %v3053
          %v3084 = vpack.c.bf16 %v3058, %v3056
          %v3085 = vpack.c.bf16 %v3059, %v3057
          %v3086 = vpack.c.bf16 %v3062, %v3060
          %v3087 = vpack.c.bf16 %v3063, %v3061
          %v3088 = vpack.c.bf16 %v3066, %v3064
          %v3089 = vpack.c.bf16 %v3067, %v3065
          %v3090 = vpack.c.bf16 %v3070, %v3068
          %v3091 = vpack.c.bf16 %v3071, %v3069
          %v3092 = vpack.c.bf16 %v3074, %v3072
          %v3093 = vpack.c.bf16 %v3075, %v3073
          %v3094 = vpack.c.bf16 %v3078, %v3076
          %v3095 = vpack.c.bf16 %v3079, %v3077
          %v3096 = vld [vmem:[#allocation12] sm:$0xf]
          %v3097 = vld [vmem:[#allocation12 + $0x4] sm:$0xf]
          %v3098 = vld [vmem:[#allocation12 + $0x8] sm:$0xf]
          %v3099 = vld [vmem:[#allocation12 + $0xc] sm:$0xf]
          %v3100 = vld [vmem:[#allocation12 + $0x10] sm:$0xf]
          %v3101 = vld [vmem:[#allocation12 + $0x14] sm:$0xf]
          %v3102 = vld [vmem:[#allocation12 + $0x18] sm:$0xf]
          %v3103 = vld [vmem:[#allocation12 + $0x1c] sm:$0xf]
          %v3104 = vld [vmem:[#allocation12 + $0x20] sm:$0xf]
          %v3105 = vld [vmem:[#allocation12 + $0x24] sm:$0xf]
          %v3106 = vld [vmem:[#allocation12 + $0x28] sm:$0xf]
          %v3107 = vld [vmem:[#allocation12 + $0x2c] sm:$0xf]
          %v3108 = vld [vmem:[#allocation12 + $0x30] sm:$0xf]
          %v3109 = vld [vmem:[#allocation12 + $0x34] sm:$0xf]
          %v3110 = vld [vmem:[#allocation12 + $0x38] sm:$0xf]
          %v3111 = vld [vmem:[#allocation12 + $0x3c] sm:$0xf]
          %v3112 = vld [vmem:[#allocation12 + $0x40] sm:$0xf]
          %v3113 = vld [vmem:[#allocation12 + $0x44] sm:$0xf]
          %v3114 = vld [vmem:[#allocation12 + $0x48] sm:$0xf]
          %v3115 = vld [vmem:[#allocation12 + $0x4c] sm:$0xf]
          %v3116 = vld [vmem:[#allocation12 + $0x50] sm:$0xf]
          %v3117 = vld [vmem:[#allocation12 + $0x54] sm:$0xf]
          %v3118 = vld [vmem:[#allocation12 + $0x58] sm:$0xf]
          %v3119 = vld [vmem:[#allocation12 + $0x5c] sm:$0xf]
          %v3120 = vld [vmem:[#allocation12 + $0x60] sm:$0xf]
          %v3121 = vld [vmem:[#allocation12 + $0x64] sm:$0xf]
          %v3122 = vld [vmem:[#allocation12 + $0x68] sm:$0xf]
          %v3123 = vld [vmem:[#allocation12 + $0x6c] sm:$0xf]
          %v3124 = vld [vmem:[#allocation12 + $0x70] sm:$0xf]
          %v3125 = vld [vmem:[#allocation12 + $0x74] sm:$0xf]
          %v3126 = vld [vmem:[#allocation12 + $0x78] sm:$0xf]
          %v3127 = vld [vmem:[#allocation12 + $0x7c] sm:$0xf]
          %v3128 = vld [vmem:[%s8] sm:$0x1]
          %v3130 = vperm.slane %v3128, 0
          %v3164 = vunpack.c.l.b16 %v3096
          %v3165 = vunpack.c.l.b16 %v3097
          %v3166 = vunpack.c.l.b16 %v3098
          %v3167 = vunpack.c.l.b16 %v3099
          %v3168 = vunpack.c.l.b16 %v3100
          %v3169 = vunpack.c.l.b16 %v3101
          %v3170 = vunpack.c.l.b16 %v3102
          %v3171 = vunpack.c.l.b16 %v3103
          %v3172 = vunpack.c.l.b16 %v3104
          %v3173 = vunpack.c.l.b16 %v3105
          %v3174 = vunpack.c.l.b16 %v3106
          %v3175 = vunpack.c.l.b16 %v3107
          %v3176 = vunpack.c.l.b16 %v3108
          %v3177 = vunpack.c.l.b16 %v3109
          %v3178 = vunpack.c.l.b16 %v3110
          %v3179 = vunpack.c.l.b16 %v3111
          %v3180 = vunpack.c.l.b16 %v3112
          %v3181 = vunpack.c.l.b16 %v3113
          %v3182 = vunpack.c.l.b16 %v3114
          %v3183 = vunpack.c.l.b16 %v3115
          %v3184 = vunpack.c.l.b16 %v3116
          %v3185 = vunpack.c.l.b16 %v3117
          %v3186 = vunpack.c.l.b16 %v3118
          %v3187 = vunpack.c.l.b16 %v3119
          %v3188 = vunpack.c.l.b16 %v3120
          %v3189 = vunpack.c.l.b16 %v3121
          %v3190 = vunpack.c.l.b16 %v3122
          %v3191 = vunpack.c.l.b16 %v3123
          %v3192 = vunpack.c.l.b16 %v3124
          %v3193 = vunpack.c.l.b16 %v3125
          %v3194 = vunpack.c.l.b16 %v3126
          %v3195 = vunpack.c.l.b16 %v3127
          %v3196 = vpack.c.b16 %v3165, %v3164
          %v3197 = vpack.c.b16 %v3167, %v3166
          %v3198 = vpack.c.b16 %v3169, %v3168
          %v3199 = vpack.c.b16 %v3171, %v3170
          %v3200 = vpack.c.b16 %v3173, %v3172
          %v3201 = vpack.c.b16 %v3175, %v3174
          %v3202 = vpack.c.b16 %v3177, %v3176
          %v3203 = vpack.c.b16 %v3179, %v3178
          %v3204 = vpack.c.b16 %v3181, %v3180
          %v3205 = vpack.c.b16 %v3183, %v3182
          %v3206 = vpack.c.b16 %v3185, %v3184
          %v3207 = vpack.c.b16 %v3187, %v3186
          %v3208 = vpack.c.b16 %v3189, %v3188
          %v3209 = vpack.c.b16 %v3191, %v3190
          %v3210 = vpack.c.b16 %v3193, %v3192
          %v3211 = vpack.c.b16 %v3195, %v3194
          %3228 = vmatpush.bf16.msra.mxu0 %v3203
          %3229 = vmatpush.bf16.msra.mxu0 %v3202
          %3230 = vmatpush.bf16.msra.mxu0 %v3201
          %3231 = vmatpush.bf16.msra.mxu0 %v3200
          %3232 = vmatpush.bf16.msra.mxu0 %v3199
          %3233 = vmatpush.bf16.msra.mxu0 %v3198
          %3234 = vmatpush.bf16.msra.mxu0 %v3197
          %3235 = vmatpush.bf16.msra.mxu0 %v3196
          %3236 = vmatmul.bf16.gmra.mxu0 %v3080
          %v3237 = vpop.f32.mrf.mxu0
          %v3238 = vadd.f32 %v3130, %v3237
          %v3239 = vpop.f32.mrf.mxu0
          %v3240 = vadd.f32 %v3130, %v3239
          %3241 = vmatmul.bf16.gmra.mxu0 %v3082
          %v3242 = vpop.f32.mrf.mxu0
          %v3243 = vadd.f32 %v3130, %v3242
          %v3244 = vpop.f32.mrf.mxu0
          %v3245 = vadd.f32 %v3130, %v3244
          %3246 = vmatmul.bf16.gmra.mxu0 %v3084
          %v3247 = vpop.f32.mrf.mxu0
          %v3248 = vadd.f32 %v3130, %v3247
          %v3249 = vpop.f32.mrf.mxu0
          %v3250 = vadd.f32 %v3130, %v3249
          %3251 = vmatmul.bf16.gmra.mxu0 %v3086
          %v3252 = vpop.f32.mrf.mxu0
          %v3253 = vadd.f32 %v3130, %v3252
          %v3254 = vpop.f32.mrf.mxu0
          %v3255 = vadd.f32 %v3130, %v3254
          %3256 = vmatmul.bf16.gmra.mxu0 %v3088
          %v3257 = vpop.f32.mrf.mxu0
          %v3258 = vadd.f32 %v3130, %v3257
          %v3259 = vpop.f32.mrf.mxu0
          %v3260 = vadd.f32 %v3130, %v3259
          %3261 = vmatmul.bf16.gmra.mxu0 %v3090
          %v3262 = vpop.f32.mrf.mxu0
          %v3263 = vadd.f32 %v3130, %v3262
          %v3264 = vpop.f32.mrf.mxu0
          %v3265 = vadd.f32 %v3130, %v3264
          %3266 = vmatmul.bf16.gmra.mxu0 %v3092
          %v3267 = vpop.f32.mrf.mxu0
          %v3268 = vadd.f32 %v3130, %v3267
          %v3269 = vpop.f32.mrf.mxu0
          %v3270 = vadd.f32 %v3130, %v3269
          %3271 = vmatmul.bf16.gmra.mxu0 %v3094
          %v3272 = vpop.f32.mrf.mxu0
          %v3273 = vadd.f32 %v3130, %v3272
          %v3274 = vpop.f32.mrf.mxu0
          %v3275 = vadd.f32 %v3130, %v3274
          %3276 = vdwg.mxu0
          %3277 = vmatpush.bf16.msra.mxu0 %v3211
          %3278 = vmatpush.bf16.msra.mxu0 %v3210
          %3279 = vmatpush.bf16.msra.mxu0 %v3209
          %3280 = vmatpush.bf16.msra.mxu0 %v3208
          %3281 = vmatpush.bf16.msra.mxu0 %v3207
          %3282 = vmatpush.bf16.msra.mxu0 %v3206
          %3283 = vmatpush.bf16.msra.mxu0 %v3205
          %3284 = vmatpush.bf16.msra.mxu0 %v3204
          %3285 = vmatmul.bf16.gmra.mxu0 %v3081
          %v3286 = vpop.f32.mrf.mxu0
          %v3287 = vadd.f32 %v3238, %v3286
          %v3288 = vpop.f32.mrf.mxu0
          %v3289 = vadd.f32 %v3240, %v3288
          %3290 = vmatmul.bf16.gmra.mxu0 %v3083
          %v3291 = vpop.f32.mrf.mxu0
          %v3292 = vadd.f32 %v3243, %v3291
          %v3293 = vpop.f32.mrf.mxu0
          %v3294 = vadd.f32 %v3245, %v3293
          %3295 = vmatmul.bf16.gmra.mxu0 %v3085
          %v3296 = vpop.f32.mrf.mxu0
          %v3297 = vadd.f32 %v3248, %v3296
          %v3298 = vpop.f32.mrf.mxu0
          %v3299 = vadd.f32 %v3250, %v3298
          %3300 = vmatmul.bf16.gmra.mxu0 %v3087
          %v3301 = vpop.f32.mrf.mxu0
          %v3302 = vadd.f32 %v3253, %v3301
          %v3303 = vpop.f32.mrf.mxu0
          %v3304 = vadd.f32 %v3255, %v3303
          %3305 = vmatmul.bf16.gmra.mxu0 %v3089
          %v3306 = vpop.f32.mrf.mxu0
          %v3307 = vadd.f32 %v3258, %v3306
          %v3308 = vpop.f32.mrf.mxu0
          %v3309 = vadd.f32 %v3260, %v3308
          %3310 = vmatmul.bf16.gmra.mxu0 %v3091
          %v3311 = vpop.f32.mrf.mxu0
          %v3312 = vadd.f32 %v3263, %v3311
          %v3313 = vpop.f32.mrf.mxu0
          %v3314 = vadd.f32 %v3265, %v3313
          %3315 = vmatmul.bf16.gmra.mxu0 %v3093
          %v3316 = vpop.f32.mrf.mxu0
          %v3317 = vadd.f32 %v3268, %v3316
          %v3318 = vpop.f32.mrf.mxu0
          %v3319 = vadd.f32 %v3270, %v3318
          %3320 = vmatmul.bf16.gmra.mxu0 %v3095
          %v3321 = vpop.f32.mrf.mxu0
          %v3322 = vadd.f32 %v3273, %v3321
          %v3323 = vpop.f32.mrf.mxu0
          %v3324 = vadd.f32 %v3275, %v3323
          %3325 = vdwg.mxu0
          %3326 = vst [vmem:[%s475] sm:$0xff] %v3287
          %3327 = vst [vmem:[%s475 + $0x8] sm:$0xff] %v3289
          %3328 = vst [vmem:[%s475 + $0x10] sm:$0xff] %v3292
          %3329 = vst [vmem:[%s475 + $0x18] sm:$0xff] %v3294
          %3330 = vst [vmem:[%s475 + $0x20] sm:$0xff] %v3297
          %3331 = vst [vmem:[%s475 + $0x28] sm:$0xff] %v3299
          %3332 = vst [vmem:[%s475 + $0x30] sm:$0xff] %v3302
          %3333 = vst [vmem:[%s475 + $0x38] sm:$0xff] %v3304
          %3334 = vst [vmem:[%s475 + $0x40] sm:$0xff] %v3307
          %3335 = vst [vmem:[%s475 + $0x48] sm:$0xff] %v3309
          %3336 = vst [vmem:[%s475 + $0x50] sm:$0xff] %v3312
          %3337 = vst [vmem:[%s475 + $0x58] sm:$0xff] %v3314
          %3338 = vst [vmem:[%s475 + $0x60] sm:$0xff] %v3317
          %3339 = vst [vmem:[%s475 + $0x68] sm:$0xff] %v3319
          %3340 = vst [vmem:[%s475 + $0x70] sm:$0xff] %v3322
          %3341 = vst [vmem:[%s475 + $0x78] sm:$0xff] %v3324
        $region88: #{tpu_custom_call.1} parent=55 // pred_fallthru
          _
        %s3342 = sand.u32 %s252, 1
        %s3343 = scalar_lea.sflag [#allocation5], %s3342
        %s3344 = sand.u32 %s252, 1
        %s3345 = smul.addr %s3344, 128
        %s3346 = scalar_lea.vmem [#allocation14], %s3345
        // Predicated region
        $region89: #{tpu_custom_call.1} parent=55 // pred_check
          %p3347 = pneg %p262
        $region90: #{tpu_custom_call.1} parent=55 // pred_check_branch
          %3349 = sbr.rel (%p3347) target = $region92
        $region91: #{tpu_custom_call.1} parent=55 // pred_region
          %s3350 = smul.u32 16, %s35
          %3352 = vsyncadd %s3343, 0
          %s3353 = smul.addr %s3350, 8
          %s3354 = scalar_lea.hbm %s9, %s3353
          %s3355 = sshll.u32 %s3346, 4
          %s3356 = int_to_ptr.vmem [resolvable:$true] %s3355
          %s3357 = sshll.u32 %s3354, 4
          %s3358 = int_to_ptr.hbm [resolvable:$true] %s3357
          %3363 = dma.vmem_to_hbm [thread:$0]  %s3356, 2048, %s3358, %s3343, 128, 128, 8
        $region92: #{tpu_custom_call.1} parent=55 // pred_fallthru
          _
      $region56: #{tpu_custom_call.1} parent=5 // pred_fallthru
        _
      %p3364 = scmp.le.s32.totalorder 2, %s26
      // Predicated region
      $region93: #{tpu_custom_call.1} parent=5 // pred_check
        %p3365 = pneg %p3364
      $region94: #{tpu_custom_call.1} parent=5 // pred_check_branch
        %3367 = sbr.rel (%p3365) target = $region96
      $region95: #{tpu_custom_call.1} parent=5 // pred_region
        %s3368 = ssub.s32 %s26, 2
        // Predicated region
        $region97: #{tpu_custom_call.1} parent=95 // pred_check
          %p3369 = pneg %p268
        $region98: #{tpu_custom_call.1} parent=95 // pred_check_branch
          %3371 = sbr.rel (%p3369) target = $region100
        $region99: #{tpu_custom_call.1} parent=95 // pred_region
          %s3372 = sand.u32 %s253, 1
          %s3373 = scalar_lea.sflag [#allocation5], %s3372
          %s3374 = sand.u32 %s253, 1
          %s3375 = smul.addr %s3374, 128
          %s3376 = scalar_lea.vmem [#allocation14], %s3375
          %3378 = dma.done %s3373, 2048
        $region100: #{tpu_custom_call.1} parent=95 // pred_fallthru
          _
      $region96: #{tpu_custom_call.1} parent=5 // pred_fallthru
        _
    $region6: #{tpu_custom_call.1} parent=1 // loop_footer
      %s30 = sadd.s32 1, %s26
    $region7: #{tpu_custom_call.1} parent=1 // loop_footer_branch
      %25 = sbr.rel target = $region3
    $region8: #{tpu_custom_call.1} parent=1 // loop_exit
      _
    %3379 = vsyncpa [#allocation4], 1
    %s3380 = scalar_lea.sflag [#allocation4], 1
    %3381 = vsyncpa %s3380, 1
    %3382 = vsyncpa [#allocation7], 1
    %s3383 = scalar_lea.sflag [#allocation7], 1
    %3384 = vsyncpa %s3383, 1
    %3385 = vsyncpa [#allocation10], 1
    %3386 = vsyncpa [#allocation13], 1
    %3387 = vsyncpa [#allocation5], 1
    %s3388 = scalar_lea.sflag [#allocation5], 1
    %3389 = vsyncpa %s3388, 1

</llo_original>
